<compile_context>
chip_gen: v7x
topology: tpu7x:2x2x1
jax: 0.10.0
libtpu: 0.0.40
codegen_flags: <defaults>
</compile_context>

<pallas_src>
import math

import jax
import jax.numpy as jnp
from jax.experimental import pallas as pl
from jax.experimental.pallas import tpu as pltpu


OUT_LANES = 128  # lane-dense padded output width (O <= 128)


# -----------------------------------------------------------------------------
# Pallas kernel
# -----------------------------------------------------------------------------
def _seq2seq_kernel(
    x_ref,         # (B, T, I)
    ew_ih0_ref,    # (I, 4H)   encoder L0 input weights (gate-permuted, g x2)
    eb0_ref,       # (1, 4H)
    ew_hh0_ref,    # (4H, 4H)  encoder L0 recurrent weights, rows [H,4H) zero
    w_enc1_ref,    # (4H, 4H)  packed [ih1 | hh1 | 0 | hh1]
    eb1_ref,       # (1, 4H)
    dw_ih0_ref,    # (I, 4H)   decoder L0 input weights (first step only)
    db0_ref,       # (1, 4H)
    dw_hh0_ref,    # (4H, 4H)  decoder L0 recurrent weights (first step only)
    w_dec0_ref,    # (4H, 4H)  packed [fc_w@dw_ih0 | dw_hh0 | 0 | dw_hh0]
    b_dec0_ref,    # (1, 4H)   db0 + fc_b @ dw_ih0
    w_dec1_ref,    # (4H, 4H)  packed [dw_ih1 | dw_hh1 | 0 | dw_hh1]
    db1_ref,       # (1, 4H)
    fc_w_ref,      # (4H, 128) rows [0,H) x cols [0,O) = fc weights, rest zero
    fc_b_ref,      # (1, 128)
    out_ref,       # (S, B, 128)
):
    B, T, I = x_ref.shape
    H4 = ew_hh0_ref.shape[0]          # 4 * H
    H = H4 // 4
    S = out_ref.shape[0]
    f32 = jnp.float32

    lane = jax.lax.broadcasted_iota(jnp.int32, (B, H4), 1)
    tanh_mask = lane >= 3 * H         # g-gate block (kernel order [f, i, o, g])
    keep_mask = lane < H              # real state lives in lanes [0, H)

    # Biases used inside loops: broadcast once (broadcast_in_dim is not CSE'd).
    b_e1 = jnp.broadcast_to(eb1_ref[...], (B, H4))
    b_d0 = jnp.broadcast_to(b_dec0_ref[...], (B, H4))
    b_d1 = jnp.broadcast_to(db1_ref[...], (B, H4))

    def dot(a, b):
        return jnp.dot(a, b, preferred_element_type=f32)

    def lstm_combine(gates, c):
        """gates, c: (B, 4H). Real state in lanes [0, H); h is masked to exact
        zeros outside that block (required by the packed-operand trick).

        One EUP sigmoid per cell; the g-gate tanh is 2*sigmoid(2x)-1 with the
        x2 pre-folded into the weights.  i and g only appear as the commutative
        product i*g, so the hardware rotate direction does not matter.
        """
        act = jax.nn.sigmoid(gates)                       # single EUP push
        act = jnp.where(tanh_mask, 2.0 * act - 1.0, act)  # VPU fixup -> tanh
        f_al = act                                    # f already at [0, H)
        o_al = pltpu.roll(act, shift=2 * H, axis=1)   # direction-free (2H ≡ -2H)
        i_al = pltpu.roll(act, shift=3 * H, axis=1)   # i (or g) -> [0, H)
        g_al = pltpu.roll(act, shift=1 * H, axis=1)   # g (or i) -> [0, H)
        c_new = f_al * c + i_al * g_al                # lanes [H,4H): bounded junk
        h_new = jnp.where(keep_mask, o_al * jnp.tanh(c_new), 0.0)
        return h_new, c_new

    def fuse(a, b):
        """Pack two masked hidden states into one 128-lane matmul operand.

        a stays at lanes [0,H); b lands at [H,2H) or [3H,4H) depending on the
        hardware rotate direction.  The packed weights duplicate b's rows at
        both offsets and a/b are exact zeros outside [0,H), so either landing
        spot gives the same product.
        """
        return a + pltpu.roll(b, shift=H, axis=1)

    x = x_ref[...].astype(f32)                        # (B, T, I), tiny

    # ---- hoisted encoder layer-0 input projection ---------------------------
    xw0 = dot(x.reshape(B * T, I), ew_ih0_ref[...]) + eb0_ref[...]
    xw0 = xw0.reshape(B, T, H4)

    zeros = jnp.zeros((B, H4), f32)
    h0, c0, h1, c1 = zeros, zeros, zeros, zeros

    # ---- encoder: one K=128 matmul per cell on the recurrence ---------------
    for t in range(T):
        g0 = xw0[:, t, :] + dot(h0, ew_hh0_ref[...])
        h0, c0 = lstm_combine(g0, c0)
        g1 = dot(fuse(h0, h1), w_enc1_ref[...]) + b_e1
        h1, c1 = lstm_combine(g1, c1)

    # ---- decoder: autoregressive, FC head folded into the recurrence --------
    dec_in = x[:, T - 1, :]                           # (B, I); requires I == O
    xd0 = dot(dec_in, dw_ih0_ref[...]) + db0_ref[...]

    h1_steps = []
    for s in range(S):
        if s == 0:
            g0 = xd0 + dot(h0, dw_hh0_ref[...])
        else:
            # dec_in = fc(h1_prev) folded into w_dec0 / b_dec0: no (B, O)
            # feedback ever materializes on the critical path.
            g0 = dot(fuse(h1, h0), w_dec0_ref[...]) + b_d0
        h0, c0 = lstm_combine(g0, c0)
        g1 = dot(fuse(h0, h1), w_dec1_ref[...]) + b_d1
        h1, c1 = lstm_combine(g1, c1)
        h1_steps.append(h1)

    # ---- FC head: single batched matmul after the loop, lane-dense store ----
    h1_all = jnp.stack(h1_steps, axis=0).reshape(S * B, H4)
    preds = dot(h1_all, fc_w_ref[...]) + fc_b_ref[...]      # (S*B, 128)
    out_ref[...] = preds.reshape(S, B, OUT_LANES).astype(out_ref.dtype)


# -----------------------------------------------------------------------------
# Wrapper: permute / scale / pack the canonical parameters, then one pallas_call
# -----------------------------------------------------------------------------
def _prep_kernel_params(params):
    (ew_ih0, ew_hh0, eb0, ew_ih1, ew_hh1, eb1,
     dw_ih0, dw_hh0, db0, dw_ih1, dw_hh1, db1, fc_w, fc_b) = params
    H, O = fc_w.shape
    H4 = 4 * H
    assert O <= OUT_LANES
    hi = jax.lax.Precision.HIGHEST

    def perm_scale(w):
        # PyTorch gate order [i, f, g, o] -> kernel order [f, i, o, g], with
        # the g-gate columns scaled by 2 so tanh(z) == 2*sigmoid(2z) - 1.
        i, f, g, o = jnp.split(w, 4, axis=-1)
        return jnp.concatenate([f, i, o, 2.0 * g], axis=-1)

    def pad_rows(w):
        return jnp.pad(w, ((0, H4 - w.shape[0]), (0, 0)))

    def pack(w_x, w_h):
        # rows [0,H): weight applied to the state at lanes [0,H)
        # rows [H,2H) and [3H,4H): recurrent weight, duplicated so the packed
        #   operand is correct for either hardware rotate direction
        # rows [2H,3H): zero (operand is guaranteed zero there)
        return jnp.concatenate([w_x, w_h, jnp.zeros_like(w_h), w_h], axis=0)

    ew_ih0_p = perm_scale(ew_ih0)                             # (I, 4H)
    eb0_p = perm_scale(eb0)                                   # (1, 4H)
    ew_hh0_pad = pad_rows(perm_scale(ew_hh0))                 # (4H, 4H)
    w_enc1 = pack(perm_scale(ew_ih1), perm_scale(ew_hh1))     # (4H, 4H)
    eb1_p = perm_scale(eb1)

    dw_ih0_p = perm_scale(dw_ih0)                             # (O, 4H)
    db0_p = perm_scale(db0)
    dw_hh0_p = perm_scale(dw_hh0)                             # (H, 4H)
    dw_hh0_pad = pad_rows(dw_hh0_p)                           # (4H, 4H)
    w_fused = jnp.dot(fc_w, dw_ih0_p, precision=hi)           # (H, 4H)
    b_dec0 = db0_p + jnp.dot(fc_b, dw_ih0_p, precision=hi)    # (1, 4H)
    w_dec0 = pack(w_fused, dw_hh0_p)                          # (4H, 4H)
    w_dec1 = pack(perm_scale(dw_ih1), perm_scale(dw_hh1))     # (4H, 4H)
    db1_p = perm_scale(db1)

    # FC head padded to 128 output lanes (lane-dense final store).
    fc_w_pad = jnp.zeros((H4, OUT_LANES), jnp.float32).at[:H, :O].set(fc_w)
    fc_b_pad = jnp.zeros((1, OUT_LANES), jnp.float32).at[:, :O].set(fc_b)

    return (ew_ih0_p, eb0_p, ew_hh0_pad, w_enc1, eb1_p,
            dw_ih0_p, db0_p, dw_hh0_pad, w_dec0, b_dec0,
            w_dec1, db1_p, fc_w_pad, fc_b_pad)


def seq2seq_forward(x, params, num_steps):
    """x: (B, T, input_size) f32; returns (B, num_steps, output_size) f32."""
    B, _, I = x.shape
    fc_w = params[-2]                                         # (H, O)
    O = fc_w.shape[1]
    # Decoder is seeded with x[:, -1, :]; the module implicitly needs I == O.
    assert I == O, "Seq2SeqModel requires input_size == output_size"

    kparams = _prep_kernel_params(params)
    vmem = pl.BlockSpec(memory_space=pltpu.MemorySpace.VMEM)
    n_inputs = 1 + len(kparams)

    # Everything (input, 14 small weight tensors, output) fits in VMEM on all
    # generations (v5e/v6e/v7x); no grid tiling or vmem_limit needed.
    out = pl.pallas_call(
        _seq2seq_kernel,
        out_shape=jax.ShapeDtypeStruct((num_steps, B, OUT_LANES), jnp.float32),
        in_specs=[vmem] * n_inputs,
        out_specs=vmem,
    )(x, *kparams)

    # (S, B, 128) lane-dense kernel output -> (B, S, O)
    return jnp.transpose(out, (1, 0, 2))[:, :, :O]


# -----------------------------------------------------------------------------
# Deterministic parameter init (PyTorch-style U(-1/sqrt(H), 1/sqrt(H)))
# -----------------------------------------------------------------------------
def _init_lstm_layer(key, in_dim, hidden):
    bound = 1.0 / math.sqrt(hidden)
    k1, k2, k3, k4 = jax.random.split(key, 4)
    w_ih = jax.random.uniform(k1, (4 * hidden, in_dim), jnp.float32, -bound, bound)
    w_hh = jax.random.uniform(k2, (4 * hidden, hidden), jnp.float32, -bound, bound)
    b_ih = jax.random.uniform(k3, (4 * hidden,), jnp.float32, -bound, bound)
    b_hh = jax.random.uniform(k4, (4 * hidden,), jnp.float32, -bound, bound)
    # pre-transpose / pre-sum so downstream code does x @ W + b
    return w_ih.T, w_hh.T, (b_ih + b_hh)[None, :]


def init_params(key, input_size=3, hidden_size=32, output_size=3):
    keys = jax.random.split(key, 6)
    enc0 = _init_lstm_layer(keys[0], input_size, hidden_size)
    enc1 = _init_lstm_layer(keys[1], hidden_size, hidden_size)
    dec0 = _init_lstm_layer(keys[2], output_size, hidden_size)
    dec1 = _init_lstm_layer(keys[3], hidden_size, hidden_size)
    bound = 1.0 / math.sqrt(hidden_size)
    fc_w = jax.random.uniform(
        keys[4], (output_size, hidden_size), jnp.float32, -bound, bound
    )
    fc_b = jax.random.uniform(keys[5], (output_size,), jnp.float32, -bound, bound)
    return (*enc0, *enc1, *dec0, *dec1, fc_w.T, fc_b[None, :])


# -----------------------------------------------------------------------------
# Pure-JAX reference (faithful PyTorch math, gate order [i,f,g,o], no fusion)
# -----------------------------------------------------------------------------
def reference_forward(x, params, num_steps):
    (ew_ih0, ew_hh0, eb0, ew_ih1, ew_hh1, eb1,
     dw_ih0, dw_hh0, db0, dw_ih1, dw_hh1, db1, fc_w, fc_b) = params
    B, T, _ = x.shape
    H = ew_hh0.shape[0]

    def cell(xv, h, c, w_ih, w_hh, b):
        g = xv @ w_ih + h @ w_hh + b
        i = jax.nn.sigmoid(g[:, 0 * H:1 * H])
        f = jax.nn.sigmoid(g[:, 1 * H:2 * H])
        gg = jnp.tanh(g[:, 2 * H:3 * H])
        o = jax.nn.sigmoid(g[:, 3 * H:4 * H])
        c = f * c + i * gg
        return o * jnp.tanh(c), c

    z = jnp.zeros((B, H), jnp.float32)
    h0, c0, h1, c1 = z, z, z, z
    for t in range(T):
        h0, c0 = cell(x[:, t, :], h0, c0, ew_ih0, ew_hh0, eb0)
        h1, c1 = cell(h0, h1, c1, ew_ih1, ew_hh1, eb1)
    dec_in = x[:, T - 1, :]
    outs = []
    for _ in range(num_steps):
        h0, c0 = cell(dec_in, h0, c0, dw_ih0, dw_hh0, db0)
        h1, c1 = cell(h0, h1, c1, dw_ih1, dw_hh1, db1)
        pred = h1 @ fc_w + fc_b
        outs.append(pred[:, None, :])
        dec_in = pred
    return jnp.concatenate(outs, axis=1)


# -----------------------------------------------------------------------------
if __name__ == "__main__":
    B, T = 2, 8
    INPUT, HIDDEN, OUTPUT = 3, 32, 3
    NUM_STEPS = 4

    key = jax.random.PRNGKey(0)
    kx, kp = jax.random.split(key)
    x = jax.random.normal(kx, (B, T, INPUT), jnp.float32)
    params = init_params(kp, INPUT, HIDDEN, OUTPUT)

    out = seq2seq_forward(x, params, NUM_STEPS)
    out = jax.block_until_ready(out)

    ref = reference_forward(x, params, NUM_STEPS)
    assert out.shape == (B, NUM_STEPS, OUTPUT), out.shape
    # Exact algebraic refactors (fc fold, tanh = 2*sigmoid(2x)-1) introduce only
    # tiny f32 reassociation / implementation differences over 24 cells.
    assert jnp.allclose(out, ref, atol=5e-4, rtol=5e-4), "mismatch vs reference"

    print("KERNEL_OK")
</pallas_src>

<mosaic_0001>
module attributes {stable_mosaic.version = 11 : i64} {
  func.func @_seq2seq_kernel(%arg0: memref<2x8x3xf32, #tpu.memory_space<vmem>>, %arg1: memref<3x128xf32, #tpu.memory_space<vmem>>, %arg2: memref<1x128xf32, #tpu.memory_space<vmem>>, %arg3: memref<128x128xf32, #tpu.memory_space<vmem>>, %arg4: memref<128x128xf32, #tpu.memory_space<vmem>>, %arg5: memref<1x128xf32, #tpu.memory_space<vmem>>, %arg6: memref<3x128xf32, #tpu.memory_space<vmem>>, %arg7: memref<1x128xf32, #tpu.memory_space<vmem>>, %arg8: memref<128x128xf32, #tpu.memory_space<vmem>>, %arg9: memref<128x128xf32, #tpu.memory_space<vmem>>, %arg10: memref<1x128xf32, #tpu.memory_space<vmem>>, %arg11: memref<128x128xf32, #tpu.memory_space<vmem>>, %arg12: memref<1x128xf32, #tpu.memory_space<vmem>>, %arg13: memref<128x128xf32, #tpu.memory_space<vmem>>, %arg14: memref<1x128xf32, #tpu.memory_space<vmem>>, %arg15: memref<4x2x128xf32, #tpu.memory_space<vmem>>) attributes {dimension_semantics = [], scalar_prefetch = 0 : i64, scratch_operands = 0 : i64, tpu.core_type = #tpu.core_type<tc>} {
    %0 = tpu.iota {dimensions = array<i32: 1>} : vector<2x128xi32>
    %c96_i32 = arith.constant 96 : i32
    %1 = vector.broadcast %c96_i32 : i32 to vector<2x128xi32>
    %2 = arith.cmpi sge, %0, %1 : vector<2x128xi32>
    %c32_i32 = arith.constant 32 : i32
    %3 = vector.broadcast %c32_i32 : i32 to vector<2x128xi32>
    %4 = arith.cmpi slt, %0, %3 : vector<2x128xi32>
    %c0 = arith.constant 0 : index
    %c0_0 = arith.constant 0 : index
    %5 = vector.load %arg5[%c0, %c0_0] : memref<1x128xf32, #tpu.memory_space<vmem>>, vector<1x128xf32>
    %6 = vector.shape_cast %5 : vector<1x128xf32> to vector<1x128xf32>
    %7 = vector.broadcast %6 : vector<1x128xf32> to vector<2x128xf32>
    %c0_1 = arith.constant 0 : index
    %c0_2 = arith.constant 0 : index
    %8 = vector.load %arg10[%c0_1, %c0_2] : memref<1x128xf32, #tpu.memory_space<vmem>>, vector<1x128xf32>
    %9 = vector.shape_cast %8 : vector<1x128xf32> to vector<1x128xf32>
    %10 = vector.broadcast %9 : vector<1x128xf32> to vector<2x128xf32>
    %c0_3 = arith.constant 0 : index
    %c0_4 = arith.constant 0 : index
    %11 = vector.load %arg12[%c0_3, %c0_4] : memref<1x128xf32, #tpu.memory_space<vmem>>, vector<1x128xf32>
    %12 = vector.shape_cast %11 : vector<1x128xf32> to vector<1x128xf32>
    %13 = vector.broadcast %12 : vector<1x128xf32> to vector<2x128xf32>
    %c0_5 = arith.constant 0 : index
    %c0_6 = arith.constant 0 : index
    %c0_7 = arith.constant 0 : index
    %14 = vector.load %arg0[%c0_5, %c0_6, %c0_7] : memref<2x8x3xf32, #tpu.memory_space<vmem>>, vector<2x8x3xf32>
    %15 = vector.shape_cast %14 : vector<2x8x3xf32> to vector<16x3xf32>
    %c0_8 = arith.constant 0 : index
    %c0_9 = arith.constant 0 : index
    %16 = vector.load %arg1[%c0_8, %c0_9] : memref<3x128xf32, #tpu.memory_space<vmem>>, vector<3x128xf32>
    %cst = arith.constant dense<0.000000e+00> : vector<16x128xf32>
    %17 = tpu.matmul %15, %16, %cst {dimension_numbers = #tpu.dot_dimension_numbers<[1], [0], [0], [1], [0, 0, 1, 1], [], []>} : vector<16x3xf32>, vector<3x128xf32>, vector<16x128xf32> -> vector<16x128xf32>
    %c0_10 = arith.constant 0 : index
    %c0_11 = arith.constant 0 : index
    %18 = vector.load %arg2[%c0_10, %c0_11] : memref<1x128xf32, #tpu.memory_space<vmem>>, vector<1x128xf32>
    %19 = vector.broadcast %18 : vector<1x128xf32> to vector<16x128xf32>
    %20 = arith.addf %17, %19 : vector<16x128xf32>
    %21 = vector.shape_cast %20 : vector<16x128xf32> to vector<2x8x128xf32>
    %cst_12 = arith.constant 0.000000e+00 : f32
    %22 = vector.broadcast %cst_12 : f32 to vector<2x128xf32>
    %23 = vector.extract_strided_slice %21 {offsets = [0, 0, 0], sizes = [2, 1, 128], strides = [1, 1, 1]} : vector<2x8x128xf32> to vector<2x1x128xf32>
    %24 = vector.shape_cast %23 : vector<2x1x128xf32> to vector<2x128xf32>
    %c0_13 = arith.constant 0 : index
    %c0_14 = arith.constant 0 : index
    %25 = vector.load %arg3[%c0_13, %c0_14] : memref<128x128xf32, #tpu.memory_space<vmem>>, vector<128x128xf32>
    %cst_15 = arith.constant dense<0.000000e+00> : vector<2x128xf32>
    %26 = tpu.matmul %22, %25, %cst_15 {dimension_numbers = #tpu.dot_dimension_numbers<[1], [0], [0], [1], [0, 0, 1, 1], [], []>} : vector<2x128xf32>, vector<128x128xf32>, vector<2x128xf32> -> vector<2x128xf32>
    %27 = arith.addf %24, %26 : vector<2x128xf32>
    %28 = arith.negf %27 : vector<2x128xf32>
    %29 = math.exp %28 : vector<2x128xf32>
    %cst_16 = arith.constant 1.000000e+00 : f32
    %30 = vector.broadcast %cst_16 : f32 to vector<2x128xf32>
    %31 = arith.addf %30, %29 : vector<2x128xf32>
    %32 = arith.divf %30, %31 : vector<2x128xf32>
    %cst_17 = arith.constant 2.000000e+00 : f32
    %33 = vector.broadcast %cst_17 : f32 to vector<2x128xf32>
    %34 = arith.mulf %33, %32 : vector<2x128xf32>
    %cst_18 = arith.constant 1.000000e+00 : f32
    %35 = vector.broadcast %cst_18 : f32 to vector<2x128xf32>
    %36 = arith.subf %34, %35 : vector<2x128xf32>
    %37 = arith.select %2, %36, %32 : vector<2x128xi1>, vector<2x128xf32>
    %c64_i32 = arith.constant 64 : i32
    %38 = tpu.dynamic_rotate %37 by %c64_i32 dim 1 : vector<2x128xf32>, i32 -> vector<2x128xf32>
    %c96_i32_19 = arith.constant 96 : i32
    %39 = tpu.dynamic_rotate %37 by %c96_i32_19 dim 1 : vector<2x128xf32>, i32 -> vector<2x128xf32>
    %c32_i32_20 = arith.constant 32 : i32
    %40 = tpu.dynamic_rotate %37 by %c32_i32_20 dim 1 : vector<2x128xf32>, i32 -> vector<2x128xf32>
    %41 = arith.mulf %37, %22 : vector<2x128xf32>
    %42 = arith.mulf %39, %40 : vector<2x128xf32>
    %43 = arith.addf %41, %42 : vector<2x128xf32>
    %44 = math.tanh %43 : vector<2x128xf32>
    %45 = arith.mulf %38, %44 : vector<2x128xf32>
    %cst_21 = arith.constant 0.000000e+00 : f32
    %46 = vector.broadcast %cst_21 : f32 to vector<2x128xf32>
    %47 = arith.select %4, %45, %46 : vector<2x128xi1>, vector<2x128xf32>
    %c32_i32_22 = arith.constant 32 : i32
    %48 = tpu.dynamic_rotate %22 by %c32_i32_22 dim 1 : vector<2x128xf32>, i32 -> vector<2x128xf32>
    %49 = arith.addf %47, %48 : vector<2x128xf32>
    %c0_23 = arith.constant 0 : index
    %c0_24 = arith.constant 0 : index
    %50 = vector.load %arg4[%c0_23, %c0_24] : memref<128x128xf32, #tpu.memory_space<vmem>>, vector<128x128xf32>
    %cst_25 = arith.constant dense<0.000000e+00> : vector<2x128xf32>
    %51 = tpu.matmul %49, %50, %cst_25 {dimension_numbers = #tpu.dot_dimension_numbers<[1], [0], [0], [1], [0, 0, 1, 1], [], []>} : vector<2x128xf32>, vector<128x128xf32>, vector<2x128xf32> -> vector<2x128xf32>
    %52 = arith.addf %51, %7 : vector<2x128xf32>
    %53 = arith.negf %52 : vector<2x128xf32>
    %54 = math.exp %53 : vector<2x128xf32>
    %cst_26 = arith.constant 1.000000e+00 : f32
    %55 = vector.broadcast %cst_26 : f32 to vector<2x128xf32>
    %56 = arith.addf %55, %54 : vector<2x128xf32>
    %57 = arith.divf %55, %56 : vector<2x128xf32>
    %cst_27 = arith.constant 2.000000e+00 : f32
    %58 = vector.broadcast %cst_27 : f32 to vector<2x128xf32>
    %59 = arith.mulf %58, %57 : vector<2x128xf32>
    %cst_28 = arith.constant 1.000000e+00 : f32
    %60 = vector.broadcast %cst_28 : f32 to vector<2x128xf32>
    %61 = arith.subf %59, %60 : vector<2x128xf32>
    %62 = arith.select %2, %61, %57 : vector<2x128xi1>, vector<2x128xf32>
    %c64_i32_29 = arith.constant 64 : i32
    %63 = tpu.dynamic_rotate %62 by %c64_i32_29 dim 1 : vector<2x128xf32>, i32 -> vector<2x128xf32>
    %c96_i32_30 = arith.constant 96 : i32
    %64 = tpu.dynamic_rotate %62 by %c96_i32_30 dim 1 : vector<2x128xf32>, i32 -> vector<2x128xf32>
    %c32_i32_31 = arith.constant 32 : i32
    %65 = tpu.dynamic_rotate %62 by %c32_i32_31 dim 1 : vector<2x128xf32>, i32 -> vector<2x128xf32>
    %66 = arith.mulf %62, %22 : vector<2x128xf32>
    %67 = arith.mulf %64, %65 : vector<2x128xf32>
    %68 = arith.addf %66, %67 : vector<2x128xf32>
    %69 = math.tanh %68 : vector<2x128xf32>
    %70 = arith.mulf %63, %69 : vector<2x128xf32>
    %cst_32 = arith.constant 0.000000e+00 : f32
    %71 = vector.broadcast %cst_32 : f32 to vector<2x128xf32>
    %72 = arith.select %4, %70, %71 : vector<2x128xi1>, vector<2x128xf32>
    %73 = vector.extract_strided_slice %21 {offsets = [0, 1, 0], sizes = [2, 1, 128], strides = [1, 1, 1]} : vector<2x8x128xf32> to vector<2x1x128xf32>
    %74 = vector.shape_cast %73 : vector<2x1x128xf32> to vector<2x128xf32>
    %c0_33 = arith.constant 0 : index
    %c0_34 = arith.constant 0 : index
    %75 = vector.load %arg3[%c0_33, %c0_34] : memref<128x128xf32, #tpu.memory_space<vmem>>, vector<128x128xf32>
    %cst_35 = arith.constant dense<0.000000e+00> : vector<2x128xf32>
    %76 = tpu.matmul %47, %75, %cst_35 {dimension_numbers = #tpu.dot_dimension_numbers<[1], [0], [0], [1], [0, 0, 1, 1], [], []>} : vector<2x128xf32>, vector<128x128xf32>, vector<2x128xf32> -> vector<2x128xf32>
    %77 = arith.addf %74, %76 : vector<2x128xf32>
    %78 = arith.negf %77 : vector<2x128xf32>
    %79 = math.exp %78 : vector<2x128xf32>
    %cst_36 = arith.constant 1.000000e+00 : f32
    %80 = vector.broadcast %cst_36 : f32 to vector<2x128xf32>
    %81 = arith.addf %80, %79 : vector<2x128xf32>
    %82 = arith.divf %80, %81 : vector<2x128xf32>
    %cst_37 = arith.constant 2.000000e+00 : f32
    %83 = vector.broadcast %cst_37 : f32 to vector<2x128xf32>
    %84 = arith.mulf %83, %82 : vector<2x128xf32>
    %cst_38 = arith.constant 1.000000e+00 : f32
    %85 = vector.broadcast %cst_38 : f32 to vector<2x128xf32>
    %86 = arith.subf %84, %85 : vector<2x128xf32>
    %87 = arith.select %2, %86, %82 : vector<2x128xi1>, vector<2x128xf32>
    %c64_i32_39 = arith.constant 64 : i32
    %88 = tpu.dynamic_rotate %87 by %c64_i32_39 dim 1 : vector<2x128xf32>, i32 -> vector<2x128xf32>
    %c96_i32_40 = arith.constant 96 : i32
    %89 = tpu.dynamic_rotate %87 by %c96_i32_40 dim 1 : vector<2x128xf32>, i32 -> vector<2x128xf32>
    %c32_i32_41 = arith.constant 32 : i32
    %90 = tpu.dynamic_rotate %87 by %c32_i32_41 dim 1 : vector<2x128xf32>, i32 -> vector<2x128xf32>
    %91 = arith.mulf %87, %43 : vector<2x128xf32>
    %92 = arith.mulf %89, %90 : vector<2x128xf32>
    %93 = arith.addf %91, %92 : vector<2x128xf32>
    %94 = math.tanh %93 : vector<2x128xf32>
    %95 = arith.mulf %88, %94 : vector<2x128xf32>
    %cst_42 = arith.constant 0.000000e+00 : f32
    %96 = vector.broadcast %cst_42 : f32 to vector<2x128xf32>
    %97 = arith.select %4, %95, %96 : vector<2x128xi1>, vector<2x128xf32>
    %c32_i32_43 = arith.constant 32 : i32
    %98 = tpu.dynamic_rotate %72 by %c32_i32_43 dim 1 : vector<2x128xf32>, i32 -> vector<2x128xf32>
    %99 = arith.addf %97, %98 : vector<2x128xf32>
    %c0_44 = arith.constant 0 : index
    %c0_45 = arith.constant 0 : index
    %100 = vector.load %arg4[%c0_44, %c0_45] : memref<128x128xf32, #tpu.memory_space<vmem>>, vector<128x128xf32>
    %cst_46 = arith.constant dense<0.000000e+00> : vector<2x128xf32>
    %101 = tpu.matmul %99, %100, %cst_46 {dimension_numbers = #tpu.dot_dimension_numbers<[1], [0], [0], [1], [0, 0, 1, 1], [], []>} : vector<2x128xf32>, vector<128x128xf32>, vector<2x128xf32> -> vector<2x128xf32>
    %102 = arith.addf %101, %7 : vector<2x128xf32>
    %103 = arith.negf %102 : vector<2x128xf32>
    %104 = math.exp %103 : vector<2x128xf32>
    %cst_47 = arith.constant 1.000000e+00 : f32
    %105 = vector.broadcast %cst_47 : f32 to vector<2x128xf32>
    %106 = arith.addf %105, %104 : vector<2x128xf32>
    %107 = arith.divf %105, %106 : vector<2x128xf32>
    %cst_48 = arith.constant 2.000000e+00 : f32
    %108 = vector.broadcast %cst_48 : f32 to vector<2x128xf32>
    %109 = arith.mulf %108, %107 : vector<2x128xf32>
    %cst_49 = arith.constant 1.000000e+00 : f32
    %110 = vector.broadcast %cst_49 : f32 to vector<2x128xf32>
    %111 = arith.subf %109, %110 : vector<2x128xf32>
    %112 = arith.select %2, %111, %107 : vector<2x128xi1>, vector<2x128xf32>
    %c64_i32_50 = arith.constant 64 : i32
    %113 = tpu.dynamic_rotate %112 by %c64_i32_50 dim 1 : vector<2x128xf32>, i32 -> vector<2x128xf32>
    %c96_i32_51 = arith.constant 96 : i32
    %114 = tpu.dynamic_rotate %112 by %c96_i32_51 dim 1 : vector<2x128xf32>, i32 -> vector<2x128xf32>
    %c32_i32_52 = arith.constant 32 : i32
    %115 = tpu.dynamic_rotate %112 by %c32_i32_52 dim 1 : vector<2x128xf32>, i32 -> vector<2x128xf32>
    %116 = arith.mulf %112, %68 : vector<2x128xf32>
    %117 = arith.mulf %114, %115 : vector<2x128xf32>
    %118 = arith.addf %116, %117 : vector<2x128xf32>
    %119 = math.tanh %118 : vector<2x128xf32>
    %120 = arith.mulf %113, %119 : vector<2x128xf32>
    %cst_53 = arith.constant 0.000000e+00 : f32
    %121 = vector.broadcast %cst_53 : f32 to vector<2x128xf32>
    %122 = arith.select %4, %120, %121 : vector<2x128xi1>, vector<2x128xf32>
    %123 = vector.extract_strided_slice %21 {offsets = [0, 2, 0], sizes = [2, 1, 128], strides = [1, 1, 1]} : vector<2x8x128xf32> to vector<2x1x128xf32>
    %124 = vector.shape_cast %123 : vector<2x1x128xf32> to vector<2x128xf32>
    %c0_54 = arith.constant 0 : index
    %c0_55 = arith.constant 0 : index
    %125 = vector.load %arg3[%c0_54, %c0_55] : memref<128x128xf32, #tpu.memory_space<vmem>>, vector<128x128xf32>
    %cst_56 = arith.constant dense<0.000000e+00> : vector<2x128xf32>
    %126 = tpu.matmul %97, %125, %cst_56 {dimension_numbers = #tpu.dot_dimension_numbers<[1], [0], [0], [1], [0, 0, 1, 1], [], []>} : vector<2x128xf32>, vector<128x128xf32>, vector<2x128xf32> -> vector<2x128xf32>
    %127 = arith.addf %124, %126 : vector<2x128xf32>
    %128 = arith.negf %127 : vector<2x128xf32>
    %129 = math.exp %128 : vector<2x128xf32>
    %cst_57 = arith.constant 1.000000e+00 : f32
    %130 = vector.broadcast %cst_57 : f32 to vector<2x128xf32>
    %131 = arith.addf %130, %129 : vector<2x128xf32>
    %132 = arith.divf %130, %131 : vector<2x128xf32>
    %cst_58 = arith.constant 2.000000e+00 : f32
    %133 = vector.broadcast %cst_58 : f32 to vector<2x128xf32>
    %134 = arith.mulf %133, %132 : vector<2x128xf32>
    %cst_59 = arith.constant 1.000000e+00 : f32
    %135 = vector.broadcast %cst_59 : f32 to vector<2x128xf32>
    %136 = arith.subf %134, %135 : vector<2x128xf32>
    %137 = arith.select %2, %136, %132 : vector<2x128xi1>, vector<2x128xf32>
    %c64_i32_60 = arith.constant 64 : i32
    %138 = tpu.dynamic_rotate %137 by %c64_i32_60 dim 1 : vector<2x128xf32>, i32 -> vector<2x128xf32>
    %c96_i32_61 = arith.constant 96 : i32
    %139 = tpu.dynamic_rotate %137 by %c96_i32_61 dim 1 : vector<2x128xf32>, i32 -> vector<2x128xf32>
    %c32_i32_62 = arith.constant 32 : i32
    %140 = tpu.dynamic_rotate %137 by %c32_i32_62 dim 1 : vector<2x128xf32>, i32 -> vector<2x128xf32>
    %141 = arith.mulf %137, %93 : vector<2x128xf32>
    %142 = arith.mulf %139, %140 : vector<2x128xf32>
    %143 = arith.addf %141, %142 : vector<2x128xf32>
    %144 = math.tanh %143 : vector<2x128xf32>
    %145 = arith.mulf %138, %144 : vector<2x128xf32>
    %cst_63 = arith.constant 0.000000e+00 : f32
    %146 = vector.broadcast %cst_63 : f32 to vector<2x128xf32>
    %147 = arith.select %4, %145, %146 : vector<2x128xi1>, vector<2x128xf32>
    %c32_i32_64 = arith.constant 32 : i32
    %148 = tpu.dynamic_rotate %122 by %c32_i32_64 dim 1 : vector<2x128xf32>, i32 -> vector<2x128xf32>
    %149 = arith.addf %147, %148 : vector<2x128xf32>
    %c0_65 = arith.constant 0 : index
    %c0_66 = arith.constant 0 : index
    %150 = vector.load %arg4[%c0_65, %c0_66] : memref<128x128xf32, #tpu.memory_space<vmem>>, vector<128x128xf32>
    %cst_67 = arith.constant dense<0.000000e+00> : vector<2x128xf32>
    %151 = tpu.matmul %149, %150, %cst_67 {dimension_numbers = #tpu.dot_dimension_numbers<[1], [0], [0], [1], [0, 0, 1, 1], [], []>} : vector<2x128xf32>, vector<128x128xf32>, vector<2x128xf32> -> vector<2x128xf32>
    %152 = arith.addf %151, %7 : vector<2x128xf32>
    %153 = arith.negf %152 : vector<2x128xf32>
    %154 = math.exp %153 : vector<2x128xf32>
    %cst_68 = arith.constant 1.000000e+00 : f32
    %155 = vector.broadcast %cst_68 : f32 to vector<2x128xf32>
    %156 = arith.addf %155, %154 : vector<2x128xf32>
    %157 = arith.divf %155, %156 : vector<2x128xf32>
    %cst_69 = arith.constant 2.000000e+00 : f32
    %158 = vector.broadcast %cst_69 : f32 to vector<2x128xf32>
    %159 = arith.mulf %158, %157 : vector<2x128xf32>
    %cst_70 = arith.constant 1.000000e+00 : f32
    %160 = vector.broadcast %cst_70 : f32 to vector<2x128xf32>
    %161 = arith.subf %159, %160 : vector<2x128xf32>
    %162 = arith.select %2, %161, %157 : vector<2x128xi1>, vector<2x128xf32>
    %c64_i32_71 = arith.constant 64 : i32
    %163 = tpu.dynamic_rotate %162 by %c64_i32_71 dim 1 : vector<2x128xf32>, i32 -> vector<2x128xf32>
    %c96_i32_72 = arith.constant 96 : i32
    %164 = tpu.dynamic_rotate %162 by %c96_i32_72 dim 1 : vector<2x128xf32>, i32 -> vector<2x128xf32>
    %c32_i32_73 = arith.constant 32 : i32
    %165 = tpu.dynamic_rotate %162 by %c32_i32_73 dim 1 : vector<2x128xf32>, i32 -> vector<2x128xf32>
    %166 = arith.mulf %162, %118 : vector<2x128xf32>
    %167 = arith.mulf %164, %165 : vector<2x128xf32>
    %168 = arith.addf %166, %167 : vector<2x128xf32>
    %169 = math.tanh %168 : vector<2x128xf32>
    %170 = arith.mulf %163, %169 : vector<2x128xf32>
    %cst_74 = arith.constant 0.000000e+00 : f32
    %171 = vector.broadcast %cst_74 : f32 to vector<2x128xf32>
    %172 = arith.select %4, %170, %171 : vector<2x128xi1>, vector<2x128xf32>
    %173 = vector.extract_strided_slice %21 {offsets = [0, 3, 0], sizes = [2, 1, 128], strides = [1, 1, 1]} : vector<2x8x128xf32> to vector<2x1x128xf32>
    %174 = vector.shape_cast %173 : vector<2x1x128xf32> to vector<2x128xf32>
    %c0_75 = arith.constant 0 : index
    %c0_76 = arith.constant 0 : index
    %175 = vector.load %arg3[%c0_75, %c0_76] : memref<128x128xf32, #tpu.memory_space<vmem>>, vector<128x128xf32>
    %cst_77 = arith.constant dense<0.000000e+00> : vector<2x128xf32>
    %176 = tpu.matmul %147, %175, %cst_77 {dimension_numbers = #tpu.dot_dimension_numbers<[1], [0], [0], [1], [0, 0, 1, 1], [], []>} : vector<2x128xf32>, vector<128x128xf32>, vector<2x128xf32> -> vector<2x128xf32>
    %177 = arith.addf %174, %176 : vector<2x128xf32>
    %178 = arith.negf %177 : vector<2x128xf32>
    %179 = math.exp %178 : vector<2x128xf32>
    %cst_78 = arith.constant 1.000000e+00 : f32
    %180 = vector.broadcast %cst_78 : f32 to vector<2x128xf32>
    %181 = arith.addf %180, %179 : vector<2x128xf32>
    %182 = arith.divf %180, %181 : vector<2x128xf32>
    %cst_79 = arith.constant 2.000000e+00 : f32
    %183 = vector.broadcast %cst_79 : f32 to vector<2x128xf32>
    %184 = arith.mulf %183, %182 : vector<2x128xf32>
    %cst_80 = arith.constant 1.000000e+00 : f32
    %185 = vector.broadcast %cst_80 : f32 to vector<2x128xf32>
    %186 = arith.subf %184, %185 : vector<2x128xf32>
    %187 = arith.select %2, %186, %182 : vector<2x128xi1>, vector<2x128xf32>
    %c64_i32_81 = arith.constant 64 : i32
    %188 = tpu.dynamic_rotate %187 by %c64_i32_81 dim 1 : vector<2x128xf32>, i32 -> vector<2x128xf32>
    %c96_i32_82 = arith.constant 96 : i32
    %189 = tpu.dynamic_rotate %187 by %c96_i32_82 dim 1 : vector<2x128xf32>, i32 -> vector<2x128xf32>
    %c32_i32_83 = arith.constant 32 : i32
    %190 = tpu.dynamic_rotate %187 by %c32_i32_83 dim 1 : vector<2x128xf32>, i32 -> vector<2x128xf32>
    %191 = arith.mulf %187, %143 : vector<2x128xf32>
    %192 = arith.mulf %189, %190 : vector<2x128xf32>
    %193 = arith.addf %191, %192 : vector<2x128xf32>
    %194 = math.tanh %193 : vector<2x128xf32>
    %195 = arith.mulf %188, %194 : vector<2x128xf32>
    %cst_84 = arith.constant 0.000000e+00 : f32
    %196 = vector.broadcast %cst_84 : f32 to vector<2x128xf32>
    %197 = arith.select %4, %195, %196 : vector<2x128xi1>, vector<2x128xf32>
    %c32_i32_85 = arith.constant 32 : i32
    %198 = tpu.dynamic_rotate %172 by %c32_i32_85 dim 1 : vector<2x128xf32>, i32 -> vector<2x128xf32>
    %199 = arith.addf %197, %198 : vector<2x128xf32>
    %c0_86 = arith.constant 0 : index
    %c0_87 = arith.constant 0 : index
    %200 = vector.load %arg4[%c0_86, %c0_87] : memref<128x128xf32, #tpu.memory_space<vmem>>, vector<128x128xf32>
    %cst_88 = arith.constant dense<0.000000e+00> : vector<2x128xf32>
    %201 = tpu.matmul %199, %200, %cst_88 {dimension_numbers = #tpu.dot_dimension_numbers<[1], [0], [0], [1], [0, 0, 1, 1], [], []>} : vector<2x128xf32>, vector<128x128xf32>, vector<2x128xf32> -> vector<2x128xf32>
    %202 = arith.addf %201, %7 : vector<2x128xf32>
    %203 = arith.negf %202 : vector<2x128xf32>
    %204 = math.exp %203 : vector<2x128xf32>
    %cst_89 = arith.constant 1.000000e+00 : f32
    %205 = vector.broadcast %cst_89 : f32 to vector<2x128xf32>
    %206 = arith.addf %205, %204 : vector<2x128xf32>
    %207 = arith.divf %205, %206 : vector<2x128xf32>
    %cst_90 = arith.constant 2.000000e+00 : f32
    %208 = vector.broadcast %cst_90 : f32 to vector<2x128xf32>
    %209 = arith.mulf %208, %207 : vector<2x128xf32>
    %cst_91 = arith.constant 1.000000e+00 : f32
    %210 = vector.broadcast %cst_91 : f32 to vector<2x128xf32>
    %211 = arith.subf %209, %210 : vector<2x128xf32>
    %212 = arith.select %2, %211, %207 : vector<2x128xi1>, vector<2x128xf32>
    %c64_i32_92 = arith.constant 64 : i32
    %213 = tpu.dynamic_rotate %212 by %c64_i32_92 dim 1 : vector<2x128xf32>, i32 -> vector<2x128xf32>
    %c96_i32_93 = arith.constant 96 : i32
    %214 = tpu.dynamic_rotate %212 by %c96_i32_93 dim 1 : vector<2x128xf32>, i32 -> vector<2x128xf32>
    %c32_i32_94 = arith.constant 32 : i32
    %215 = tpu.dynamic_rotate %212 by %c32_i32_94 dim 1 : vector<2x128xf32>, i32 -> vector<2x128xf32>
    %216 = arith.mulf %212, %168 : vector<2x128xf32>
    %217 = arith.mulf %214, %215 : vector<2x128xf32>
    %218 = arith.addf %216, %217 : vector<2x128xf32>
    %219 = math.tanh %218 : vector<2x128xf32>
    %220 = arith.mulf %213, %219 : vector<2x128xf32>
    %cst_95 = arith.constant 0.000000e+00 : f32
    %221 = vector.broadcast %cst_95 : f32 to vector<2x128xf32>
    %222 = arith.select %4, %220, %221 : vector<2x128xi1>, vector<2x128xf32>
    %223 = vector.extract_strided_slice %21 {offsets = [0, 4, 0], sizes = [2, 1, 128], strides = [1, 1, 1]} : vector<2x8x128xf32> to vector<2x1x128xf32>
    %224 = vector.shape_cast %223 : vector<2x1x128xf32> to vector<2x128xf32>
    %c0_96 = arith.constant 0 : index
    %c0_97 = arith.constant 0 : index
    %225 = vector.load %arg3[%c0_96, %c0_97] : memref<128x128xf32, #tpu.memory_space<vmem>>, vector<128x128xf32>
    %cst_98 = arith.constant dense<0.000000e+00> : vector<2x128xf32>
    %226 = tpu.matmul %197, %225, %cst_98 {dimension_numbers = #tpu.dot_dimension_numbers<[1], [0], [0], [1], [0, 0, 1, 1], [], []>} : vector<2x128xf32>, vector<128x128xf32>, vector<2x128xf32> -> vector<2x128xf32>
    %227 = arith.addf %224, %226 : vector<2x128xf32>
    %228 = arith.negf %227 : vector<2x128xf32>
    %229 = math.exp %228 : vector<2x128xf32>
    %cst_99 = arith.constant 1.000000e+00 : f32
    %230 = vector.broadcast %cst_99 : f32 to vector<2x128xf32>
    %231 = arith.addf %230, %229 : vector<2x128xf32>
    %232 = arith.divf %230, %231 : vector<2x128xf32>
    %cst_100 = arith.constant 2.000000e+00 : f32
    %233 = vector.broadcast %cst_100 : f32 to vector<2x128xf32>
    %234 = arith.mulf %233, %232 : vector<2x128xf32>
    %cst_101 = arith.constant 1.000000e+00 : f32
    %235 = vector.broadcast %cst_101 : f32 to vector<2x128xf32>
    %236 = arith.subf %234, %235 : vector<2x128xf32>
    %237 = arith.select %2, %236, %232 : vector<2x128xi1>, vector<2x128xf32>
    %c64_i32_102 = arith.constant 64 : i32
    %238 = tpu.dynamic_rotate %237 by %c64_i32_102 dim 1 : vector<2x128xf32>, i32 -> vector<2x128xf32>
    %c96_i32_103 = arith.constant 96 : i32
    %239 = tpu.dynamic_rotate %237 by %c96_i32_103 dim 1 : vector<2x128xf32>, i32 -> vector<2x128xf32>
    %c32_i32_104 = arith.constant 32 : i32
    %240 = tpu.dynamic_rotate %237 by %c32_i32_104 dim 1 : vector<2x128xf32>, i32 -> vector<2x128xf32>
    %241 = arith.mulf %237, %193 : vector<2x128xf32>
    %242 = arith.mulf %239, %240 : vector<2x128xf32>
    %243 = arith.addf %241, %242 : vector<2x128xf32>
    %244 = math.tanh %243 : vector<2x128xf32>
    %245 = arith.mulf %238, %244 : vector<2x128xf32>
    %cst_105 = arith.constant 0.000000e+00 : f32
    %246 = vector.broadcast %cst_105 : f32 to vector<2x128xf32>
    %247 = arith.select %4, %245, %246 : vector<2x128xi1>, vector<2x128xf32>
    %c32_i32_106 = arith.constant 32 : i32
    %248 = tpu.dynamic_rotate %222 by %c32_i32_106 dim 1 : vector<2x128xf32>, i32 -> vector<2x128xf32>
    %249 = arith.addf %247, %248 : vector<2x128xf32>
    %c0_107 = arith.constant 0 : index
    %c0_108 = arith.constant 0 : index
    %250 = vector.load %arg4[%c0_107, %c0_108] : memref<128x128xf32, #tpu.memory_space<vmem>>, vector<128x128xf32>
    %cst_109 = arith.constant dense<0.000000e+00> : vector<2x128xf32>
    %251 = tpu.matmul %249, %250, %cst_109 {dimension_numbers = #tpu.dot_dimension_numbers<[1], [0], [0], [1], [0, 0, 1, 1], [], []>} : vector<2x128xf32>, vector<128x128xf32>, vector<2x128xf32> -> vector<2x128xf32>
    %252 = arith.addf %251, %7 : vector<2x128xf32>
    %253 = arith.negf %252 : vector<2x128xf32>
    %254 = math.exp %253 : vector<2x128xf32>
    %cst_110 = arith.constant 1.000000e+00 : f32
    %255 = vector.broadcast %cst_110 : f32 to vector<2x128xf32>
    %256 = arith.addf %255, %254 : vector<2x128xf32>
    %257 = arith.divf %255, %256 : vector<2x128xf32>
    %cst_111 = arith.constant 2.000000e+00 : f32
    %258 = vector.broadcast %cst_111 : f32 to vector<2x128xf32>
    %259 = arith.mulf %258, %257 : vector<2x128xf32>
    %cst_112 = arith.constant 1.000000e+00 : f32
    %260 = vector.broadcast %cst_112 : f32 to vector<2x128xf32>
    %261 = arith.subf %259, %260 : vector<2x128xf32>
    %262 = arith.select %2, %261, %257 : vector<2x128xi1>, vector<2x128xf32>
    %c64_i32_113 = arith.constant 64 : i32
    %263 = tpu.dynamic_rotate %262 by %c64_i32_113 dim 1 : vector<2x128xf32>, i32 -> vector<2x128xf32>
    %c96_i32_114 = arith.constant 96 : i32
    %264 = tpu.dynamic_rotate %262 by %c96_i32_114 dim 1 : vector<2x128xf32>, i32 -> vector<2x128xf32>
    %c32_i32_115 = arith.constant 32 : i32
    %265 = tpu.dynamic_rotate %262 by %c32_i32_115 dim 1 : vector<2x128xf32>, i32 -> vector<2x128xf32>
    %266 = arith.mulf %262, %218 : vector<2x128xf32>
    %267 = arith.mulf %264, %265 : vector<2x128xf32>
    %268 = arith.addf %266, %267 : vector<2x128xf32>
    %269 = math.tanh %268 : vector<2x128xf32>
    %270 = arith.mulf %263, %269 : vector<2x128xf32>
    %cst_116 = arith.constant 0.000000e+00 : f32
    %271 = vector.broadcast %cst_116 : f32 to vector<2x128xf32>
    %272 = arith.select %4, %270, %271 : vector<2x128xi1>, vector<2x128xf32>
    %273 = vector.extract_strided_slice %21 {offsets = [0, 5, 0], sizes = [2, 1, 128], strides = [1, 1, 1]} : vector<2x8x128xf32> to vector<2x1x128xf32>
    %274 = vector.shape_cast %273 : vector<2x1x128xf32> to vector<2x128xf32>
    %c0_117 = arith.constant 0 : index
    %c0_118 = arith.constant 0 : index
    %275 = vector.load %arg3[%c0_117, %c0_118] : memref<128x128xf32, #tpu.memory_space<vmem>>, vector<128x128xf32>
    %cst_119 = arith.constant dense<0.000000e+00> : vector<2x128xf32>
    %276 = tpu.matmul %247, %275, %cst_119 {dimension_numbers = #tpu.dot_dimension_numbers<[1], [0], [0], [1], [0, 0, 1, 1], [], []>} : vector<2x128xf32>, vector<128x128xf32>, vector<2x128xf32> -> vector<2x128xf32>
    %277 = arith.addf %274, %276 : vector<2x128xf32>
    %278 = arith.negf %277 : vector<2x128xf32>
    %279 = math.exp %278 : vector<2x128xf32>
    %cst_120 = arith.constant 1.000000e+00 : f32
    %280 = vector.broadcast %cst_120 : f32 to vector<2x128xf32>
    %281 = arith.addf %280, %279 : vector<2x128xf32>
    %282 = arith.divf %280, %281 : vector<2x128xf32>
    %cst_121 = arith.constant 2.000000e+00 : f32
    %283 = vector.broadcast %cst_121 : f32 to vector<2x128xf32>
    %284 = arith.mulf %283, %282 : vector<2x128xf32>
    %cst_122 = arith.constant 1.000000e+00 : f32
    %285 = vector.broadcast %cst_122 : f32 to vector<2x128xf32>
    %286 = arith.subf %284, %285 : vector<2x128xf32>
    %287 = arith.select %2, %286, %282 : vector<2x128xi1>, vector<2x128xf32>
    %c64_i32_123 = arith.constant 64 : i32
    %288 = tpu.dynamic_rotate %287 by %c64_i32_123 dim 1 : vector<2x128xf32>, i32 -> vector<2x128xf32>
    %c96_i32_124 = arith.constant 96 : i32
    %289 = tpu.dynamic_rotate %287 by %c96_i32_124 dim 1 : vector<2x128xf32>, i32 -> vector<2x128xf32>
    %c32_i32_125 = arith.constant 32 : i32
    %290 = tpu.dynamic_rotate %287 by %c32_i32_125 dim 1 : vector<2x128xf32>, i32 -> vector<2x128xf32>
    %291 = arith.mulf %287, %243 : vector<2x128xf32>
    %292 = arith.mulf %289, %290 : vector<2x128xf32>
    %293 = arith.addf %291, %292 : vector<2x128xf32>
    %294 = math.tanh %293 : vector<2x128xf32>
    %295 = arith.mulf %288, %294 : vector<2x128xf32>
    %cst_126 = arith.constant 0.000000e+00 : f32
    %296 = vector.broadcast %cst_126 : f32 to vector<2x128xf32>
    %297 = arith.select %4, %295, %296 : vector<2x128xi1>, vector<2x128xf32>
    %c32_i32_127 = arith.constant 32 : i32
    %298 = tpu.dynamic_rotate %272 by %c32_i32_127 dim 1 : vector<2x128xf32>, i32 -> vector<2x128xf32>
    %299 = arith.addf %297, %298 : vector<2x128xf32>
    %c0_128 = arith.constant 0 : index
    %c0_129 = arith.constant 0 : index
    %300 = vector.load %arg4[%c0_128, %c0_129] : memref<128x128xf32, #tpu.memory_space<vmem>>, vector<128x128xf32>
    %cst_130 = arith.constant dense<0.000000e+00> : vector<2x128xf32>
    %301 = tpu.matmul %299, %300, %cst_130 {dimension_numbers = #tpu.dot_dimension_numbers<[1], [0], [0], [1], [0, 0, 1, 1], [], []>} : vector<2x128xf32>, vector<128x128xf32>, vector<2x128xf32> -> vector<2x128xf32>
    %302 = arith.addf %301, %7 : vector<2x128xf32>
    %303 = arith.negf %302 : vector<2x128xf32>
    %304 = math.exp %303 : vector<2x128xf32>
    %cst_131 = arith.constant 1.000000e+00 : f32
    %305 = vector.broadcast %cst_131 : f32 to vector<2x128xf32>
    %306 = arith.addf %305, %304 : vector<2x128xf32>
    %307 = arith.divf %305, %306 : vector<2x128xf32>
    %cst_132 = arith.constant 2.000000e+00 : f32
    %308 = vector.broadcast %cst_132 : f32 to vector<2x128xf32>
    %309 = arith.mulf %308, %307 : vector<2x128xf32>
    %cst_133 = arith.constant 1.000000e+00 : f32
    %310 = vector.broadcast %cst_133 : f32 to vector<2x128xf32>
    %311 = arith.subf %309, %310 : vector<2x128xf32>
    %312 = arith.select %2, %311, %307 : vector<2x128xi1>, vector<2x128xf32>
    %c64_i32_134 = arith.constant 64 : i32
    %313 = tpu.dynamic_rotate %312 by %c64_i32_134 dim 1 : vector<2x128xf32>, i32 -> vector<2x128xf32>
    %c96_i32_135 = arith.constant 96 : i32
    %314 = tpu.dynamic_rotate %312 by %c96_i32_135 dim 1 : vector<2x128xf32>, i32 -> vector<2x128xf32>
    %c32_i32_136 = arith.constant 32 : i32
    %315 = tpu.dynamic_rotate %312 by %c32_i32_136 dim 1 : vector<2x128xf32>, i32 -> vector<2x128xf32>
    %316 = arith.mulf %312, %268 : vector<2x128xf32>
    %317 = arith.mulf %314, %315 : vector<2x128xf32>
    %318 = arith.addf %316, %317 : vector<2x128xf32>
    %319 = math.tanh %318 : vector<2x128xf32>
    %320 = arith.mulf %313, %319 : vector<2x128xf32>
    %cst_137 = arith.constant 0.000000e+00 : f32
    %321 = vector.broadcast %cst_137 : f32 to vector<2x128xf32>
    %322 = arith.select %4, %320, %321 : vector<2x128xi1>, vector<2x128xf32>
    %323 = vector.extract_strided_slice %21 {offsets = [0, 6, 0], sizes = [2, 1, 128], strides = [1, 1, 1]} : vector<2x8x128xf32> to vector<2x1x128xf32>
    %324 = vector.shape_cast %323 : vector<2x1x128xf32> to vector<2x128xf32>
    %c0_138 = arith.constant 0 : index
    %c0_139 = arith.constant 0 : index
    %325 = vector.load %arg3[%c0_138, %c0_139] : memref<128x128xf32, #tpu.memory_space<vmem>>, vector<128x128xf32>
    %cst_140 = arith.constant dense<0.000000e+00> : vector<2x128xf32>
    %326 = tpu.matmul %297, %325, %cst_140 {dimension_numbers = #tpu.dot_dimension_numbers<[1], [0], [0], [1], [0, 0, 1, 1], [], []>} : vector<2x128xf32>, vector<128x128xf32>, vector<2x128xf32> -> vector<2x128xf32>
    %327 = arith.addf %324, %326 : vector<2x128xf32>
    %328 = arith.negf %327 : vector<2x128xf32>
    %329 = math.exp %328 : vector<2x128xf32>
    %cst_141 = arith.constant 1.000000e+00 : f32
    %330 = vector.broadcast %cst_141 : f32 to vector<2x128xf32>
    %331 = arith.addf %330, %329 : vector<2x128xf32>
    %332 = arith.divf %330, %331 : vector<2x128xf32>
    %cst_142 = arith.constant 2.000000e+00 : f32
    %333 = vector.broadcast %cst_142 : f32 to vector<2x128xf32>
    %334 = arith.mulf %333, %332 : vector<2x128xf32>
    %cst_143 = arith.constant 1.000000e+00 : f32
    %335 = vector.broadcast %cst_143 : f32 to vector<2x128xf32>
    %336 = arith.subf %334, %335 : vector<2x128xf32>
    %337 = arith.select %2, %336, %332 : vector<2x128xi1>, vector<2x128xf32>
    %c64_i32_144 = arith.constant 64 : i32
    %338 = tpu.dynamic_rotate %337 by %c64_i32_144 dim 1 : vector<2x128xf32>, i32 -> vector<2x128xf32>
    %c96_i32_145 = arith.constant 96 : i32
    %339 = tpu.dynamic_rotate %337 by %c96_i32_145 dim 1 : vector<2x128xf32>, i32 -> vector<2x128xf32>
    %c32_i32_146 = arith.constant 32 : i32
    %340 = tpu.dynamic_rotate %337 by %c32_i32_146 dim 1 : vector<2x128xf32>, i32 -> vector<2x128xf32>
    %341 = arith.mulf %337, %293 : vector<2x128xf32>
    %342 = arith.mulf %339, %340 : vector<2x128xf32>
    %343 = arith.addf %341, %342 : vector<2x128xf32>
    %344 = math.tanh %343 : vector<2x128xf32>
    %345 = arith.mulf %338, %344 : vector<2x128xf32>
    %cst_147 = arith.constant 0.000000e+00 : f32
    %346 = vector.broadcast %cst_147 : f32 to vector<2x128xf32>
    %347 = arith.select %4, %345, %346 : vector<2x128xi1>, vector<2x128xf32>
    %c32_i32_148 = arith.constant 32 : i32
    %348 = tpu.dynamic_rotate %322 by %c32_i32_148 dim 1 : vector<2x128xf32>, i32 -> vector<2x128xf32>
    %349 = arith.addf %347, %348 : vector<2x128xf32>
    %c0_149 = arith.constant 0 : index
    %c0_150 = arith.constant 0 : index
    %350 = vector.load %arg4[%c0_149, %c0_150] : memref<128x128xf32, #tpu.memory_space<vmem>>, vector<128x128xf32>
    %cst_151 = arith.constant dense<0.000000e+00> : vector<2x128xf32>
    %351 = tpu.matmul %349, %350, %cst_151 {dimension_numbers = #tpu.dot_dimension_numbers<[1], [0], [0], [1], [0, 0, 1, 1], [], []>} : vector<2x128xf32>, vector<128x128xf32>, vector<2x128xf32> -> vector<2x128xf32>
    %352 = arith.addf %351, %7 : vector<2x128xf32>
    %353 = arith.negf %352 : vector<2x128xf32>
    %354 = math.exp %353 : vector<2x128xf32>
    %cst_152 = arith.constant 1.000000e+00 : f32
    %355 = vector.broadcast %cst_152 : f32 to vector<2x128xf32>
    %356 = arith.addf %355, %354 : vector<2x128xf32>
    %357 = arith.divf %355, %356 : vector<2x128xf32>
    %cst_153 = arith.constant 2.000000e+00 : f32
    %358 = vector.broadcast %cst_153 : f32 to vector<2x128xf32>
    %359 = arith.mulf %358, %357 : vector<2x128xf32>
    %cst_154 = arith.constant 1.000000e+00 : f32
    %360 = vector.broadcast %cst_154 : f32 to vector<2x128xf32>
    %361 = arith.subf %359, %360 : vector<2x128xf32>
    %362 = arith.select %2, %361, %357 : vector<2x128xi1>, vector<2x128xf32>
    %c64_i32_155 = arith.constant 64 : i32
    %363 = tpu.dynamic_rotate %362 by %c64_i32_155 dim 1 : vector<2x128xf32>, i32 -> vector<2x128xf32>
    %c96_i32_156 = arith.constant 96 : i32
    %364 = tpu.dynamic_rotate %362 by %c96_i32_156 dim 1 : vector<2x128xf32>, i32 -> vector<2x128xf32>
    %c32_i32_157 = arith.constant 32 : i32
    %365 = tpu.dynamic_rotate %362 by %c32_i32_157 dim 1 : vector<2x128xf32>, i32 -> vector<2x128xf32>
    %366 = arith.mulf %362, %318 : vector<2x128xf32>
    %367 = arith.mulf %364, %365 : vector<2x128xf32>
    %368 = arith.addf %366, %367 : vector<2x128xf32>
    %369 = math.tanh %368 : vector<2x128xf32>
    %370 = arith.mulf %363, %369 : vector<2x128xf32>
    %cst_158 = arith.constant 0.000000e+00 : f32
    %371 = vector.broadcast %cst_158 : f32 to vector<2x128xf32>
    %372 = arith.select %4, %370, %371 : vector<2x128xi1>, vector<2x128xf32>
    %373 = vector.extract_strided_slice %21 {offsets = [0, 7, 0], sizes = [2, 1, 128], strides = [1, 1, 1]} : vector<2x8x128xf32> to vector<2x1x128xf32>
    %374 = vector.shape_cast %373 : vector<2x1x128xf32> to vector<2x128xf32>
    %c0_159 = arith.constant 0 : index
    %c0_160 = arith.constant 0 : index
    %375 = vector.load %arg3[%c0_159, %c0_160] : memref<128x128xf32, #tpu.memory_space<vmem>>, vector<128x128xf32>
    %cst_161 = arith.constant dense<0.000000e+00> : vector<2x128xf32>
    %376 = tpu.matmul %347, %375, %cst_161 {dimension_numbers = #tpu.dot_dimension_numbers<[1], [0], [0], [1], [0, 0, 1, 1], [], []>} : vector<2x128xf32>, vector<128x128xf32>, vector<2x128xf32> -> vector<2x128xf32>
    %377 = arith.addf %374, %376 : vector<2x128xf32>
    %378 = arith.negf %377 : vector<2x128xf32>
    %379 = math.exp %378 : vector<2x128xf32>
    %cst_162 = arith.constant 1.000000e+00 : f32
    %380 = vector.broadcast %cst_162 : f32 to vector<2x128xf32>
    %381 = arith.addf %380, %379 : vector<2x128xf32>
    %382 = arith.divf %380, %381 : vector<2x128xf32>
    %cst_163 = arith.constant 2.000000e+00 : f32
    %383 = vector.broadcast %cst_163 : f32 to vector<2x128xf32>
    %384 = arith.mulf %383, %382 : vector<2x128xf32>
    %cst_164 = arith.constant 1.000000e+00 : f32
    %385 = vector.broadcast %cst_164 : f32 to vector<2x128xf32>
    %386 = arith.subf %384, %385 : vector<2x128xf32>
    %387 = arith.select %2, %386, %382 : vector<2x128xi1>, vector<2x128xf32>
    %c64_i32_165 = arith.constant 64 : i32
    %388 = tpu.dynamic_rotate %387 by %c64_i32_165 dim 1 : vector<2x128xf32>, i32 -> vector<2x128xf32>
    %c96_i32_166 = arith.constant 96 : i32
    %389 = tpu.dynamic_rotate %387 by %c96_i32_166 dim 1 : vector<2x128xf32>, i32 -> vector<2x128xf32>
    %c32_i32_167 = arith.constant 32 : i32
    %390 = tpu.dynamic_rotate %387 by %c32_i32_167 dim 1 : vector<2x128xf32>, i32 -> vector<2x128xf32>
    %391 = arith.mulf %387, %343 : vector<2x128xf32>
    %392 = arith.mulf %389, %390 : vector<2x128xf32>
    %393 = arith.addf %391, %392 : vector<2x128xf32>
    %394 = math.tanh %393 : vector<2x128xf32>
    %395 = arith.mulf %388, %394 : vector<2x128xf32>
    %cst_168 = arith.constant 0.000000e+00 : f32
    %396 = vector.broadcast %cst_168 : f32 to vector<2x128xf32>
    %397 = arith.select %4, %395, %396 : vector<2x128xi1>, vector<2x128xf32>
    %c32_i32_169 = arith.constant 32 : i32
    %398 = tpu.dynamic_rotate %372 by %c32_i32_169 dim 1 : vector<2x128xf32>, i32 -> vector<2x128xf32>
    %399 = arith.addf %397, %398 : vector<2x128xf32>
    %c0_170 = arith.constant 0 : index
    %c0_171 = arith.constant 0 : index
    %400 = vector.load %arg4[%c0_170, %c0_171] : memref<128x128xf32, #tpu.memory_space<vmem>>, vector<128x128xf32>
    %cst_172 = arith.constant dense<0.000000e+00> : vector<2x128xf32>
    %401 = tpu.matmul %399, %400, %cst_172 {dimension_numbers = #tpu.dot_dimension_numbers<[1], [0], [0], [1], [0, 0, 1, 1], [], []>} : vector<2x128xf32>, vector<128x128xf32>, vector<2x128xf32> -> vector<2x128xf32>
    %402 = arith.addf %401, %7 : vector<2x128xf32>
    %403 = arith.negf %402 : vector<2x128xf32>
    %404 = math.exp %403 : vector<2x128xf32>
    %cst_173 = arith.constant 1.000000e+00 : f32
    %405 = vector.broadcast %cst_173 : f32 to vector<2x128xf32>
    %406 = arith.addf %405, %404 : vector<2x128xf32>
    %407 = arith.divf %405, %406 : vector<2x128xf32>
    %cst_174 = arith.constant 2.000000e+00 : f32
    %408 = vector.broadcast %cst_174 : f32 to vector<2x128xf32>
    %409 = arith.mulf %408, %407 : vector<2x128xf32>
    %cst_175 = arith.constant 1.000000e+00 : f32
    %410 = vector.broadcast %cst_175 : f32 to vector<2x128xf32>
    %411 = arith.subf %409, %410 : vector<2x128xf32>
    %412 = arith.select %2, %411, %407 : vector<2x128xi1>, vector<2x128xf32>
    %c64_i32_176 = arith.constant 64 : i32
    %413 = tpu.dynamic_rotate %412 by %c64_i32_176 dim 1 : vector<2x128xf32>, i32 -> vector<2x128xf32>
    %c96_i32_177 = arith.constant 96 : i32
    %414 = tpu.dynamic_rotate %412 by %c96_i32_177 dim 1 : vector<2x128xf32>, i32 -> vector<2x128xf32>
    %c32_i32_178 = arith.constant 32 : i32
    %415 = tpu.dynamic_rotate %412 by %c32_i32_178 dim 1 : vector<2x128xf32>, i32 -> vector<2x128xf32>
    %416 = arith.mulf %412, %368 : vector<2x128xf32>
    %417 = arith.mulf %414, %415 : vector<2x128xf32>
    %418 = arith.addf %416, %417 : vector<2x128xf32>
    %419 = math.tanh %418 : vector<2x128xf32>
    %420 = arith.mulf %413, %419 : vector<2x128xf32>
    %cst_179 = arith.constant 0.000000e+00 : f32
    %421 = vector.broadcast %cst_179 : f32 to vector<2x128xf32>
    %422 = arith.select %4, %420, %421 : vector<2x128xi1>, vector<2x128xf32>
    %423 = vector.extract_strided_slice %14 {offsets = [0, 7, 0], sizes = [2, 1, 3], strides = [1, 1, 1]} : vector<2x8x3xf32> to vector<2x1x3xf32>
    %424 = vector.shape_cast %423 : vector<2x1x3xf32> to vector<2x3xf32>
    %c0_180 = arith.constant 0 : index
    %c0_181 = arith.constant 0 : index
    %425 = vector.load %arg6[%c0_180, %c0_181] : memref<3x128xf32, #tpu.memory_space<vmem>>, vector<3x128xf32>
    %cst_182 = arith.constant dense<0.000000e+00> : vector<2x128xf32>
    %426 = tpu.matmul %424, %425, %cst_182 {dimension_numbers = #tpu.dot_dimension_numbers<[1], [0], [0], [1], [0, 0, 1, 1], [], []>} : vector<2x3xf32>, vector<3x128xf32>, vector<2x128xf32> -> vector<2x128xf32>
    %c0_183 = arith.constant 0 : index
    %c0_184 = arith.constant 0 : index
    %427 = vector.load %arg7[%c0_183, %c0_184] : memref<1x128xf32, #tpu.memory_space<vmem>>, vector<1x128xf32>
    %428 = vector.broadcast %427 : vector<1x128xf32> to vector<2x128xf32>
    %429 = arith.addf %426, %428 : vector<2x128xf32>
    %c0_185 = arith.constant 0 : index
    %c0_186 = arith.constant 0 : index
    %430 = vector.load %arg8[%c0_185, %c0_186] : memref<128x128xf32, #tpu.memory_space<vmem>>, vector<128x128xf32>
    %cst_187 = arith.constant dense<0.000000e+00> : vector<2x128xf32>
    %431 = tpu.matmul %397, %430, %cst_187 {dimension_numbers = #tpu.dot_dimension_numbers<[1], [0], [0], [1], [0, 0, 1, 1], [], []>} : vector<2x128xf32>, vector<128x128xf32>, vector<2x128xf32> -> vector<2x128xf32>
    %432 = arith.addf %429, %431 : vector<2x128xf32>
    %433 = arith.negf %432 : vector<2x128xf32>
    %434 = math.exp %433 : vector<2x128xf32>
    %cst_188 = arith.constant 1.000000e+00 : f32
    %435 = vector.broadcast %cst_188 : f32 to vector<2x128xf32>
    %436 = arith.addf %435, %434 : vector<2x128xf32>
    %437 = arith.divf %435, %436 : vector<2x128xf32>
    %cst_189 = arith.constant 2.000000e+00 : f32
    %438 = vector.broadcast %cst_189 : f32 to vector<2x128xf32>
    %439 = arith.mulf %438, %437 : vector<2x128xf32>
    %cst_190 = arith.constant 1.000000e+00 : f32
    %440 = vector.broadcast %cst_190 : f32 to vector<2x128xf32>
    %441 = arith.subf %439, %440 : vector<2x128xf32>
    %442 = arith.select %2, %441, %437 : vector<2x128xi1>, vector<2x128xf32>
    %c64_i32_191 = arith.constant 64 : i32
    %443 = tpu.dynamic_rotate %442 by %c64_i32_191 dim 1 : vector<2x128xf32>, i32 -> vector<2x128xf32>
    %c96_i32_192 = arith.constant 96 : i32
    %444 = tpu.dynamic_rotate %442 by %c96_i32_192 dim 1 : vector<2x128xf32>, i32 -> vector<2x128xf32>
    %c32_i32_193 = arith.constant 32 : i32
    %445 = tpu.dynamic_rotate %442 by %c32_i32_193 dim 1 : vector<2x128xf32>, i32 -> vector<2x128xf32>
    %446 = arith.mulf %442, %393 : vector<2x128xf32>
    %447 = arith.mulf %444, %445 : vector<2x128xf32>
    %448 = arith.addf %446, %447 : vector<2x128xf32>
    %449 = math.tanh %448 : vector<2x128xf32>
    %450 = arith.mulf %443, %449 : vector<2x128xf32>
    %cst_194 = arith.constant 0.000000e+00 : f32
    %451 = vector.broadcast %cst_194 : f32 to vector<2x128xf32>
    %452 = arith.select %4, %450, %451 : vector<2x128xi1>, vector<2x128xf32>
    %c32_i32_195 = arith.constant 32 : i32
    %453 = tpu.dynamic_rotate %422 by %c32_i32_195 dim 1 : vector<2x128xf32>, i32 -> vector<2x128xf32>
    %454 = arith.addf %452, %453 : vector<2x128xf32>
    %c0_196 = arith.constant 0 : index
    %c0_197 = arith.constant 0 : index
    %455 = vector.load %arg11[%c0_196, %c0_197] : memref<128x128xf32, #tpu.memory_space<vmem>>, vector<128x128xf32>
    %cst_198 = arith.constant dense<0.000000e+00> : vector<2x128xf32>
    %456 = tpu.matmul %454, %455, %cst_198 {dimension_numbers = #tpu.dot_dimension_numbers<[1], [0], [0], [1], [0, 0, 1, 1], [], []>} : vector<2x128xf32>, vector<128x128xf32>, vector<2x128xf32> -> vector<2x128xf32>
    %457 = arith.addf %456, %13 : vector<2x128xf32>
    %458 = arith.negf %457 : vector<2x128xf32>
    %459 = math.exp %458 : vector<2x128xf32>
    %cst_199 = arith.constant 1.000000e+00 : f32
    %460 = vector.broadcast %cst_199 : f32 to vector<2x128xf32>
    %461 = arith.addf %460, %459 : vector<2x128xf32>
    %462 = arith.divf %460, %461 : vector<2x128xf32>
    %cst_200 = arith.constant 2.000000e+00 : f32
    %463 = vector.broadcast %cst_200 : f32 to vector<2x128xf32>
    %464 = arith.mulf %463, %462 : vector<2x128xf32>
    %cst_201 = arith.constant 1.000000e+00 : f32
    %465 = vector.broadcast %cst_201 : f32 to vector<2x128xf32>
    %466 = arith.subf %464, %465 : vector<2x128xf32>
    %467 = arith.select %2, %466, %462 : vector<2x128xi1>, vector<2x128xf32>
    %c64_i32_202 = arith.constant 64 : i32
    %468 = tpu.dynamic_rotate %467 by %c64_i32_202 dim 1 : vector<2x128xf32>, i32 -> vector<2x128xf32>
    %c96_i32_203 = arith.constant 96 : i32
    %469 = tpu.dynamic_rotate %467 by %c96_i32_203 dim 1 : vector<2x128xf32>, i32 -> vector<2x128xf32>
    %c32_i32_204 = arith.constant 32 : i32
    %470 = tpu.dynamic_rotate %467 by %c32_i32_204 dim 1 : vector<2x128xf32>, i32 -> vector<2x128xf32>
    %471 = arith.mulf %467, %418 : vector<2x128xf32>
    %472 = arith.mulf %469, %470 : vector<2x128xf32>
    %473 = arith.addf %471, %472 : vector<2x128xf32>
    %474 = math.tanh %473 : vector<2x128xf32>
    %475 = arith.mulf %468, %474 : vector<2x128xf32>
    %cst_205 = arith.constant 0.000000e+00 : f32
    %476 = vector.broadcast %cst_205 : f32 to vector<2x128xf32>
    %477 = arith.select %4, %475, %476 : vector<2x128xi1>, vector<2x128xf32>
    %c32_i32_206 = arith.constant 32 : i32
    %478 = tpu.dynamic_rotate %452 by %c32_i32_206 dim 1 : vector<2x128xf32>, i32 -> vector<2x128xf32>
    %479 = arith.addf %477, %478 : vector<2x128xf32>
    %c0_207 = arith.constant 0 : index
    %c0_208 = arith.constant 0 : index
    %480 = vector.load %arg9[%c0_207, %c0_208] : memref<128x128xf32, #tpu.memory_space<vmem>>, vector<128x128xf32>
    %cst_209 = arith.constant dense<0.000000e+00> : vector<2x128xf32>
    %481 = tpu.matmul %479, %480, %cst_209 {dimension_numbers = #tpu.dot_dimension_numbers<[1], [0], [0], [1], [0, 0, 1, 1], [], []>} : vector<2x128xf32>, vector<128x128xf32>, vector<2x128xf32> -> vector<2x128xf32>
    %482 = arith.addf %481, %10 : vector<2x128xf32>
    %483 = arith.negf %482 : vector<2x128xf32>
    %484 = math.exp %483 : vector<2x128xf32>
    %cst_210 = arith.constant 1.000000e+00 : f32
    %485 = vector.broadcast %cst_210 : f32 to vector<2x128xf32>
    %486 = arith.addf %485, %484 : vector<2x128xf32>
    %487 = arith.divf %485, %486 : vector<2x128xf32>
    %cst_211 = arith.constant 2.000000e+00 : f32
    %488 = vector.broadcast %cst_211 : f32 to vector<2x128xf32>
    %489 = arith.mulf %488, %487 : vector<2x128xf32>
    %cst_212 = arith.constant 1.000000e+00 : f32
    %490 = vector.broadcast %cst_212 : f32 to vector<2x128xf32>
    %491 = arith.subf %489, %490 : vector<2x128xf32>
    %492 = arith.select %2, %491, %487 : vector<2x128xi1>, vector<2x128xf32>
    %c64_i32_213 = arith.constant 64 : i32
    %493 = tpu.dynamic_rotate %492 by %c64_i32_213 dim 1 : vector<2x128xf32>, i32 -> vector<2x128xf32>
    %c96_i32_214 = arith.constant 96 : i32
    %494 = tpu.dynamic_rotate %492 by %c96_i32_214 dim 1 : vector<2x128xf32>, i32 -> vector<2x128xf32>
    %c32_i32_215 = arith.constant 32 : i32
    %495 = tpu.dynamic_rotate %492 by %c32_i32_215 dim 1 : vector<2x128xf32>, i32 -> vector<2x128xf32>
    %496 = arith.mulf %492, %448 : vector<2x128xf32>
    %497 = arith.mulf %494, %495 : vector<2x128xf32>
    %498 = arith.addf %496, %497 : vector<2x128xf32>
    %499 = math.tanh %498 : vector<2x128xf32>
    %500 = arith.mulf %493, %499 : vector<2x128xf32>
    %cst_216 = arith.constant 0.000000e+00 : f32
    %501 = vector.broadcast %cst_216 : f32 to vector<2x128xf32>
    %502 = arith.select %4, %500, %501 : vector<2x128xi1>, vector<2x128xf32>
    %c32_i32_217 = arith.constant 32 : i32
    %503 = tpu.dynamic_rotate %477 by %c32_i32_217 dim 1 : vector<2x128xf32>, i32 -> vector<2x128xf32>
    %504 = arith.addf %502, %503 : vector<2x128xf32>
    %c0_218 = arith.constant 0 : index
    %c0_219 = arith.constant 0 : index
    %505 = vector.load %arg11[%c0_218, %c0_219] : memref<128x128xf32, #tpu.memory_space<vmem>>, vector<128x128xf32>
    %cst_220 = arith.constant dense<0.000000e+00> : vector<2x128xf32>
    %506 = tpu.matmul %504, %505, %cst_220 {dimension_numbers = #tpu.dot_dimension_numbers<[1], [0], [0], [1], [0, 0, 1, 1], [], []>} : vector<2x128xf32>, vector<128x128xf32>, vector<2x128xf32> -> vector<2x128xf32>
    %507 = arith.addf %506, %13 : vector<2x128xf32>
    %508 = arith.negf %507 : vector<2x128xf32>
    %509 = math.exp %508 : vector<2x128xf32>
    %cst_221 = arith.constant 1.000000e+00 : f32
    %510 = vector.broadcast %cst_221 : f32 to vector<2x128xf32>
    %511 = arith.addf %510, %509 : vector<2x128xf32>
    %512 = arith.divf %510, %511 : vector<2x128xf32>
    %cst_222 = arith.constant 2.000000e+00 : f32
    %513 = vector.broadcast %cst_222 : f32 to vector<2x128xf32>
    %514 = arith.mulf %513, %512 : vector<2x128xf32>
    %cst_223 = arith.constant 1.000000e+00 : f32
    %515 = vector.broadcast %cst_223 : f32 to vector<2x128xf32>
    %516 = arith.subf %514, %515 : vector<2x128xf32>
    %517 = arith.select %2, %516, %512 : vector<2x128xi1>, vector<2x128xf32>
    %c64_i32_224 = arith.constant 64 : i32
    %518 = tpu.dynamic_rotate %517 by %c64_i32_224 dim 1 : vector<2x128xf32>, i32 -> vector<2x128xf32>
    %c96_i32_225 = arith.constant 96 : i32
    %519 = tpu.dynamic_rotate %517 by %c96_i32_225 dim 1 : vector<2x128xf32>, i32 -> vector<2x128xf32>
    %c32_i32_226 = arith.constant 32 : i32
    %520 = tpu.dynamic_rotate %517 by %c32_i32_226 dim 1 : vector<2x128xf32>, i32 -> vector<2x128xf32>
    %521 = arith.mulf %517, %473 : vector<2x128xf32>
    %522 = arith.mulf %519, %520 : vector<2x128xf32>
    %523 = arith.addf %521, %522 : vector<2x128xf32>
    %524 = math.tanh %523 : vector<2x128xf32>
    %525 = arith.mulf %518, %524 : vector<2x128xf32>
    %cst_227 = arith.constant 0.000000e+00 : f32
    %526 = vector.broadcast %cst_227 : f32 to vector<2x128xf32>
    %527 = arith.select %4, %525, %526 : vector<2x128xi1>, vector<2x128xf32>
    %c32_i32_228 = arith.constant 32 : i32
    %528 = tpu.dynamic_rotate %502 by %c32_i32_228 dim 1 : vector<2x128xf32>, i32 -> vector<2x128xf32>
    %529 = arith.addf %527, %528 : vector<2x128xf32>
    %c0_229 = arith.constant 0 : index
    %c0_230 = arith.constant 0 : index
    %530 = vector.load %arg9[%c0_229, %c0_230] : memref<128x128xf32, #tpu.memory_space<vmem>>, vector<128x128xf32>
    %cst_231 = arith.constant dense<0.000000e+00> : vector<2x128xf32>
    %531 = tpu.matmul %529, %530, %cst_231 {dimension_numbers = #tpu.dot_dimension_numbers<[1], [0], [0], [1], [0, 0, 1, 1], [], []>} : vector<2x128xf32>, vector<128x128xf32>, vector<2x128xf32> -> vector<2x128xf32>
    %532 = arith.addf %531, %10 : vector<2x128xf32>
    %533 = arith.negf %532 : vector<2x128xf32>
    %534 = math.exp %533 : vector<2x128xf32>
    %cst_232 = arith.constant 1.000000e+00 : f32
    %535 = vector.broadcast %cst_232 : f32 to vector<2x128xf32>
    %536 = arith.addf %535, %534 : vector<2x128xf32>
    %537 = arith.divf %535, %536 : vector<2x128xf32>
    %cst_233 = arith.constant 2.000000e+00 : f32
    %538 = vector.broadcast %cst_233 : f32 to vector<2x128xf32>
    %539 = arith.mulf %538, %537 : vector<2x128xf32>
    %cst_234 = arith.constant 1.000000e+00 : f32
    %540 = vector.broadcast %cst_234 : f32 to vector<2x128xf32>
    %541 = arith.subf %539, %540 : vector<2x128xf32>
    %542 = arith.select %2, %541, %537 : vector<2x128xi1>, vector<2x128xf32>
    %c64_i32_235 = arith.constant 64 : i32
    %543 = tpu.dynamic_rotate %542 by %c64_i32_235 dim 1 : vector<2x128xf32>, i32 -> vector<2x128xf32>
    %c96_i32_236 = arith.constant 96 : i32
    %544 = tpu.dynamic_rotate %542 by %c96_i32_236 dim 1 : vector<2x128xf32>, i32 -> vector<2x128xf32>
    %c32_i32_237 = arith.constant 32 : i32
    %545 = tpu.dynamic_rotate %542 by %c32_i32_237 dim 1 : vector<2x128xf32>, i32 -> vector<2x128xf32>
    %546 = arith.mulf %542, %498 : vector<2x128xf32>
    %547 = arith.mulf %544, %545 : vector<2x128xf32>
    %548 = arith.addf %546, %547 : vector<2x128xf32>
    %549 = math.tanh %548 : vector<2x128xf32>
    %550 = arith.mulf %543, %549 : vector<2x128xf32>
    %cst_238 = arith.constant 0.000000e+00 : f32
    %551 = vector.broadcast %cst_238 : f32 to vector<2x128xf32>
    %552 = arith.select %4, %550, %551 : vector<2x128xi1>, vector<2x128xf32>
    %c32_i32_239 = arith.constant 32 : i32
    %553 = tpu.dynamic_rotate %527 by %c32_i32_239 dim 1 : vector<2x128xf32>, i32 -> vector<2x128xf32>
    %554 = arith.addf %552, %553 : vector<2x128xf32>
    %c0_240 = arith.constant 0 : index
    %c0_241 = arith.constant 0 : index
    %555 = vector.load %arg11[%c0_240, %c0_241] : memref<128x128xf32, #tpu.memory_space<vmem>>, vector<128x128xf32>
    %cst_242 = arith.constant dense<0.000000e+00> : vector<2x128xf32>
    %556 = tpu.matmul %554, %555, %cst_242 {dimension_numbers = #tpu.dot_dimension_numbers<[1], [0], [0], [1], [0, 0, 1, 1], [], []>} : vector<2x128xf32>, vector<128x128xf32>, vector<2x128xf32> -> vector<2x128xf32>
    %557 = arith.addf %556, %13 : vector<2x128xf32>
    %558 = arith.negf %557 : vector<2x128xf32>
    %559 = math.exp %558 : vector<2x128xf32>
    %cst_243 = arith.constant 1.000000e+00 : f32
    %560 = vector.broadcast %cst_243 : f32 to vector<2x128xf32>
    %561 = arith.addf %560, %559 : vector<2x128xf32>
    %562 = arith.divf %560, %561 : vector<2x128xf32>
    %cst_244 = arith.constant 2.000000e+00 : f32
    %563 = vector.broadcast %cst_244 : f32 to vector<2x128xf32>
    %564 = arith.mulf %563, %562 : vector<2x128xf32>
    %cst_245 = arith.constant 1.000000e+00 : f32
    %565 = vector.broadcast %cst_245 : f32 to vector<2x128xf32>
    %566 = arith.subf %564, %565 : vector<2x128xf32>
    %567 = arith.select %2, %566, %562 : vector<2x128xi1>, vector<2x128xf32>
    %c64_i32_246 = arith.constant 64 : i32
    %568 = tpu.dynamic_rotate %567 by %c64_i32_246 dim 1 : vector<2x128xf32>, i32 -> vector<2x128xf32>
    %c96_i32_247 = arith.constant 96 : i32
    %569 = tpu.dynamic_rotate %567 by %c96_i32_247 dim 1 : vector<2x128xf32>, i32 -> vector<2x128xf32>
    %c32_i32_248 = arith.constant 32 : i32
    %570 = tpu.dynamic_rotate %567 by %c32_i32_248 dim 1 : vector<2x128xf32>, i32 -> vector<2x128xf32>
    %571 = arith.mulf %567, %523 : vector<2x128xf32>
    %572 = arith.mulf %569, %570 : vector<2x128xf32>
    %573 = arith.addf %571, %572 : vector<2x128xf32>
    %574 = math.tanh %573 : vector<2x128xf32>
    %575 = arith.mulf %568, %574 : vector<2x128xf32>
    %cst_249 = arith.constant 0.000000e+00 : f32
    %576 = vector.broadcast %cst_249 : f32 to vector<2x128xf32>
    %577 = arith.select %4, %575, %576 : vector<2x128xi1>, vector<2x128xf32>
    %c32_i32_250 = arith.constant 32 : i32
    %578 = tpu.dynamic_rotate %552 by %c32_i32_250 dim 1 : vector<2x128xf32>, i32 -> vector<2x128xf32>
    %579 = arith.addf %577, %578 : vector<2x128xf32>
    %c0_251 = arith.constant 0 : index
    %c0_252 = arith.constant 0 : index
    %580 = vector.load %arg9[%c0_251, %c0_252] : memref<128x128xf32, #tpu.memory_space<vmem>>, vector<128x128xf32>
    %cst_253 = arith.constant dense<0.000000e+00> : vector<2x128xf32>
    %581 = tpu.matmul %579, %580, %cst_253 {dimension_numbers = #tpu.dot_dimension_numbers<[1], [0], [0], [1], [0, 0, 1, 1], [], []>} : vector<2x128xf32>, vector<128x128xf32>, vector<2x128xf32> -> vector<2x128xf32>
    %582 = arith.addf %581, %10 : vector<2x128xf32>
    %583 = arith.negf %582 : vector<2x128xf32>
    %584 = math.exp %583 : vector<2x128xf32>
    %cst_254 = arith.constant 1.000000e+00 : f32
    %585 = vector.broadcast %cst_254 : f32 to vector<2x128xf32>
    %586 = arith.addf %585, %584 : vector<2x128xf32>
    %587 = arith.divf %585, %586 : vector<2x128xf32>
    %cst_255 = arith.constant 2.000000e+00 : f32
    %588 = vector.broadcast %cst_255 : f32 to vector<2x128xf32>
    %589 = arith.mulf %588, %587 : vector<2x128xf32>
    %cst_256 = arith.constant 1.000000e+00 : f32
    %590 = vector.broadcast %cst_256 : f32 to vector<2x128xf32>
    %591 = arith.subf %589, %590 : vector<2x128xf32>
    %592 = arith.select %2, %591, %587 : vector<2x128xi1>, vector<2x128xf32>
    %c64_i32_257 = arith.constant 64 : i32
    %593 = tpu.dynamic_rotate %592 by %c64_i32_257 dim 1 : vector<2x128xf32>, i32 -> vector<2x128xf32>
    %c96_i32_258 = arith.constant 96 : i32
    %594 = tpu.dynamic_rotate %592 by %c96_i32_258 dim 1 : vector<2x128xf32>, i32 -> vector<2x128xf32>
    %c32_i32_259 = arith.constant 32 : i32
    %595 = tpu.dynamic_rotate %592 by %c32_i32_259 dim 1 : vector<2x128xf32>, i32 -> vector<2x128xf32>
    %596 = arith.mulf %592, %548 : vector<2x128xf32>
    %597 = arith.mulf %594, %595 : vector<2x128xf32>
    %598 = arith.addf %596, %597 : vector<2x128xf32>
    %599 = math.tanh %598 : vector<2x128xf32>
    %600 = arith.mulf %593, %599 : vector<2x128xf32>
    %cst_260 = arith.constant 0.000000e+00 : f32
    %601 = vector.broadcast %cst_260 : f32 to vector<2x128xf32>
    %602 = arith.select %4, %600, %601 : vector<2x128xi1>, vector<2x128xf32>
    %c32_i32_261 = arith.constant 32 : i32
    %603 = tpu.dynamic_rotate %577 by %c32_i32_261 dim 1 : vector<2x128xf32>, i32 -> vector<2x128xf32>
    %604 = arith.addf %602, %603 : vector<2x128xf32>
    %c0_262 = arith.constant 0 : index
    %c0_263 = arith.constant 0 : index
    %605 = vector.load %arg11[%c0_262, %c0_263] : memref<128x128xf32, #tpu.memory_space<vmem>>, vector<128x128xf32>
    %cst_264 = arith.constant dense<0.000000e+00> : vector<2x128xf32>
    %606 = tpu.matmul %604, %605, %cst_264 {dimension_numbers = #tpu.dot_dimension_numbers<[1], [0], [0], [1], [0, 0, 1, 1], [], []>} : vector<2x128xf32>, vector<128x128xf32>, vector<2x128xf32> -> vector<2x128xf32>
    %607 = arith.addf %606, %13 : vector<2x128xf32>
    %608 = arith.negf %607 : vector<2x128xf32>
    %609 = math.exp %608 : vector<2x128xf32>
    %cst_265 = arith.constant 1.000000e+00 : f32
    %610 = vector.broadcast %cst_265 : f32 to vector<2x128xf32>
    %611 = arith.addf %610, %609 : vector<2x128xf32>
    %612 = arith.divf %610, %611 : vector<2x128xf32>
    %cst_266 = arith.constant 2.000000e+00 : f32
    %613 = vector.broadcast %cst_266 : f32 to vector<2x128xf32>
    %614 = arith.mulf %613, %612 : vector<2x128xf32>
    %cst_267 = arith.constant 1.000000e+00 : f32
    %615 = vector.broadcast %cst_267 : f32 to vector<2x128xf32>
    %616 = arith.subf %614, %615 : vector<2x128xf32>
    %617 = arith.select %2, %616, %612 : vector<2x128xi1>, vector<2x128xf32>
    %c64_i32_268 = arith.constant 64 : i32
    %618 = tpu.dynamic_rotate %617 by %c64_i32_268 dim 1 : vector<2x128xf32>, i32 -> vector<2x128xf32>
    %c96_i32_269 = arith.constant 96 : i32
    %619 = tpu.dynamic_rotate %617 by %c96_i32_269 dim 1 : vector<2x128xf32>, i32 -> vector<2x128xf32>
    %c32_i32_270 = arith.constant 32 : i32
    %620 = tpu.dynamic_rotate %617 by %c32_i32_270 dim 1 : vector<2x128xf32>, i32 -> vector<2x128xf32>
    %621 = arith.mulf %617, %573 : vector<2x128xf32>
    %622 = arith.mulf %619, %620 : vector<2x128xf32>
    %623 = arith.addf %621, %622 : vector<2x128xf32>
    %624 = math.tanh %623 : vector<2x128xf32>
    %625 = arith.mulf %618, %624 : vector<2x128xf32>
    %cst_271 = arith.constant 0.000000e+00 : f32
    %626 = vector.broadcast %cst_271 : f32 to vector<2x128xf32>
    %627 = arith.select %4, %625, %626 : vector<2x128xi1>, vector<2x128xf32>
    %628 = vector.shape_cast %477 : vector<2x128xf32> to vector<1x2x128xf32>
    %629 = vector.shape_cast %527 : vector<2x128xf32> to vector<1x2x128xf32>
    %630 = vector.shape_cast %577 : vector<2x128xf32> to vector<1x2x128xf32>
    %631 = vector.shape_cast %627 : vector<2x128xf32> to vector<1x2x128xf32>
    %632 = tpu.concatenate %628, %629, %630, %631 in 0 : vector<1x2x128xf32>, vector<1x2x128xf32>, vector<1x2x128xf32>, vector<1x2x128xf32> -> vector<4x2x128xf32>
    %633 = vector.shape_cast %632 : vector<4x2x128xf32> to vector<8x128xf32>
    %c0_272 = arith.constant 0 : index
    %c0_273 = arith.constant 0 : index
    %634 = vector.load %arg13[%c0_272, %c0_273] : memref<128x128xf32, #tpu.memory_space<vmem>>, vector<128x128xf32>
    %cst_274 = arith.constant dense<0.000000e+00> : vector<8x128xf32>
    %635 = tpu.matmul %633, %634, %cst_274 {dimension_numbers = #tpu.dot_dimension_numbers<[1], [0], [0], [1], [0, 0, 1, 1], [], []>} : vector<8x128xf32>, vector<128x128xf32>, vector<8x128xf32> -> vector<8x128xf32>
    %c0_275 = arith.constant 0 : index
    %c0_276 = arith.constant 0 : index
    %636 = vector.load %arg14[%c0_275, %c0_276] : memref<1x128xf32, #tpu.memory_space<vmem>>, vector<1x128xf32>
    %637 = vector.broadcast %636 : vector<1x128xf32> to vector<8x128xf32>
    %638 = arith.addf %635, %637 : vector<8x128xf32>
    %639 = vector.shape_cast %638 : vector<8x128xf32> to vector<4x2x128xf32>
    %c0_277 = arith.constant 0 : index
    %c0_278 = arith.constant 0 : index
    %c0_279 = arith.constant 0 : index
    %640 = vector.load %arg15[%c0_277, %c0_278, %c0_279] : memref<4x2x128xf32, #tpu.memory_space<vmem>>, vector<4x2x128xf32>
    tpu.vector_store %arg15[%c0_277, %c0_278, %c0_279], %639 {strides = array<i32>} : memref<4x2x128xf32, #tpu.memory_space<vmem>>, vector<4x2x128xf32>,
    return
  }
}

</mosaic_0001>

<llo_original>
// kernel: tpu_custom_call.1
$region0: #{tpu_custom_call.1}
  #allocation0 [shape = 'u32[]', space=smem, size = 0x4, offset = 0x4, fixed_abs, tag = 'smem constant byte address 0x4 - core index']
  #allocation1 [shape = 'u32[144,128]{1,0:T(1,128)}', space=vmem, size = 0x12000, scoped, tag = 'internal scratch']
  %s0 = inlined_call_operand.vmem [shape: f32[2,8,3], index: 0, kind: input, shape index: {}]
  %s1 = inlined_call_operand.vmem [shape: f32[3,128], index: 1, kind: input, shape index: {}]
  %s2 = inlined_call_operand.vmem [shape: f32[1,128], index: 2, kind: input, shape index: {}]
  %s3 = inlined_call_operand.hbm [shape: f32[128,128], index: 3, kind: input, shape index: {}]
  %s4 = inlined_call_operand.hbm [shape: f32[128,128], index: 4, kind: input, shape index: {}]
  %s5 = inlined_call_operand.vmem [shape: f32[1,128], index: 5, kind: input, shape index: {}]
  %s6 = inlined_call_operand.vmem [shape: f32[3,128], index: 6, kind: input, shape index: {}]
  %s7 = inlined_call_operand.vmem [shape: f32[1,128], index: 7, kind: input, shape index: {}]
  %s8 = inlined_call_operand.hbm [shape: f32[128,128], index: 8, kind: input, shape index: {}]
  %s9 = inlined_call_operand.hbm [shape: f32[128,128], index: 9, kind: input, shape index: {}]
  %s10 = inlined_call_operand.vmem [shape: f32[1,128], index: 10, kind: input, shape index: {}]
  %s11 = inlined_call_operand.hbm [shape: f32[128,128], index: 11, kind: input, shape index: {}]
  %s12 = inlined_call_operand.vmem [shape: f32[1,128], index: 12, kind: input, shape index: {}]
  %s13 = inlined_call_operand.hbm [shape: f32[128,128], index: 13, kind: input, shape index: {}]
  %s14 = inlined_call_operand.vmem [shape: f32[1,128], index: 14, kind: input, shape index: {}]
  %s15 = inlined_call_operand.hbm [shape: f32[4,2,128], index: 15, kind: output, shape index: {}]
  %s16 = sld [smem:[#allocation0]]
  $region94: #{tpu_custom_call.1} parent=0
    _
  %s18 = ssub.s32 1, %s16
  %s19 = scalar_select 0, %s18, %s16
  $region1: #{tpu_custom_call.1} parent=0
    #allocation2 [shape = 'u8[65536]{0}', space=vmem, size = 0x10000, scoped, tag = 'input window, operand 3, single buffered']
    #allocation3 [shape = 's32[1]{0}', space=sflag, size = 0x4, scoped, tag = 'scoped memory for tpu_custom_call.1']
    #allocation4 [shape = 's32[1]{0}', space=sflag, size = 0x4, scoped, tag = 'scoped memory for tpu_custom_call.1']
    #allocation5 [shape = 'u8[65536]{0}', space=vmem, size = 0x10000, scoped, tag = 'input window, operand 4, single buffered']
    #allocation6 [shape = 's32[1]{0}', space=sflag, size = 0x4, scoped, tag = 'scoped memory for tpu_custom_call.1']
    #allocation7 [shape = 'u8[65536]{0}', space=vmem, size = 0x10000, scoped, tag = 'input window, operand 8, single buffered']
    #allocation8 [shape = 'u8[65536]{0}', space=vmem, size = 0x10000, scoped, tag = 'input window, operand 9, single buffered']
    #allocation9 [shape = 's32[1]{0}', space=sflag, size = 0x4, scoped, tag = 'scoped memory for tpu_custom_call.1']
    #allocation10 [shape = 'u8[65536]{0}', space=vmem, size = 0x10000, scoped, tag = 'input window, operand 11, single buffered']
    #allocation11 [shape = 'u8[65536]{0}', space=vmem, size = 0x10000, scoped, tag = 'input window, operand 13, single buffered']
    #allocation12 [shape = 's32[1]{0}', space=sflag, size = 0x4, scoped, tag = 'scoped memory for tpu_custom_call.1']
    #allocation13 [shape = 'u8[4096]{0}', space=vmem, size = 0x1000, scoped, tag = 'output window, operand 0, single buffered']
    %20 = vsyncpa [#allocation3], 0
    %21 = vsyncpa [#allocation6], 0
    %22 = vsyncpa [#allocation9], 0
    %23 = vsyncpa [#allocation12], 0
    %24 = vsyncpa [#allocation4], 0
    // Predicated region
    $region2: #{tpu_custom_call.1} parent=1 // pred_check
      _
    $region3: #{tpu_custom_call.1} parent=1 // pred_check_branch
      %26 = sbr.rel (0) target = $region5
    $region4: #{tpu_custom_call.1} parent=1 // pred_region
      _
    $region5: #{tpu_custom_call.1} parent=1 // pred_fallthru
      _
    // Predicated region
    $region6: #{tpu_custom_call.1} parent=1 // pred_check
      _
    $region7: #{tpu_custom_call.1} parent=1 // pred_check_branch
      %28 = sbr.rel (0) target = $region9
    $region8: #{tpu_custom_call.1} parent=1 // pred_region
      _
    $region9: #{tpu_custom_call.1} parent=1 // pred_fallthru
      _
    // Predicated region
    $region10: #{tpu_custom_call.1} parent=1 // pred_check
      _
    $region11: #{tpu_custom_call.1} parent=1 // pred_check_branch
      %30 = sbr.rel (0) target = $region13
    $region12: #{tpu_custom_call.1} parent=1 // pred_region
      _
    $region13: #{tpu_custom_call.1} parent=1 // pred_fallthru
      _
    // Predicated region
    $region14: #{tpu_custom_call.1} parent=1 // pred_check
      _
    $region15: #{tpu_custom_call.1} parent=1 // pred_check_branch
      %32 = sbr.rel (0) target = $region17
    $region16: #{tpu_custom_call.1} parent=1 // pred_region
      %s34 = ssub.s32 2048, 2048
      %35 = vsyncadd [#allocation3], %s34
      %s36 = sshll.u32 [#allocation2], 4
      %s37 = int_to_ptr.vmem [resolvable:$true] %s36
      %42 = dma.hbm_to_vmem [thread:$0]  %s3, 2048, %s37, [#allocation3], 128, 128, 8
    $region17: #{tpu_custom_call.1} parent=1 // pred_fallthru
      _
    // Predicated region
    $region18: #{tpu_custom_call.1} parent=1 // pred_check
      _
    $region19: #{tpu_custom_call.1} parent=1 // pred_check_branch
      %44 = sbr.rel (0) target = $region21
    $region20: #{tpu_custom_call.1} parent=1 // pred_region
      %s46 = ssub.s32 2048, 2048
      %47 = vsyncadd [#allocation6], %s46
      %s48 = sshll.u32 [#allocation5], 4
      %s49 = int_to_ptr.vmem [resolvable:$true] %s48
      %54 = dma.hbm_to_vmem [thread:$0]  %s4, 2048, %s49, [#allocation6], 128, 128, 8
    $region21: #{tpu_custom_call.1} parent=1 // pred_fallthru
      _
    // Predicated region
    $region22: #{tpu_custom_call.1} parent=1 // pred_check
      _
    $region23: #{tpu_custom_call.1} parent=1 // pred_check_branch
      %56 = sbr.rel (0) target = $region25
    $region24: #{tpu_custom_call.1} parent=1 // pred_region
      _
    $region25: #{tpu_custom_call.1} parent=1 // pred_fallthru
      _
    // Predicated region
    $region26: #{tpu_custom_call.1} parent=1 // pred_check
      _
    $region27: #{tpu_custom_call.1} parent=1 // pred_check_branch
      %58 = sbr.rel (0) target = $region29
    $region28: #{tpu_custom_call.1} parent=1 // pred_region
      _
    $region29: #{tpu_custom_call.1} parent=1 // pred_fallthru
      _
    // Predicated region
    $region30: #{tpu_custom_call.1} parent=1 // pred_check
      _
    $region31: #{tpu_custom_call.1} parent=1 // pred_check_branch
      %60 = sbr.rel (0) target = $region33
    $region32: #{tpu_custom_call.1} parent=1 // pred_region
      _
    $region33: #{tpu_custom_call.1} parent=1 // pred_fallthru
      _
    // Predicated region
    $region34: #{tpu_custom_call.1} parent=1 // pred_check
      _
    $region35: #{tpu_custom_call.1} parent=1 // pred_check_branch
      %62 = sbr.rel (0) target = $region37
    $region36: #{tpu_custom_call.1} parent=1 // pred_region
      %s64 = ssub.s32 2048, 2048
      %65 = vsyncadd [#allocation6], %s64
      %s66 = sshll.u32 [#allocation7], 4
      %s67 = int_to_ptr.vmem [resolvable:$true] %s66
      %72 = dma.hbm_to_vmem [thread:$0]  %s8, 2048, %s67, [#allocation6], 128, 128, 8
    $region37: #{tpu_custom_call.1} parent=1 // pred_fallthru
      _
    // Predicated region
    $region38: #{tpu_custom_call.1} parent=1 // pred_check
      _
    $region39: #{tpu_custom_call.1} parent=1 // pred_check_branch
      %74 = sbr.rel (0) target = $region41
    $region40: #{tpu_custom_call.1} parent=1 // pred_region
      %s76 = ssub.s32 2048, 2048
      %77 = vsyncadd [#allocation9], %s76
      %s78 = sshll.u32 [#allocation8], 4
      %s79 = int_to_ptr.vmem [resolvable:$true] %s78
      %84 = dma.hbm_to_vmem [thread:$0]  %s9, 2048, %s79, [#allocation9], 128, 128, 8
    $region41: #{tpu_custom_call.1} parent=1 // pred_fallthru
      _
    // Predicated region
    $region42: #{tpu_custom_call.1} parent=1 // pred_check
      _
    $region43: #{tpu_custom_call.1} parent=1 // pred_check_branch
      %86 = sbr.rel (0) target = $region45
    $region44: #{tpu_custom_call.1} parent=1 // pred_region
      _
    $region45: #{tpu_custom_call.1} parent=1 // pred_fallthru
      _
    // Predicated region
    $region46: #{tpu_custom_call.1} parent=1 // pred_check
      _
    $region47: #{tpu_custom_call.1} parent=1 // pred_check_branch
      %88 = sbr.rel (0) target = $region49
    $region48: #{tpu_custom_call.1} parent=1 // pred_region
      %s90 = ssub.s32 2048, 2048
      %91 = vsyncadd [#allocation9], %s90
      %s92 = sshll.u32 [#allocation10], 4
      %s93 = int_to_ptr.vmem [resolvable:$true] %s92
      %98 = dma.hbm_to_vmem [thread:$0]  %s11, 2048, %s93, [#allocation9], 128, 128, 8
    $region49: #{tpu_custom_call.1} parent=1 // pred_fallthru
      _
    // Predicated region
    $region50: #{tpu_custom_call.1} parent=1 // pred_check
      _
    $region51: #{tpu_custom_call.1} parent=1 // pred_check_branch
      %100 = sbr.rel (0) target = $region53
    $region52: #{tpu_custom_call.1} parent=1 // pred_region
      _
    $region53: #{tpu_custom_call.1} parent=1 // pred_fallthru
      _
    // Predicated region
    $region54: #{tpu_custom_call.1} parent=1 // pred_check
      _
    $region55: #{tpu_custom_call.1} parent=1 // pred_check_branch
      %102 = sbr.rel (0) target = $region57
    $region56: #{tpu_custom_call.1} parent=1 // pred_region
      %s104 = ssub.s32 2048, 2048
      %105 = vsyncadd [#allocation12], %s104
      %s106 = sshll.u32 [#allocation11], 4
      %s107 = int_to_ptr.vmem [resolvable:$true] %s106
      %112 = dma.hbm_to_vmem [thread:$0]  %s13, 2048, %s107, [#allocation12], 128, 128, 8
    $region57: #{tpu_custom_call.1} parent=1 // pred_fallthru
      _
    // Predicated region
    $region58: #{tpu_custom_call.1} parent=1 // pred_check
      _
    $region59: #{tpu_custom_call.1} parent=1 // pred_check_branch
      %114 = sbr.rel (0) target = $region61
    $region60: #{tpu_custom_call.1} parent=1 // pred_region
      _
    $region61: #{tpu_custom_call.1} parent=1 // pred_fallthru
      _
    // Predicated region
    $region62: #{tpu_custom_call.1} parent=1 // pred_check
      _
    $region63: #{tpu_custom_call.1} parent=1 // pred_check_branch
      %116 = sbr.rel (0) target = $region65
    $region64: #{tpu_custom_call.1} parent=1 // pred_region
      %117 = dma.done [#allocation3], 2048
    $region65: #{tpu_custom_call.1} parent=1 // pred_fallthru
      _
    // Predicated region
    $region66: #{tpu_custom_call.1} parent=1 // pred_check
      _
    $region67: #{tpu_custom_call.1} parent=1 // pred_check_branch
      %119 = sbr.rel (0) target = $region69
    $region68: #{tpu_custom_call.1} parent=1 // pred_region
      %120 = dma.done [#allocation6], 2048
    $region69: #{tpu_custom_call.1} parent=1 // pred_fallthru
      _
    // Predicated region
    $region70: #{tpu_custom_call.1} parent=1 // pred_check
      _
    $region71: #{tpu_custom_call.1} parent=1 // pred_check_branch
      %122 = sbr.rel (0) target = $region73
    $region72: #{tpu_custom_call.1} parent=1 // pred_region
      %123 = dma.done [#allocation6], 2048
    $region73: #{tpu_custom_call.1} parent=1 // pred_fallthru
      _
    // Predicated region
    $region74: #{tpu_custom_call.1} parent=1 // pred_check
      _
    $region75: #{tpu_custom_call.1} parent=1 // pred_check_branch
      %125 = sbr.rel (0) target = $region77
    $region76: #{tpu_custom_call.1} parent=1 // pred_region
      %126 = dma.done [#allocation9], 2048
    $region77: #{tpu_custom_call.1} parent=1 // pred_fallthru
      _
    // Predicated region
    $region78: #{tpu_custom_call.1} parent=1 // pred_check
      _
    $region79: #{tpu_custom_call.1} parent=1 // pred_check_branch
      %128 = sbr.rel (0) target = $region81
    $region80: #{tpu_custom_call.1} parent=1 // pred_region
      %129 = dma.done [#allocation9], 2048
    $region81: #{tpu_custom_call.1} parent=1 // pred_fallthru
      _
    // Predicated region
    $region82: #{tpu_custom_call.1} parent=1 // pred_check
      _
    $region83: #{tpu_custom_call.1} parent=1 // pred_check_branch
      %131 = sbr.rel (0) target = $region85
    $region84: #{tpu_custom_call.1} parent=1 // pred_region
      %132 = dma.done [#allocation12], 2048
    $region85: #{tpu_custom_call.1} parent=1 // pred_fallthru
      _
    %v133 = vlaneseq
    %v134 = vand.u32 %v133, 127
    %vm135 = vcmp.ge.s32.totalorder %v134, 96
    %vm136 = vcmp.lt.s32.totalorder %v134, 32
    %v137 = vld [vmem:[%s5] sm:$0x1]
    %v139 = vlaneseq
    %v140 = vshrl.u32 %v139, 7
    %v141 = vsub.s32 0, %v140
    %v142 = vrot.slane %v137, %v141
    %v144 = vld [vmem:[%s10] sm:$0x1]
    %v146 = vlaneseq
    %v147 = vshrl.u32 %v146, 7
    %v148 = vsub.s32 0, %v147
    %v149 = vrot.slane %v144, %v148
    %v151 = vld [vmem:[%s12] sm:$0x1]
    %v153 = vlaneseq
    %v154 = vshrl.u32 %v153, 7
    %v155 = vsub.s32 0, %v154
    %v156 = vrot.slane %v151, %v155
    %v158 = vld [vmem:[%s0] sm:$0xff]
    %v159 = vld [vmem:[%s0 + $0x8] sm:$0xff]
    %v160 = vld [vmem:[%s1] sm:$0x7]
    %v161 = vld [vmem:[%s2] sm:$0x1]
    %v163 = vlaneseq
    %v164 = vshrl.u32 %v163, 7
    %v165 = vsub.s32 0, %v164
    %v166 = vrot.slane %v161, %v165
    %vm168 = vcmask 23552
    %v170 = vsel %vm168, %v158, 0
    %v173 = vsel %vm168, %v159, 0
    %vm175 = vcmask 1042432
    %v177 = vsel %vm175, %v160, 0
    %179 = vmatprep.subr.mxu0 0.0
    %180 = vmatpush1.msra.mxu0 %v177
    %181 = vmatprep.subr.mxu0 0.0
    %182 = vmatpush1.msra.mxu0 0.0
    %183 = vmatprep.subr.mxu0 0.0
    %184 = vmatpush1.msra.mxu0 0.0
    %185 = vmatprep.subr.mxu0 0.0
    %186 = vmatpush1.msra.mxu0 0.0
    %187 = vmatprep.subr.mxu0 0.0
    %188 = vmatpush1.msra.mxu0 0.0
    %189 = vmatprep.subr.mxu0 0.0
    %190 = vmatpush1.msra.mxu0 0.0
    %191 = vmatprep.subr.mxu0 0.0
    %192 = vmatpush1.msra.mxu0 0.0
    %193 = vmatprep.subr.mxu0 0.0
    %194 = vmatpush1.msra.mxu0 0.0
    %195 = vmatprep.subr.mxu0 0.0
    %196 = vmatpush1.msra.mxu0 0.0
    %197 = vmatprep.subr.mxu0 0.0
    %198 = vmatpush1.msra.mxu0 0.0
    %199 = vmatprep.subr.mxu0 0.0
    %200 = vmatpush1.msra.mxu0 0.0
    %201 = vmatprep.subr.mxu0 0.0
    %202 = vmatpush1.msra.mxu0 0.0
    %203 = vmatprep.subr.mxu0 0.0
    %204 = vmatpush1.msra.mxu0 0.0
    %205 = vmatprep.subr.mxu0 0.0
    %206 = vmatpush1.msra.mxu0 0.0
    %207 = vmatprep.subr.mxu0 0.0
    %208 = vmatpush1.msra.mxu0 0.0
    %209 = vmatprep.subr.mxu0 0.0
    %210 = vmatpush1.msra.mxu0 0.0
    %211 = vmatprep.subr.mxu0 0.0
    %212 = vmatpush1.msra.mxu0 0.0
    %213 = vmatprep.subr.mxu0 0.0
    %214 = vmatpush1.msra.mxu0 0.0
    %215 = vmatprep.subr.mxu0 0.0
    %216 = vmatpush1.msra.mxu0 0.0
    %217 = vmatprep.subr.mxu0 0.0
    %218 = vmatpush1.msra.mxu0 0.0
    %219 = vmatprep.subr.mxu0 0.0
    %220 = vmatpush1.msra.mxu0 0.0
    %221 = vmatprep.subr.mxu0 0.0
    %222 = vmatpush1.msra.mxu0 0.0
    %223 = vmatprep.subr.mxu0 0.0
    %224 = vmatpush1.msra.mxu0 0.0
    %225 = vmatprep.subr.mxu0 0.0
    %226 = vmatpush1.msra.mxu0 0.0
    %227 = vmatprep.subr.mxu0 0.0
    %228 = vmatpush1.msra.mxu0 0.0
    %229 = vmatprep.subr.mxu0 0.0
    %230 = vmatpush1.msra.mxu0 0.0
    %231 = vmatprep.subr.mxu0 0.0
    %232 = vmatpush1.msra.mxu0 0.0
    %233 = vmatprep.subr.mxu0 0.0
    %234 = vmatpush1.msra.mxu0 0.0
    %235 = vmatprep.subr.mxu0 0.0
    %236 = vmatpush1.msra.mxu0 0.0
    %237 = vmatprep.subr.mxu0 0.0
    %238 = vmatpush1.msra.mxu0 0.0
    %239 = vmatprep.subr.mxu0 0.0
    %240 = vmatpush1.msra.mxu0 0.0
    %241 = vmatprep.subr.mxu0 0.0
    %242 = vmatpush1.msra.mxu0 0.0
    %243 = vmatprep.mubr.f32.mxu0 0.0
    %244 = vmatmul.mubr.f32.gmra.mrb[0].mxu0 %v170
    %v245 = vpop.f32.mrb[0].mxu0
    %v246 = vadd.f32 %v166, %v245
    %v247 = vpop.f32.mrb[0].mxu0
    %248 = vmatprep.mubr.f32.mxu0 0.0
    %249 = vmatmul.mubr.f32.gmra.mrb[0].mxu0 %v173
    %v250 = vpop.f32.mrb[0].mxu0
    %v251 = vadd.f32 %v166, %v250
    %v252 = vpop.f32.mrb[0].mxu0
    %253 = vdwg.mxu0
    %v254 = vld [vmem:[#allocation2] sm:$0xff]
    %v255 = vld [vmem:[#allocation2 + $0x8] sm:$0xff]
    %v256 = vld [vmem:[#allocation2 + $0x10] sm:$0xff]
    %v257 = vld [vmem:[#allocation2 + $0x18] sm:$0xff]
    %v258 = vld [vmem:[#allocation2 + $0x20] sm:$0xff]
    %v259 = vld [vmem:[#allocation2 + $0x28] sm:$0xff]
    %v260 = vld [vmem:[#allocation2 + $0x30] sm:$0xff]
    %v261 = vld [vmem:[#allocation2 + $0x38] sm:$0xff]
    %v262 = vld [vmem:[#allocation2 + $0x40] sm:$0xff]
    %v263 = vld [vmem:[#allocation2 + $0x48] sm:$0xff]
    %v264 = vld [vmem:[#allocation2 + $0x50] sm:$0xff]
    %v265 = vld [vmem:[#allocation2 + $0x58] sm:$0xff]
    %v266 = vld [vmem:[#allocation2 + $0x60] sm:$0xff]
    %v267 = vld [vmem:[#allocation2 + $0x68] sm:$0xff]
    %v268 = vld [vmem:[#allocation2 + $0x70] sm:$0xff]
    %v269 = vld [vmem:[#allocation2 + $0x78] sm:$0xff]
    %270 = vmatprep.subr.mxu0 0.0
    %271 = vmatpush1.msra.mxu0 %v254
    %272 = vmatprep.subr.mxu0 0.0
    %273 = vmatpush1.msra.mxu0 %v255
    %274 = vmatprep.subr.mxu0 0.0
    %275 = vmatpush1.msra.mxu0 %v256
    %276 = vmatprep.subr.mxu0 0.0
    %277 = vmatpush1.msra.mxu0 %v257
    %278 = vmatprep.subr.mxu0 0.0
    %279 = vmatpush1.msra.mxu0 %v258
    %280 = vmatprep.subr.mxu0 0.0
    %281 = vmatpush1.msra.mxu0 %v259
    %282 = vmatprep.subr.mxu0 0.0
    %283 = vmatpush1.msra.mxu0 %v260
    %284 = vmatprep.subr.mxu0 0.0
    %285 = vmatpush1.msra.mxu0 %v261
    %286 = vmatprep.subr.mxu0 0.0
    %287 = vmatpush1.msra.mxu0 %v262
    %288 = vmatprep.subr.mxu0 0.0
    %289 = vmatpush1.msra.mxu0 %v263
    %290 = vmatprep.subr.mxu0 0.0
    %291 = vmatpush1.msra.mxu0 %v264
    %292 = vmatprep.subr.mxu0 0.0
    %293 = vmatpush1.msra.mxu0 %v265
    %294 = vmatprep.subr.mxu0 0.0
    %295 = vmatpush1.msra.mxu0 %v266
    %296 = vmatprep.subr.mxu0 0.0
    %297 = vmatpush1.msra.mxu0 %v267
    %298 = vmatprep.subr.mxu0 0.0
    %299 = vmatpush1.msra.mxu0 %v268
    %300 = vmatprep.subr.mxu0 0.0
    %301 = vmatpush1.msra.mxu0 %v269
    %302 = vmatprep.subr.mxu0 0.0
    %303 = vmatpush1.msra.mxu0 0.0
    %304 = vmatprep.subr.mxu0 0.0
    %305 = vmatpush1.msra.mxu0 0.0
    %306 = vmatprep.subr.mxu0 0.0
    %307 = vmatpush1.msra.mxu0 0.0
    %308 = vmatprep.subr.mxu0 0.0
    %309 = vmatpush1.msra.mxu0 0.0
    %310 = vmatprep.subr.mxu0 0.0
    %311 = vmatpush1.msra.mxu0 0.0
    %312 = vmatprep.subr.mxu0 0.0
    %313 = vmatpush1.msra.mxu0 0.0
    %314 = vmatprep.subr.mxu0 0.0
    %315 = vmatpush1.msra.mxu0 0.0
    %316 = vmatprep.subr.mxu0 0.0
    %317 = vmatpush1.msra.mxu0 0.0
    %318 = vmatprep.subr.mxu0 0.0
    %319 = vmatpush1.msra.mxu0 0.0
    %320 = vmatprep.subr.mxu0 0.0
    %321 = vmatpush1.msra.mxu0 0.0
    %322 = vmatprep.subr.mxu0 0.0
    %323 = vmatpush1.msra.mxu0 0.0
    %324 = vmatprep.subr.mxu0 0.0
    %325 = vmatpush1.msra.mxu0 0.0
    %326 = vmatprep.subr.mxu0 0.0
    %327 = vmatpush1.msra.mxu0 0.0
    %328 = vmatprep.subr.mxu0 0.0
    %329 = vmatpush1.msra.mxu0 0.0
    %330 = vmatprep.subr.mxu0 0.0
    %331 = vmatpush1.msra.mxu0 0.0
    %332 = vmatprep.subr.mxu0 0.0
    %333 = vmatpush1.msra.mxu0 0.0
    %334 = vmatprep.mubr.f32.mxu0 0.0
    %335 = vmatmul.mubr.f32.gmra.mrb[0].mxu0 0.0
    %v336 = vpop.f32.mrb[0].mxu0
    %v337 = vadd.f32 0.0, %v336
    %v338 = vpop.f32.mrb[0].mxu0
    %339 = vdwg.mxu0
    %v341 = vrot.slane %v337, 1
    %v344 = vadd.f32 %v246, %v337
    %v345 = vadd.f32 %v251, %v341
    %v346 = vxor.u32 %v344, 2147483648
    %v347 = vxor.u32 %v345, 2147483648
    %v348 = vmul.f32 %v346, 1.442695
    %v349 = vpow.pop %v348
    %v350 = vmul.f32 %v347, 1.442695
    %v351 = vpow.pop %v350
    %v352 = vadd.f32 %v349, 1.0
    %v353 = vadd.f32 %v351, 1.0
    %v354 = vrcp.pop %v352
    %v355 = vmul.f32 1.0, %v354
    %v356 = vrcp.pop %v353
    %v357 = vmul.f32 1.0, %v356
    %v358 = vmul.f32 %v355, 2.0
    %v359 = vmul.f32 %v357, 2.0
    %v360 = vsub.f32 %v358, 1.0
    %v361 = vsub.f32 %v359, 1.0
    %v364 = vrot.slane %v361, 7
    %vm365 = vcmask 1041409
    %v366 = vsel %vm365, %v364, %v360
    %v370 = vrot.slane %v357, 7
    %v371 = vsel %vm365, %v370, %v355
    %v373 = vsel %vm135, %v366, %v371
    %374 = vrot.lane.b32.xlu0 %v373, 64
    %v375 = vpop.permute.xlu0 %374
    %376 = vrot.lane.b32.xlu0 %v373, 96
    %v377 = vpop.permute.xlu0 %376
    %378 = vrot.lane.b32.xlu0 %v373, 32
    %v379 = vpop.permute.xlu0 %378
    %v380 = vmul.f32 %v373, 0.0
    %v381 = vmul.f32 %v377, %v379
    %v382 = vadd.f32 %v380, %v381
    %v383 = vtanh.pop %v382
    %v384 = vmul.f32 %v375, %v383
    %v385 = vsel %vm136, %v384, 0.0
    %386 = vrot.lane.b32.xlu0 0.0, 32
    %v387 = vpop.permute.xlu0 %386
    %v388 = vadd.f32 %v385, %v387
    %v389 = vld [vmem:[#allocation5] sm:$0xff]
    %v390 = vld [vmem:[#allocation5 + $0x8] sm:$0xff]
    %v391 = vld [vmem:[#allocation5 + $0x10] sm:$0xff]
    %v392 = vld [vmem:[#allocation5 + $0x18] sm:$0xff]
    %v393 = vld [vmem:[#allocation5 + $0x20] sm:$0xff]
    %v394 = vld [vmem:[#allocation5 + $0x28] sm:$0xff]
    %v395 = vld [vmem:[#allocation5 + $0x30] sm:$0xff]
    %v396 = vld [vmem:[#allocation5 + $0x38] sm:$0xff]
    %v397 = vld [vmem:[#allocation5 + $0x40] sm:$0xff]
    %v398 = vld [vmem:[#allocation5 + $0x48] sm:$0xff]
    %v399 = vld [vmem:[#allocation5 + $0x50] sm:$0xff]
    %v400 = vld [vmem:[#allocation5 + $0x58] sm:$0xff]
    %v401 = vld [vmem:[#allocation5 + $0x60] sm:$0xff]
    %v402 = vld [vmem:[#allocation5 + $0x68] sm:$0xff]
    %v403 = vld [vmem:[#allocation5 + $0x70] sm:$0xff]
    %v404 = vld [vmem:[#allocation5 + $0x78] sm:$0xff]
    %405 = vmatprep.subr.mxu0 0.0
    %406 = vmatpush1.msra.mxu0 %v389
    %407 = vmatprep.subr.mxu0 0.0
    %408 = vmatpush1.msra.mxu0 %v390
    %409 = vmatprep.subr.mxu0 0.0
    %410 = vmatpush1.msra.mxu0 %v391
    %411 = vmatprep.subr.mxu0 0.0
    %412 = vmatpush1.msra.mxu0 %v392
    %413 = vmatprep.subr.mxu0 0.0
    %414 = vmatpush1.msra.mxu0 %v393
    %415 = vmatprep.subr.mxu0 0.0
    %416 = vmatpush1.msra.mxu0 %v394
    %417 = vmatprep.subr.mxu0 0.0
    %418 = vmatpush1.msra.mxu0 %v395
    %419 = vmatprep.subr.mxu0 0.0
    %420 = vmatpush1.msra.mxu0 %v396
    %421 = vmatprep.subr.mxu0 0.0
    %422 = vmatpush1.msra.mxu0 %v397
    %423 = vmatprep.subr.mxu0 0.0
    %424 = vmatpush1.msra.mxu0 %v398
    %425 = vmatprep.subr.mxu0 0.0
    %426 = vmatpush1.msra.mxu0 %v399
    %427 = vmatprep.subr.mxu0 0.0
    %428 = vmatpush1.msra.mxu0 %v400
    %429 = vmatprep.subr.mxu0 0.0
    %430 = vmatpush1.msra.mxu0 %v401
    %431 = vmatprep.subr.mxu0 0.0
    %432 = vmatpush1.msra.mxu0 %v402
    %433 = vmatprep.subr.mxu0 0.0
    %434 = vmatpush1.msra.mxu0 %v403
    %435 = vmatprep.subr.mxu0 0.0
    %436 = vmatpush1.msra.mxu0 %v404
    %437 = vmatprep.subr.mxu0 0.0
    %438 = vmatpush1.msra.mxu0 0.0
    %439 = vmatprep.subr.mxu0 0.0
    %440 = vmatpush1.msra.mxu0 0.0
    %441 = vmatprep.subr.mxu0 0.0
    %442 = vmatpush1.msra.mxu0 0.0
    %443 = vmatprep.subr.mxu0 0.0
    %444 = vmatpush1.msra.mxu0 0.0
    %445 = vmatprep.subr.mxu0 0.0
    %446 = vmatpush1.msra.mxu0 0.0
    %447 = vmatprep.subr.mxu0 0.0
    %448 = vmatpush1.msra.mxu0 0.0
    %449 = vmatprep.subr.mxu0 0.0
    %450 = vmatpush1.msra.mxu0 0.0
    %451 = vmatprep.subr.mxu0 0.0
    %452 = vmatpush1.msra.mxu0 0.0
    %453 = vmatprep.subr.mxu0 0.0
    %454 = vmatpush1.msra.mxu0 0.0
    %455 = vmatprep.subr.mxu0 0.0
    %456 = vmatpush1.msra.mxu0 0.0
    %457 = vmatprep.subr.mxu0 0.0
    %458 = vmatpush1.msra.mxu0 0.0
    %459 = vmatprep.subr.mxu0 0.0
    %460 = vmatpush1.msra.mxu0 0.0
    %461 = vmatprep.subr.mxu0 0.0
    %462 = vmatpush1.msra.mxu0 0.0
    %463 = vmatprep.subr.mxu0 0.0
    %464 = vmatpush1.msra.mxu0 0.0
    %465 = vmatprep.subr.mxu0 0.0
    %466 = vmatpush1.msra.mxu0 0.0
    %467 = vmatprep.subr.mxu0 0.0
    %468 = vmatpush1.msra.mxu0 0.0
    %469 = vmatprep.mubr.f32.mxu0 0.0
    %470 = vmatmul.mubr.f32.gmra.mrb[0].mxu0 %v388
    %v471 = vpop.f32.mrb[0].mxu0
    %v472 = vadd.f32 %v142, %v471
    %v473 = vpop.f32.mrb[0].mxu0
    %474 = vdwg.mxu0
    %v475 = vxor.u32 %v472, 2147483648
    %v476 = vmul.f32 %v475, 1.442695
    %v477 = vpow.pop %v476
    %v478 = vadd.f32 %v477, 1.0
    %v479 = vrcp.pop %v478
    %v480 = vmul.f32 1.0, %v479
    %v481 = vmul.f32 %v480, 2.0
    %v482 = vsub.f32 %v481, 1.0
    %v483 = vsel %vm135, %v482, %v480
    %484 = vrot.lane.b32.xlu0 %v483, 64
    %v485 = vpop.permute.xlu0 %484
    %486 = vrot.lane.b32.xlu0 %v483, 96
    %v487 = vpop.permute.xlu0 %486
    %488 = vrot.lane.b32.xlu0 %v483, 32
    %v489 = vpop.permute.xlu0 %488
    %v490 = vmul.f32 %v483, 0.0
    %v491 = vmul.f32 %v487, %v489
    %v492 = vadd.f32 %v490, %v491
    %v493 = vtanh.pop %v492
    %v494 = vmul.f32 %v485, %v493
    %v495 = vsel %vm136, %v494, 0.0
    %496 = vmatprep.subr.mxu0 0.0
    %497 = vmatpush1.msra.mxu0 %v254
    %498 = vmatprep.subr.mxu0 0.0
    %499 = vmatpush1.msra.mxu0 %v255
    %500 = vmatprep.subr.mxu0 0.0
    %501 = vmatpush1.msra.mxu0 %v256
    %502 = vmatprep.subr.mxu0 0.0
    %503 = vmatpush1.msra.mxu0 %v257
    %504 = vmatprep.subr.mxu0 0.0
    %505 = vmatpush1.msra.mxu0 %v258
    %506 = vmatprep.subr.mxu0 0.0
    %507 = vmatpush1.msra.mxu0 %v259
    %508 = vmatprep.subr.mxu0 0.0
    %509 = vmatpush1.msra.mxu0 %v260
    %510 = vmatprep.subr.mxu0 0.0
    %511 = vmatpush1.msra.mxu0 %v261
    %512 = vmatprep.subr.mxu0 0.0
    %513 = vmatpush1.msra.mxu0 %v262
    %514 = vmatprep.subr.mxu0 0.0
    %515 = vmatpush1.msra.mxu0 %v263
    %516 = vmatprep.subr.mxu0 0.0
    %517 = vmatpush1.msra.mxu0 %v264
    %518 = vmatprep.subr.mxu0 0.0
    %519 = vmatpush1.msra.mxu0 %v265
    %520 = vmatprep.subr.mxu0 0.0
    %521 = vmatpush1.msra.mxu0 %v266
    %522 = vmatprep.subr.mxu0 0.0
    %523 = vmatpush1.msra.mxu0 %v267
    %524 = vmatprep.subr.mxu0 0.0
    %525 = vmatpush1.msra.mxu0 %v268
    %526 = vmatprep.subr.mxu0 0.0
    %527 = vmatpush1.msra.mxu0 %v269
    %528 = vmatprep.subr.mxu0 0.0
    %529 = vmatpush1.msra.mxu0 0.0
    %530 = vmatprep.subr.mxu0 0.0
    %531 = vmatpush1.msra.mxu0 0.0
    %532 = vmatprep.subr.mxu0 0.0
    %533 = vmatpush1.msra.mxu0 0.0
    %534 = vmatprep.subr.mxu0 0.0
    %535 = vmatpush1.msra.mxu0 0.0
    %536 = vmatprep.subr.mxu0 0.0
    %537 = vmatpush1.msra.mxu0 0.0
    %538 = vmatprep.subr.mxu0 0.0
    %539 = vmatpush1.msra.mxu0 0.0
    %540 = vmatprep.subr.mxu0 0.0
    %541 = vmatpush1.msra.mxu0 0.0
    %542 = vmatprep.subr.mxu0 0.0
    %543 = vmatpush1.msra.mxu0 0.0
    %544 = vmatprep.subr.mxu0 0.0
    %545 = vmatpush1.msra.mxu0 0.0
    %546 = vmatprep.subr.mxu0 0.0
    %547 = vmatpush1.msra.mxu0 0.0
    %548 = vmatprep.subr.mxu0 0.0
    %549 = vmatpush1.msra.mxu0 0.0
    %550 = vmatprep.subr.mxu0 0.0
    %551 = vmatpush1.msra.mxu0 0.0
    %552 = vmatprep.subr.mxu0 0.0
    %553 = vmatpush1.msra.mxu0 0.0
    %554 = vmatprep.subr.mxu0 0.0
    %555 = vmatpush1.msra.mxu0 0.0
    %556 = vmatprep.subr.mxu0 0.0
    %557 = vmatpush1.msra.mxu0 0.0
    %558 = vmatprep.subr.mxu0 0.0
    %559 = vmatpush1.msra.mxu0 0.0
    %560 = vmatprep.mubr.f32.mxu0 0.0
    %561 = vmatmul.mubr.f32.gmra.mrb[0].mxu0 %v385
    %v562 = vpop.f32.mrb[0].mxu0
    %v563 = vadd.f32 0.0, %v562
    %v564 = vpop.f32.mrb[0].mxu0
    %565 = vdwg.mxu0
    %v567 = vrot.slane %v563, 7
    %v570 = vadd.f32 %v246, %v567
    %v571 = vadd.f32 %v251, %v563
    %v572 = vxor.u32 %v570, 2147483648
    %v573 = vxor.u32 %v571, 2147483648
    %v574 = vmul.f32 %v572, 1.442695
    %v575 = vpow.pop %v574
    %v576 = vmul.f32 %v573, 1.442695
    %v577 = vpow.pop %v576
    %v578 = vadd.f32 %v575, 1.0
    %v579 = vadd.f32 %v577, 1.0
    %v580 = vrcp.pop %v578
    %v581 = vmul.f32 1.0, %v580
    %v582 = vrcp.pop %v579
    %v583 = vmul.f32 1.0, %v582
    %v584 = vmul.f32 %v581, 2.0
    %v585 = vmul.f32 %v583, 2.0
    %v586 = vsub.f32 %v584, 1.0
    %v587 = vsub.f32 %v585, 1.0
    %v590 = vrot.slane %v586, 1
    %v591 = vsel %vm365, %v587, %v590
    %v595 = vrot.slane %v581, 1
    %v596 = vsel %vm365, %v583, %v595
    %v598 = vsel %vm135, %v591, %v596
    %599 = vrot.lane.b32.xlu0 %v598, 64
    %v600 = vpop.permute.xlu0 %599
    %601 = vrot.lane.b32.xlu0 %v598, 96
    %v602 = vpop.permute.xlu0 %601
    %603 = vrot.lane.b32.xlu0 %v598, 32
    %v604 = vpop.permute.xlu0 %603
    %v605 = vmul.f32 %v598, %v382
    %v606 = vmul.f32 %v602, %v604
    %v607 = vadd.f32 %v605, %v606
    %v608 = vtanh.pop %v607
    %v609 = vmul.f32 %v600, %v608
    %v610 = vsel %vm136, %v609, 0.0
    %611 = vrot.lane.b32.xlu0 %v495, 32
    %v612 = vpop.permute.xlu0 %611
    %v613 = vadd.f32 %v610, %v612
    %614 = vmatprep.subr.mxu0 0.0
    %615 = vmatpush1.msra.mxu0 %v389
    %616 = vmatprep.subr.mxu0 0.0
    %617 = vmatpush1.msra.mxu0 %v390
    %618 = vmatprep.subr.mxu0 0.0
    %619 = vmatpush1.msra.mxu0 %v391
    %620 = vmatprep.subr.mxu0 0.0
    %621 = vmatpush1.msra.mxu0 %v392
    %622 = vmatprep.subr.mxu0 0.0
    %623 = vmatpush1.msra.mxu0 %v393
    %624 = vmatprep.subr.mxu0 0.0
    %625 = vmatpush1.msra.mxu0 %v394
    %626 = vmatprep.subr.mxu0 0.0
    %627 = vmatpush1.msra.mxu0 %v395
    %628 = vmatprep.subr.mxu0 0.0
    %629 = vmatpush1.msra.mxu0 %v396
    %630 = vmatprep.subr.mxu0 0.0
    %631 = vmatpush1.msra.mxu0 %v397
    %632 = vmatprep.subr.mxu0 0.0
    %633 = vmatpush1.msra.mxu0 %v398
    %634 = vmatprep.subr.mxu0 0.0
    %635 = vmatpush1.msra.mxu0 %v399
    %636 = vmatprep.subr.mxu0 0.0
    %637 = vmatpush1.msra.mxu0 %v400
    %638 = vmatprep.subr.mxu0 0.0
    %639 = vmatpush1.msra.mxu0 %v401
    %640 = vmatprep.subr.mxu0 0.0
    %641 = vmatpush1.msra.mxu0 %v402
    %642 = vmatprep.subr.mxu0 0.0
    %643 = vmatpush1.msra.mxu0 %v403
    %644 = vmatprep.subr.mxu0 0.0
    %645 = vmatpush1.msra.mxu0 %v404
    %646 = vmatprep.subr.mxu0 0.0
    %647 = vmatpush1.msra.mxu0 0.0
    %648 = vmatprep.subr.mxu0 0.0
    %649 = vmatpush1.msra.mxu0 0.0
    %650 = vmatprep.subr.mxu0 0.0
    %651 = vmatpush1.msra.mxu0 0.0
    %652 = vmatprep.subr.mxu0 0.0
    %653 = vmatpush1.msra.mxu0 0.0
    %654 = vmatprep.subr.mxu0 0.0
    %655 = vmatpush1.msra.mxu0 0.0
    %656 = vmatprep.subr.mxu0 0.0
    %657 = vmatpush1.msra.mxu0 0.0
    %658 = vmatprep.subr.mxu0 0.0
    %659 = vmatpush1.msra.mxu0 0.0
    %660 = vmatprep.subr.mxu0 0.0
    %661 = vmatpush1.msra.mxu0 0.0
    %662 = vmatprep.subr.mxu0 0.0
    %663 = vmatpush1.msra.mxu0 0.0
    %664 = vmatprep.subr.mxu0 0.0
    %665 = vmatpush1.msra.mxu0 0.0
    %666 = vmatprep.subr.mxu0 0.0
    %667 = vmatpush1.msra.mxu0 0.0
    %668 = vmatprep.subr.mxu0 0.0
    %669 = vmatpush1.msra.mxu0 0.0
    %670 = vmatprep.subr.mxu0 0.0
    %671 = vmatpush1.msra.mxu0 0.0
    %672 = vmatprep.subr.mxu0 0.0
    %673 = vmatpush1.msra.mxu0 0.0
    %674 = vmatprep.subr.mxu0 0.0
    %675 = vmatpush1.msra.mxu0 0.0
    %676 = vmatprep.subr.mxu0 0.0
    %677 = vmatpush1.msra.mxu0 0.0
    %678 = vmatprep.mubr.f32.mxu0 0.0
    %679 = vmatmul.mubr.f32.gmra.mrb[0].mxu0 %v613
    %v680 = vpop.f32.mrb[0].mxu0
    %v681 = vadd.f32 %v142, %v680
    %v682 = vpop.f32.mrb[0].mxu0
    %683 = vdwg.mxu0
    %v684 = vxor.u32 %v681, 2147483648
    %v685 = vmul.f32 %v684, 1.442695
    %v686 = vpow.pop %v685
    %v687 = vadd.f32 %v686, 1.0
    %v688 = vrcp.pop %v687
    %v689 = vmul.f32 1.0, %v688
    %v690 = vmul.f32 %v689, 2.0
    %v691 = vsub.f32 %v690, 1.0
    %v692 = vsel %vm135, %v691, %v689
    %693 = vrot.lane.b32.xlu0 %v692, 64
    %v694 = vpop.permute.xlu0 %693
    %695 = vrot.lane.b32.xlu0 %v692, 96
    %v696 = vpop.permute.xlu0 %695
    %697 = vrot.lane.b32.xlu0 %v692, 32
    %v698 = vpop.permute.xlu0 %697
    %v699 = vmul.f32 %v692, %v492
    %v700 = vmul.f32 %v696, %v698
    %v701 = vadd.f32 %v699, %v700
    %v702 = vtanh.pop %v701
    %v703 = vmul.f32 %v694, %v702
    %v704 = vsel %vm136, %v703, 0.0
    %705 = vmatprep.subr.mxu0 0.0
    %706 = vmatpush1.msra.mxu0 %v254
    %707 = vmatprep.subr.mxu0 0.0
    %708 = vmatpush1.msra.mxu0 %v255
    %709 = vmatprep.subr.mxu0 0.0
    %710 = vmatpush1.msra.mxu0 %v256
    %711 = vmatprep.subr.mxu0 0.0
    %712 = vmatpush1.msra.mxu0 %v257
    %713 = vmatprep.subr.mxu0 0.0
    %714 = vmatpush1.msra.mxu0 %v258
    %715 = vmatprep.subr.mxu0 0.0
    %716 = vmatpush1.msra.mxu0 %v259
    %717 = vmatprep.subr.mxu0 0.0
    %718 = vmatpush1.msra.mxu0 %v260
    %719 = vmatprep.subr.mxu0 0.0
    %720 = vmatpush1.msra.mxu0 %v261
    %721 = vmatprep.subr.mxu0 0.0
    %722 = vmatpush1.msra.mxu0 %v262
    %723 = vmatprep.subr.mxu0 0.0
    %724 = vmatpush1.msra.mxu0 %v263
    %725 = vmatprep.subr.mxu0 0.0
    %726 = vmatpush1.msra.mxu0 %v264
    %727 = vmatprep.subr.mxu0 0.0
    %728 = vmatpush1.msra.mxu0 %v265
    %729 = vmatprep.subr.mxu0 0.0
    %730 = vmatpush1.msra.mxu0 %v266
    %731 = vmatprep.subr.mxu0 0.0
    %732 = vmatpush1.msra.mxu0 %v267
    %733 = vmatprep.subr.mxu0 0.0
    %734 = vmatpush1.msra.mxu0 %v268
    %735 = vmatprep.subr.mxu0 0.0
    %736 = vmatpush1.msra.mxu0 %v269
    %737 = vmatprep.subr.mxu0 0.0
    %738 = vmatpush1.msra.mxu0 0.0
    %739 = vmatprep.subr.mxu0 0.0
    %740 = vmatpush1.msra.mxu0 0.0
    %741 = vmatprep.subr.mxu0 0.0
    %742 = vmatpush1.msra.mxu0 0.0
    %743 = vmatprep.subr.mxu0 0.0
    %744 = vmatpush1.msra.mxu0 0.0
    %745 = vmatprep.subr.mxu0 0.0
    %746 = vmatpush1.msra.mxu0 0.0
    %747 = vmatprep.subr.mxu0 0.0
    %748 = vmatpush1.msra.mxu0 0.0
    %749 = vmatprep.subr.mxu0 0.0
    %750 = vmatpush1.msra.mxu0 0.0
    %751 = vmatprep.subr.mxu0 0.0
    %752 = vmatpush1.msra.mxu0 0.0
    %753 = vmatprep.subr.mxu0 0.0
    %754 = vmatpush1.msra.mxu0 0.0
    %755 = vmatprep.subr.mxu0 0.0
    %756 = vmatpush1.msra.mxu0 0.0
    %757 = vmatprep.subr.mxu0 0.0
    %758 = vmatpush1.msra.mxu0 0.0
    %759 = vmatprep.subr.mxu0 0.0
    %760 = vmatpush1.msra.mxu0 0.0
    %761 = vmatprep.subr.mxu0 0.0
    %762 = vmatpush1.msra.mxu0 0.0
    %763 = vmatprep.subr.mxu0 0.0
    %764 = vmatpush1.msra.mxu0 0.0
    %765 = vmatprep.subr.mxu0 0.0
    %766 = vmatpush1.msra.mxu0 0.0
    %767 = vmatprep.subr.mxu0 0.0
    %768 = vmatpush1.msra.mxu0 0.0
    %769 = vmatprep.mubr.f32.mxu0 0.0
    %770 = vmatmul.mubr.f32.gmra.mrb[0].mxu0 %v610
    %v771 = vpop.f32.mrb[0].mxu0
    %v772 = vadd.f32 0.0, %v771
    %v773 = vpop.f32.mrb[0].mxu0
    %774 = vdwg.mxu0
    %v776 = vrot.slane %v772, 6
    %v777 = vrot.slane %v772, 7
    %v780 = vadd.f32 %v246, %v776
    %v781 = vadd.f32 %v251, %v777
    %v782 = vxor.u32 %v780, 2147483648
    %v783 = vxor.u32 %v781, 2147483648
    %v784 = vmul.f32 %v782, 1.442695
    %v785 = vpow.pop %v784
    %v786 = vmul.f32 %v783, 1.442695
    %v787 = vpow.pop %v786
    %v788 = vadd.f32 %v785, 1.0
    %v789 = vadd.f32 %v787, 1.0
    %v790 = vrcp.pop %v788
    %v791 = vmul.f32 1.0, %v790
    %v792 = vrcp.pop %v789
    %v793 = vmul.f32 1.0, %v792
    %v794 = vmul.f32 %v791, 2.0
    %v795 = vmul.f32 %v793, 2.0
    %v796 = vsub.f32 %v794, 1.0
    %v797 = vsub.f32 %v795, 1.0
    %v800 = vrot.slane %v796, 2
    %v801 = vrot.slane %v797, 1
    %v802 = vsel %vm365, %v801, %v800
    %v806 = vrot.slane %v791, 2
    %v807 = vrot.slane %v793, 1
    %v808 = vsel %vm365, %v807, %v806
    %v810 = vsel %vm135, %v802, %v808
    %811 = vrot.lane.b32.xlu0 %v810, 64
    %v812 = vpop.permute.xlu0 %811
    %813 = vrot.lane.b32.xlu0 %v810, 96
    %v814 = vpop.permute.xlu0 %813
    %815 = vrot.lane.b32.xlu0 %v810, 32
    %v816 = vpop.permute.xlu0 %815
    %v817 = vmul.f32 %v810, %v607
    %v818 = vmul.f32 %v814, %v816
    %v819 = vadd.f32 %v817, %v818
    %v820 = vtanh.pop %v819
    %v821 = vmul.f32 %v812, %v820
    %v822 = vsel %vm136, %v821, 0.0
    %823 = vrot.lane.b32.xlu0 %v704, 32
    %v824 = vpop.permute.xlu0 %823
    %v825 = vadd.f32 %v822, %v824
    %826 = vmatprep.subr.mxu0 0.0
    %827 = vmatpush1.msra.mxu0 %v389
    %828 = vmatprep.subr.mxu0 0.0
    %829 = vmatpush1.msra.mxu0 %v390
    %830 = vmatprep.subr.mxu0 0.0
    %831 = vmatpush1.msra.mxu0 %v391
    %832 = vmatprep.subr.mxu0 0.0
    %833 = vmatpush1.msra.mxu0 %v392
    %834 = vmatprep.subr.mxu0 0.0
    %835 = vmatpush1.msra.mxu0 %v393
    %836 = vmatprep.subr.mxu0 0.0
    %837 = vmatpush1.msra.mxu0 %v394
    %838 = vmatprep.subr.mxu0 0.0
    %839 = vmatpush1.msra.mxu0 %v395
    %840 = vmatprep.subr.mxu0 0.0
    %841 = vmatpush1.msra.mxu0 %v396
    %842 = vmatprep.subr.mxu0 0.0
    %843 = vmatpush1.msra.mxu0 %v397
    %844 = vmatprep.subr.mxu0 0.0
    %845 = vmatpush1.msra.mxu0 %v398
    %846 = vmatprep.subr.mxu0 0.0
    %847 = vmatpush1.msra.mxu0 %v399
    %848 = vmatprep.subr.mxu0 0.0
    %849 = vmatpush1.msra.mxu0 %v400
    %850 = vmatprep.subr.mxu0 0.0
    %851 = vmatpush1.msra.mxu0 %v401
    %852 = vmatprep.subr.mxu0 0.0
    %853 = vmatpush1.msra.mxu0 %v402
    %854 = vmatprep.subr.mxu0 0.0
    %855 = vmatpush1.msra.mxu0 %v403
    %856 = vmatprep.subr.mxu0 0.0
    %857 = vmatpush1.msra.mxu0 %v404
    %858 = vmatprep.subr.mxu0 0.0
    %859 = vmatpush1.msra.mxu0 0.0
    %860 = vmatprep.subr.mxu0 0.0
    %861 = vmatpush1.msra.mxu0 0.0
    %862 = vmatprep.subr.mxu0 0.0
    %863 = vmatpush1.msra.mxu0 0.0
    %864 = vmatprep.subr.mxu0 0.0
    %865 = vmatpush1.msra.mxu0 0.0
    %866 = vmatprep.subr.mxu0 0.0
    %867 = vmatpush1.msra.mxu0 0.0
    %868 = vmatprep.subr.mxu0 0.0
    %869 = vmatpush1.msra.mxu0 0.0
    %870 = vmatprep.subr.mxu0 0.0
    %871 = vmatpush1.msra.mxu0 0.0
    %872 = vmatprep.subr.mxu0 0.0
    %873 = vmatpush1.msra.mxu0 0.0
    %874 = vmatprep.subr.mxu0 0.0
    %875 = vmatpush1.msra.mxu0 0.0
    %876 = vmatprep.subr.mxu0 0.0
    %877 = vmatpush1.msra.mxu0 0.0
    %878 = vmatprep.subr.mxu0 0.0
    %879 = vmatpush1.msra.mxu0 0.0
    %880 = vmatprep.subr.mxu0 0.0
    %881 = vmatpush1.msra.mxu0 0.0
    %882 = vmatprep.subr.mxu0 0.0
    %883 = vmatpush1.msra.mxu0 0.0
    %884 = vmatprep.subr.mxu0 0.0
    %885 = vmatpush1.msra.mxu0 0.0
    %886 = vmatprep.subr.mxu0 0.0
    %887 = vmatpush1.msra.mxu0 0.0
    %888 = vmatprep.subr.mxu0 0.0
    %889 = vmatpush1.msra.mxu0 0.0
    %890 = vmatprep.mubr.f32.mxu0 0.0
    %891 = vmatmul.mubr.f32.gmra.mrb[0].mxu0 %v825
    %v892 = vpop.f32.mrb[0].mxu0
    %v893 = vadd.f32 %v142, %v892
    %v894 = vpop.f32.mrb[0].mxu0
    %895 = vdwg.mxu0
    %v896 = vxor.u32 %v893, 2147483648
    %v897 = vmul.f32 %v896, 1.442695
    %v898 = vpow.pop %v897
    %v899 = vadd.f32 %v898, 1.0
    %v900 = vrcp.pop %v899
    %v901 = vmul.f32 1.0, %v900
    %v902 = vmul.f32 %v901, 2.0
    %v903 = vsub.f32 %v902, 1.0
    %v904 = vsel %vm135, %v903, %v901
    %905 = vrot.lane.b32.xlu0 %v904, 64
    %v906 = vpop.permute.xlu0 %905
    %907 = vrot.lane.b32.xlu0 %v904, 96
    %v908 = vpop.permute.xlu0 %907
    %909 = vrot.lane.b32.xlu0 %v904, 32
    %v910 = vpop.permute.xlu0 %909
    %v911 = vmul.f32 %v904, %v701
    %v912 = vmul.f32 %v908, %v910
    %v913 = vadd.f32 %v911, %v912
    %v914 = vtanh.pop %v913
    %v915 = vmul.f32 %v906, %v914
    %v916 = vsel %vm136, %v915, 0.0
    %917 = vmatprep.subr.mxu0 0.0
    %918 = vmatpush1.msra.mxu0 %v254
    %919 = vmatprep.subr.mxu0 0.0
    %920 = vmatpush1.msra.mxu0 %v255
    %921 = vmatprep.subr.mxu0 0.0
    %922 = vmatpush1.msra.mxu0 %v256
    %923 = vmatprep.subr.mxu0 0.0
    %924 = vmatpush1.msra.mxu0 %v257
    %925 = vmatprep.subr.mxu0 0.0
    %926 = vmatpush1.msra.mxu0 %v258
    %927 = vmatprep.subr.mxu0 0.0
    %928 = vmatpush1.msra.mxu0 %v259
    %929 = vmatprep.subr.mxu0 0.0
    %930 = vmatpush1.msra.mxu0 %v260
    %931 = vmatprep.subr.mxu0 0.0
    %932 = vmatpush1.msra.mxu0 %v261
    %933 = vmatprep.subr.mxu0 0.0
    %934 = vmatpush1.msra.mxu0 %v262
    %935 = vmatprep.subr.mxu0 0.0
    %936 = vmatpush1.msra.mxu0 %v263
    %937 = vmatprep.subr.mxu0 0.0
    %938 = vmatpush1.msra.mxu0 %v264
    %939 = vmatprep.subr.mxu0 0.0
    %940 = vmatpush1.msra.mxu0 %v265
    %941 = vmatprep.subr.mxu0 0.0
    %942 = vmatpush1.msra.mxu0 %v266
    %943 = vmatprep.subr.mxu0 0.0
    %944 = vmatpush1.msra.mxu0 %v267
    %945 = vmatprep.subr.mxu0 0.0
    %946 = vmatpush1.msra.mxu0 %v268
    %947 = vmatprep.subr.mxu0 0.0
    %948 = vmatpush1.msra.mxu0 %v269
    %949 = vmatprep.subr.mxu0 0.0
    %950 = vmatpush1.msra.mxu0 0.0
    %951 = vmatprep.subr.mxu0 0.0
    %952 = vmatpush1.msra.mxu0 0.0
    %953 = vmatprep.subr.mxu0 0.0
    %954 = vmatpush1.msra.mxu0 0.0
    %955 = vmatprep.subr.mxu0 0.0
    %956 = vmatpush1.msra.mxu0 0.0
    %957 = vmatprep.subr.mxu0 0.0
    %958 = vmatpush1.msra.mxu0 0.0
    %959 = vmatprep.subr.mxu0 0.0
    %960 = vmatpush1.msra.mxu0 0.0
    %961 = vmatprep.subr.mxu0 0.0
    %962 = vmatpush1.msra.mxu0 0.0
    %963 = vmatprep.subr.mxu0 0.0
    %964 = vmatpush1.msra.mxu0 0.0
    %965 = vmatprep.subr.mxu0 0.0
    %966 = vmatpush1.msra.mxu0 0.0
    %967 = vmatprep.subr.mxu0 0.0
    %968 = vmatpush1.msra.mxu0 0.0
    %969 = vmatprep.subr.mxu0 0.0
    %970 = vmatpush1.msra.mxu0 0.0
    %971 = vmatprep.subr.mxu0 0.0
    %972 = vmatpush1.msra.mxu0 0.0
    %973 = vmatprep.subr.mxu0 0.0
    %974 = vmatpush1.msra.mxu0 0.0
    %975 = vmatprep.subr.mxu0 0.0
    %976 = vmatpush1.msra.mxu0 0.0
    %977 = vmatprep.subr.mxu0 0.0
    %978 = vmatpush1.msra.mxu0 0.0
    %979 = vmatprep.subr.mxu0 0.0
    %980 = vmatpush1.msra.mxu0 0.0
    %981 = vmatprep.mubr.f32.mxu0 0.0
    %982 = vmatmul.mubr.f32.gmra.mrb[0].mxu0 %v822
    %v983 = vpop.f32.mrb[0].mxu0
    %v984 = vadd.f32 0.0, %v983
    %v985 = vpop.f32.mrb[0].mxu0
    %986 = vdwg.mxu0
    %v988 = vrot.slane %v984, 5
    %v989 = vrot.slane %v984, 6
    %v992 = vadd.f32 %v246, %v988
    %v993 = vadd.f32 %v251, %v989
    %v994 = vxor.u32 %v992, 2147483648
    %v995 = vxor.u32 %v993, 2147483648
    %v996 = vmul.f32 %v994, 1.442695
    %v997 = vpow.pop %v996
    %v998 = vmul.f32 %v995, 1.442695
    %v999 = vpow.pop %v998
    %v1000 = vadd.f32 %v997, 1.0
    %v1001 = vadd.f32 %v999, 1.0
    %v1002 = vrcp.pop %v1000
    %v1003 = vmul.f32 1.0, %v1002
    %v1004 = vrcp.pop %v1001
    %v1005 = vmul.f32 1.0, %v1004
    %v1006 = vmul.f32 %v1003, 2.0
    %v1007 = vmul.f32 %v1005, 2.0
    %v1008 = vsub.f32 %v1006, 1.0
    %v1009 = vsub.f32 %v1007, 1.0
    %v1012 = vrot.slane %v1008, 3
    %v1013 = vrot.slane %v1009, 2
    %v1014 = vsel %vm365, %v1013, %v1012
    %v1018 = vrot.slane %v1003, 3
    %v1019 = vrot.slane %v1005, 2
    %v1020 = vsel %vm365, %v1019, %v1018
    %v1022 = vsel %vm135, %v1014, %v1020
    %1023 = vrot.lane.b32.xlu0 %v1022, 64
    %v1024 = vpop.permute.xlu0 %1023
    %1025 = vrot.lane.b32.xlu0 %v1022, 96
    %v1026 = vpop.permute.xlu0 %1025
    %1027 = vrot.lane.b32.xlu0 %v1022, 32
    %v1028 = vpop.permute.xlu0 %1027
    %v1029 = vmul.f32 %v1022, %v819
    %v1030 = vmul.f32 %v1026, %v1028
    %v1031 = vadd.f32 %v1029, %v1030
    %v1032 = vtanh.pop %v1031
    %v1033 = vmul.f32 %v1024, %v1032
    %v1034 = vsel %vm136, %v1033, 0.0
    %1035 = vrot.lane.b32.xlu0 %v916, 32
    %v1036 = vpop.permute.xlu0 %1035
    %v1037 = vadd.f32 %v1034, %v1036
    %1038 = vmatprep.subr.mxu0 0.0
    %1039 = vmatpush1.msra.mxu0 %v389
    %1040 = vmatprep.subr.mxu0 0.0
    %1041 = vmatpush1.msra.mxu0 %v390
    %1042 = vmatprep.subr.mxu0 0.0
    %1043 = vmatpush1.msra.mxu0 %v391
    %1044 = vmatprep.subr.mxu0 0.0
    %1045 = vmatpush1.msra.mxu0 %v392
    %1046 = vmatprep.subr.mxu0 0.0
    %1047 = vmatpush1.msra.mxu0 %v393
    %1048 = vmatprep.subr.mxu0 0.0
    %1049 = vmatpush1.msra.mxu0 %v394
    %1050 = vmatprep.subr.mxu0 0.0
    %1051 = vmatpush1.msra.mxu0 %v395
    %1052 = vmatprep.subr.mxu0 0.0
    %1053 = vmatpush1.msra.mxu0 %v396
    %1054 = vmatprep.subr.mxu0 0.0
    %1055 = vmatpush1.msra.mxu0 %v397
    %1056 = vmatprep.subr.mxu0 0.0
    %1057 = vmatpush1.msra.mxu0 %v398
    %1058 = vmatprep.subr.mxu0 0.0
    %1059 = vmatpush1.msra.mxu0 %v399
    %1060 = vmatprep.subr.mxu0 0.0
    %1061 = vmatpush1.msra.mxu0 %v400
    %1062 = vmatprep.subr.mxu0 0.0
    %1063 = vmatpush1.msra.mxu0 %v401
    %1064 = vmatprep.subr.mxu0 0.0
    %1065 = vmatpush1.msra.mxu0 %v402
    %1066 = vmatprep.subr.mxu0 0.0
    %1067 = vmatpush1.msra.mxu0 %v403
    %1068 = vmatprep.subr.mxu0 0.0
    %1069 = vmatpush1.msra.mxu0 %v404
    %1070 = vmatprep.subr.mxu0 0.0
    %1071 = vmatpush1.msra.mxu0 0.0
    %1072 = vmatprep.subr.mxu0 0.0
    %1073 = vmatpush1.msra.mxu0 0.0
    %1074 = vmatprep.subr.mxu0 0.0
    %1075 = vmatpush1.msra.mxu0 0.0
    %1076 = vmatprep.subr.mxu0 0.0
    %1077 = vmatpush1.msra.mxu0 0.0
    %1078 = vmatprep.subr.mxu0 0.0
    %1079 = vmatpush1.msra.mxu0 0.0
    %1080 = vmatprep.subr.mxu0 0.0
    %1081 = vmatpush1.msra.mxu0 0.0
    %1082 = vmatprep.subr.mxu0 0.0
    %1083 = vmatpush1.msra.mxu0 0.0
    %1084 = vmatprep.subr.mxu0 0.0
    %1085 = vmatpush1.msra.mxu0 0.0
    %1086 = vmatprep.subr.mxu0 0.0
    %1087 = vmatpush1.msra.mxu0 0.0
    %1088 = vmatprep.subr.mxu0 0.0
    %1089 = vmatpush1.msra.mxu0 0.0
    %1090 = vmatprep.subr.mxu0 0.0
    %1091 = vmatpush1.msra.mxu0 0.0
    %1092 = vmatprep.subr.mxu0 0.0
    %1093 = vmatpush1.msra.mxu0 0.0
    %1094 = vmatprep.subr.mxu0 0.0
    %1095 = vmatpush1.msra.mxu0 0.0
    %1096 = vmatprep.subr.mxu0 0.0
    %1097 = vmatpush1.msra.mxu0 0.0
    %1098 = vmatprep.subr.mxu0 0.0
    %1099 = vmatpush1.msra.mxu0 0.0
    %1100 = vmatprep.subr.mxu0 0.0
    %1101 = vmatpush1.msra.mxu0 0.0
    %1102 = vmatprep.mubr.f32.mxu0 0.0
    %1103 = vmatmul.mubr.f32.gmra.mrb[0].mxu0 %v1037
    %v1104 = vpop.f32.mrb[0].mxu0
    %v1105 = vadd.f32 %v142, %v1104
    %v1106 = vpop.f32.mrb[0].mxu0
    %1107 = vdwg.mxu0
    %v1108 = vxor.u32 %v1105, 2147483648
    %v1109 = vmul.f32 %v1108, 1.442695
    %v1110 = vpow.pop %v1109
    %v1111 = vadd.f32 %v1110, 1.0
    %v1112 = vrcp.pop %v1111
    %v1113 = vmul.f32 1.0, %v1112
    %v1114 = vmul.f32 %v1113, 2.0
    %v1115 = vsub.f32 %v1114, 1.0
    %v1116 = vsel %vm135, %v1115, %v1113
    %1117 = vrot.lane.b32.xlu0 %v1116, 64
    %v1118 = vpop.permute.xlu0 %1117
    %1119 = vrot.lane.b32.xlu0 %v1116, 96
    %v1120 = vpop.permute.xlu0 %1119
    %1121 = vrot.lane.b32.xlu0 %v1116, 32
    %v1122 = vpop.permute.xlu0 %1121
    %v1123 = vmul.f32 %v1116, %v913
    %v1124 = vmul.f32 %v1120, %v1122
    %v1125 = vadd.f32 %v1123, %v1124
    %v1126 = vtanh.pop %v1125
    %v1127 = vmul.f32 %v1118, %v1126
    %v1128 = vsel %vm136, %v1127, 0.0
    %1129 = vmatprep.subr.mxu0 0.0
    %1130 = vmatpush1.msra.mxu0 %v254
    %1131 = vmatprep.subr.mxu0 0.0
    %1132 = vmatpush1.msra.mxu0 %v255
    %1133 = vmatprep.subr.mxu0 0.0
    %1134 = vmatpush1.msra.mxu0 %v256
    %1135 = vmatprep.subr.mxu0 0.0
    %1136 = vmatpush1.msra.mxu0 %v257
    %1137 = vmatprep.subr.mxu0 0.0
    %1138 = vmatpush1.msra.mxu0 %v258
    %1139 = vmatprep.subr.mxu0 0.0
    %1140 = vmatpush1.msra.mxu0 %v259
    %1141 = vmatprep.subr.mxu0 0.0
    %1142 = vmatpush1.msra.mxu0 %v260
    %1143 = vmatprep.subr.mxu0 0.0
    %1144 = vmatpush1.msra.mxu0 %v261
    %1145 = vmatprep.subr.mxu0 0.0
    %1146 = vmatpush1.msra.mxu0 %v262
    %1147 = vmatprep.subr.mxu0 0.0
    %1148 = vmatpush1.msra.mxu0 %v263
    %1149 = vmatprep.subr.mxu0 0.0
    %1150 = vmatpush1.msra.mxu0 %v264
    %1151 = vmatprep.subr.mxu0 0.0
    %1152 = vmatpush1.msra.mxu0 %v265
    %1153 = vmatprep.subr.mxu0 0.0
    %1154 = vmatpush1.msra.mxu0 %v266
    %1155 = vmatprep.subr.mxu0 0.0
    %1156 = vmatpush1.msra.mxu0 %v267
    %1157 = vmatprep.subr.mxu0 0.0
    %1158 = vmatpush1.msra.mxu0 %v268
    %1159 = vmatprep.subr.mxu0 0.0
    %1160 = vmatpush1.msra.mxu0 %v269
    %1161 = vmatprep.subr.mxu0 0.0
    %1162 = vmatpush1.msra.mxu0 0.0
    %1163 = vmatprep.subr.mxu0 0.0
    %1164 = vmatpush1.msra.mxu0 0.0
    %1165 = vmatprep.subr.mxu0 0.0
    %1166 = vmatpush1.msra.mxu0 0.0
    %1167 = vmatprep.subr.mxu0 0.0
    %1168 = vmatpush1.msra.mxu0 0.0
    %1169 = vmatprep.subr.mxu0 0.0
    %1170 = vmatpush1.msra.mxu0 0.0
    %1171 = vmatprep.subr.mxu0 0.0
    %1172 = vmatpush1.msra.mxu0 0.0
    %1173 = vmatprep.subr.mxu0 0.0
    %1174 = vmatpush1.msra.mxu0 0.0
    %1175 = vmatprep.subr.mxu0 0.0
    %1176 = vmatpush1.msra.mxu0 0.0
    %1177 = vmatprep.subr.mxu0 0.0
    %1178 = vmatpush1.msra.mxu0 0.0
    %1179 = vmatprep.subr.mxu0 0.0
    %1180 = vmatpush1.msra.mxu0 0.0
    %1181 = vmatprep.subr.mxu0 0.0
    %1182 = vmatpush1.msra.mxu0 0.0
    %1183 = vmatprep.subr.mxu0 0.0
    %1184 = vmatpush1.msra.mxu0 0.0
    %1185 = vmatprep.subr.mxu0 0.0
    %1186 = vmatpush1.msra.mxu0 0.0
    %1187 = vmatprep.subr.mxu0 0.0
    %1188 = vmatpush1.msra.mxu0 0.0
    %1189 = vmatprep.subr.mxu0 0.0
    %1190 = vmatpush1.msra.mxu0 0.0
    %1191 = vmatprep.subr.mxu0 0.0
    %1192 = vmatpush1.msra.mxu0 0.0
    %1193 = vmatprep.mubr.f32.mxu0 0.0
    %1194 = vmatmul.mubr.f32.gmra.mrb[0].mxu0 %v1034
    %v1195 = vpop.f32.mrb[0].mxu0
    %v1196 = vadd.f32 0.0, %v1195
    %v1197 = vpop.f32.mrb[0].mxu0
    %1198 = vdwg.mxu0
    %v1200 = vrot.slane %v1196, 4
    %v1201 = vrot.slane %v1196, 5
    %v1204 = vadd.f32 %v246, %v1200
    %v1205 = vadd.f32 %v251, %v1201
    %v1206 = vxor.u32 %v1204, 2147483648
    %v1207 = vxor.u32 %v1205, 2147483648
    %v1208 = vmul.f32 %v1206, 1.442695
    %v1209 = vpow.pop %v1208
    %v1210 = vmul.f32 %v1207, 1.442695
    %v1211 = vpow.pop %v1210
    %v1212 = vadd.f32 %v1209, 1.0
    %v1213 = vadd.f32 %v1211, 1.0
    %v1214 = vrcp.pop %v1212
    %v1215 = vmul.f32 1.0, %v1214
    %v1216 = vrcp.pop %v1213
    %v1217 = vmul.f32 1.0, %v1216
    %v1218 = vmul.f32 %v1215, 2.0
    %v1219 = vmul.f32 %v1217, 2.0
    %v1220 = vsub.f32 %v1218, 1.0
    %v1221 = vsub.f32 %v1219, 1.0
    %v1224 = vrot.slane %v1220, 4
    %v1225 = vrot.slane %v1221, 3
    %v1226 = vsel %vm365, %v1225, %v1224
    %v1230 = vrot.slane %v1215, 4
    %v1231 = vrot.slane %v1217, 3
    %v1232 = vsel %vm365, %v1231, %v1230
    %v1234 = vsel %vm135, %v1226, %v1232
    %1235 = vrot.lane.b32.xlu0 %v1234, 64
    %v1236 = vpop.permute.xlu0 %1235
    %1237 = vrot.lane.b32.xlu0 %v1234, 96
    %v1238 = vpop.permute.xlu0 %1237
    %1239 = vrot.lane.b32.xlu0 %v1234, 32
    %v1240 = vpop.permute.xlu0 %1239
    %v1241 = vmul.f32 %v1234, %v1031
    %v1242 = vmul.f32 %v1238, %v1240
    %v1243 = vadd.f32 %v1241, %v1242
    %v1244 = vtanh.pop %v1243
    %v1245 = vmul.f32 %v1236, %v1244
    %v1246 = vsel %vm136, %v1245, 0.0
    %1247 = vrot.lane.b32.xlu0 %v1128, 32
    %v1248 = vpop.permute.xlu0 %1247
    %v1249 = vadd.f32 %v1246, %v1248
    %1250 = vmatprep.subr.mxu0 0.0
    %1251 = vmatpush1.msra.mxu0 %v389
    %1252 = vmatprep.subr.mxu0 0.0
    %1253 = vmatpush1.msra.mxu0 %v390
    %1254 = vmatprep.subr.mxu0 0.0
    %1255 = vmatpush1.msra.mxu0 %v391
    %1256 = vmatprep.subr.mxu0 0.0
    %1257 = vmatpush1.msra.mxu0 %v392
    %1258 = vmatprep.subr.mxu0 0.0
    %1259 = vmatpush1.msra.mxu0 %v393
    %1260 = vmatprep.subr.mxu0 0.0
    %1261 = vmatpush1.msra.mxu0 %v394
    %1262 = vmatprep.subr.mxu0 0.0
    %1263 = vmatpush1.msra.mxu0 %v395
    %1264 = vmatprep.subr.mxu0 0.0
    %1265 = vmatpush1.msra.mxu0 %v396
    %1266 = vmatprep.subr.mxu0 0.0
    %1267 = vmatpush1.msra.mxu0 %v397
    %1268 = vmatprep.subr.mxu0 0.0
    %1269 = vmatpush1.msra.mxu0 %v398
    %1270 = vmatprep.subr.mxu0 0.0
    %1271 = vmatpush1.msra.mxu0 %v399
    %1272 = vmatprep.subr.mxu0 0.0
    %1273 = vmatpush1.msra.mxu0 %v400
    %1274 = vmatprep.subr.mxu0 0.0
    %1275 = vmatpush1.msra.mxu0 %v401
    %1276 = vmatprep.subr.mxu0 0.0
    %1277 = vmatpush1.msra.mxu0 %v402
    %1278 = vmatprep.subr.mxu0 0.0
    %1279 = vmatpush1.msra.mxu0 %v403
    %1280 = vmatprep.subr.mxu0 0.0
    %1281 = vmatpush1.msra.mxu0 %v404
    %1282 = vmatprep.subr.mxu0 0.0
    %1283 = vmatpush1.msra.mxu0 0.0
    %1284 = vmatprep.subr.mxu0 0.0
    %1285 = vmatpush1.msra.mxu0 0.0
    %1286 = vmatprep.subr.mxu0 0.0
    %1287 = vmatpush1.msra.mxu0 0.0
    %1288 = vmatprep.subr.mxu0 0.0
    %1289 = vmatpush1.msra.mxu0 0.0
    %1290 = vmatprep.subr.mxu0 0.0
    %1291 = vmatpush1.msra.mxu0 0.0
    %1292 = vmatprep.subr.mxu0 0.0
    %1293 = vmatpush1.msra.mxu0 0.0
    %1294 = vmatprep.subr.mxu0 0.0
    %1295 = vmatpush1.msra.mxu0 0.0
    %1296 = vmatprep.subr.mxu0 0.0
    %1297 = vmatpush1.msra.mxu0 0.0
    %1298 = vmatprep.subr.mxu0 0.0
    %1299 = vmatpush1.msra.mxu0 0.0
    %1300 = vmatprep.subr.mxu0 0.0
    %1301 = vmatpush1.msra.mxu0 0.0
    %1302 = vmatprep.subr.mxu0 0.0
    %1303 = vmatpush1.msra.mxu0 0.0
    %1304 = vmatprep.subr.mxu0 0.0
    %1305 = vmatpush1.msra.mxu0 0.0
    %1306 = vmatprep.subr.mxu0 0.0
    %1307 = vmatpush1.msra.mxu0 0.0
    %1308 = vmatprep.subr.mxu0 0.0
    %1309 = vmatpush1.msra.mxu0 0.0
    %1310 = vmatprep.subr.mxu0 0.0
    %1311 = vmatpush1.msra.mxu0 0.0
    %1312 = vmatprep.subr.mxu0 0.0
    %1313 = vmatpush1.msra.mxu0 0.0
    %1314 = vmatprep.mubr.f32.mxu0 0.0
    %1315 = vmatmul.mubr.f32.gmra.mrb[0].mxu0 %v1249
    %v1316 = vpop.f32.mrb[0].mxu0
    %v1317 = vadd.f32 %v142, %v1316
    %v1318 = vpop.f32.mrb[0].mxu0
    %1319 = vdwg.mxu0
    %v1320 = vxor.u32 %v1317, 2147483648
    %v1321 = vmul.f32 %v1320, 1.442695
    %v1322 = vpow.pop %v1321
    %v1323 = vadd.f32 %v1322, 1.0
    %v1324 = vrcp.pop %v1323
    %v1325 = vmul.f32 1.0, %v1324
    %v1326 = vmul.f32 %v1325, 2.0
    %v1327 = vsub.f32 %v1326, 1.0
    %v1328 = vsel %vm135, %v1327, %v1325
    %1329 = vrot.lane.b32.xlu0 %v1328, 64
    %v1330 = vpop.permute.xlu0 %1329
    %1331 = vrot.lane.b32.xlu0 %v1328, 96
    %v1332 = vpop.permute.xlu0 %1331
    %1333 = vrot.lane.b32.xlu0 %v1328, 32
    %v1334 = vpop.permute.xlu0 %1333
    %v1335 = vmul.f32 %v1328, %v1125
    %v1336 = vmul.f32 %v1332, %v1334
    %v1337 = vadd.f32 %v1335, %v1336
    %v1338 = vtanh.pop %v1337
    %v1339 = vmul.f32 %v1330, %v1338
    %v1340 = vsel %vm136, %v1339, 0.0
    %1341 = vmatprep.subr.mxu0 0.0
    %1342 = vmatpush1.msra.mxu0 %v254
    %1343 = vmatprep.subr.mxu0 0.0
    %1344 = vmatpush1.msra.mxu0 %v255
    %1345 = vmatprep.subr.mxu0 0.0
    %1346 = vmatpush1.msra.mxu0 %v256
    %1347 = vmatprep.subr.mxu0 0.0
    %1348 = vmatpush1.msra.mxu0 %v257
    %1349 = vmatprep.subr.mxu0 0.0
    %1350 = vmatpush1.msra.mxu0 %v258
    %1351 = vmatprep.subr.mxu0 0.0
    %1352 = vmatpush1.msra.mxu0 %v259
    %1353 = vmatprep.subr.mxu0 0.0
    %1354 = vmatpush1.msra.mxu0 %v260
    %1355 = vmatprep.subr.mxu0 0.0
    %1356 = vmatpush1.msra.mxu0 %v261
    %1357 = vmatprep.subr.mxu0 0.0
    %1358 = vmatpush1.msra.mxu0 %v262
    %1359 = vmatprep.subr.mxu0 0.0
    %1360 = vmatpush1.msra.mxu0 %v263
    %1361 = vmatprep.subr.mxu0 0.0
    %1362 = vmatpush1.msra.mxu0 %v264
    %1363 = vmatprep.subr.mxu0 0.0
    %1364 = vmatpush1.msra.mxu0 %v265
    %1365 = vmatprep.subr.mxu0 0.0
    %1366 = vmatpush1.msra.mxu0 %v266
    %1367 = vmatprep.subr.mxu0 0.0
    %1368 = vmatpush1.msra.mxu0 %v267
    %1369 = vmatprep.subr.mxu0 0.0
    %1370 = vmatpush1.msra.mxu0 %v268
    %1371 = vmatprep.subr.mxu0 0.0
    %1372 = vmatpush1.msra.mxu0 %v269
    %1373 = vmatprep.subr.mxu0 0.0
    %1374 = vmatpush1.msra.mxu0 0.0
    %1375 = vmatprep.subr.mxu0 0.0
    %1376 = vmatpush1.msra.mxu0 0.0
    %1377 = vmatprep.subr.mxu0 0.0
    %1378 = vmatpush1.msra.mxu0 0.0
    %1379 = vmatprep.subr.mxu0 0.0
    %1380 = vmatpush1.msra.mxu0 0.0
    %1381 = vmatprep.subr.mxu0 0.0
    %1382 = vmatpush1.msra.mxu0 0.0
    %1383 = vmatprep.subr.mxu0 0.0
    %1384 = vmatpush1.msra.mxu0 0.0
    %1385 = vmatprep.subr.mxu0 0.0
    %1386 = vmatpush1.msra.mxu0 0.0
    %1387 = vmatprep.subr.mxu0 0.0
    %1388 = vmatpush1.msra.mxu0 0.0
    %1389 = vmatprep.subr.mxu0 0.0
    %1390 = vmatpush1.msra.mxu0 0.0
    %1391 = vmatprep.subr.mxu0 0.0
    %1392 = vmatpush1.msra.mxu0 0.0
    %1393 = vmatprep.subr.mxu0 0.0
    %1394 = vmatpush1.msra.mxu0 0.0
    %1395 = vmatprep.subr.mxu0 0.0
    %1396 = vmatpush1.msra.mxu0 0.0
    %1397 = vmatprep.subr.mxu0 0.0
    %1398 = vmatpush1.msra.mxu0 0.0
    %1399 = vmatprep.subr.mxu0 0.0
    %1400 = vmatpush1.msra.mxu0 0.0
    %1401 = vmatprep.subr.mxu0 0.0
    %1402 = vmatpush1.msra.mxu0 0.0
    %1403 = vmatprep.subr.mxu0 0.0
    %1404 = vmatpush1.msra.mxu0 0.0
    %1405 = vmatprep.mubr.f32.mxu0 0.0
    %1406 = vmatmul.mubr.f32.gmra.mrb[0].mxu0 %v1246
    %v1407 = vpop.f32.mrb[0].mxu0
    %v1408 = vadd.f32 0.0, %v1407
    %v1409 = vpop.f32.mrb[0].mxu0
    %1410 = vdwg.mxu0
    %v1412 = vrot.slane %v1408, 3
    %v1413 = vrot.slane %v1408, 4
    %v1416 = vadd.f32 %v246, %v1412
    %v1417 = vadd.f32 %v251, %v1413
    %v1418 = vxor.u32 %v1416, 2147483648
    %v1419 = vxor.u32 %v1417, 2147483648
    %v1420 = vmul.f32 %v1418, 1.442695
    %v1421 = vpow.pop %v1420
    %v1422 = vmul.f32 %v1419, 1.442695
    %v1423 = vpow.pop %v1422
    %v1424 = vadd.f32 %v1421, 1.0
    %v1425 = vadd.f32 %v1423, 1.0
    %v1426 = vrcp.pop %v1424
    %v1427 = vmul.f32 1.0, %v1426
    %v1428 = vrcp.pop %v1425
    %v1429 = vmul.f32 1.0, %v1428
    %v1430 = vmul.f32 %v1427, 2.0
    %v1431 = vmul.f32 %v1429, 2.0
    %v1432 = vsub.f32 %v1430, 1.0
    %v1433 = vsub.f32 %v1431, 1.0
    %v1436 = vrot.slane %v1432, 5
    %v1437 = vrot.slane %v1433, 4
    %v1438 = vsel %vm365, %v1437, %v1436
    %v1442 = vrot.slane %v1427, 5
    %v1443 = vrot.slane %v1429, 4
    %v1444 = vsel %vm365, %v1443, %v1442
    %v1446 = vsel %vm135, %v1438, %v1444
    %1447 = vrot.lane.b32.xlu0 %v1446, 64
    %v1448 = vpop.permute.xlu0 %1447
    %1449 = vrot.lane.b32.xlu0 %v1446, 96
    %v1450 = vpop.permute.xlu0 %1449
    %1451 = vrot.lane.b32.xlu0 %v1446, 32
    %v1452 = vpop.permute.xlu0 %1451
    %v1453 = vmul.f32 %v1446, %v1243
    %v1454 = vmul.f32 %v1450, %v1452
    %v1455 = vadd.f32 %v1453, %v1454
    %v1456 = vtanh.pop %v1455
    %v1457 = vmul.f32 %v1448, %v1456
    %v1458 = vsel %vm136, %v1457, 0.0
    %1459 = vrot.lane.b32.xlu0 %v1340, 32
    %v1460 = vpop.permute.xlu0 %1459
    %v1461 = vadd.f32 %v1458, %v1460
    %1462 = vmatprep.subr.mxu0 0.0
    %1463 = vmatpush1.msra.mxu0 %v389
    %1464 = vmatprep.subr.mxu0 0.0
    %1465 = vmatpush1.msra.mxu0 %v390
    %1466 = vmatprep.subr.mxu0 0.0
    %1467 = vmatpush1.msra.mxu0 %v391
    %1468 = vmatprep.subr.mxu0 0.0
    %1469 = vmatpush1.msra.mxu0 %v392
    %1470 = vmatprep.subr.mxu0 0.0
    %1471 = vmatpush1.msra.mxu0 %v393
    %1472 = vmatprep.subr.mxu0 0.0
    %1473 = vmatpush1.msra.mxu0 %v394
    %1474 = vmatprep.subr.mxu0 0.0
    %1475 = vmatpush1.msra.mxu0 %v395
    %1476 = vmatprep.subr.mxu0 0.0
    %1477 = vmatpush1.msra.mxu0 %v396
    %1478 = vmatprep.subr.mxu0 0.0
    %1479 = vmatpush1.msra.mxu0 %v397
    %1480 = vmatprep.subr.mxu0 0.0
    %1481 = vmatpush1.msra.mxu0 %v398
    %1482 = vmatprep.subr.mxu0 0.0
    %1483 = vmatpush1.msra.mxu0 %v399
    %1484 = vmatprep.subr.mxu0 0.0
    %1485 = vmatpush1.msra.mxu0 %v400
    %1486 = vmatprep.subr.mxu0 0.0
    %1487 = vmatpush1.msra.mxu0 %v401
    %1488 = vmatprep.subr.mxu0 0.0
    %1489 = vmatpush1.msra.mxu0 %v402
    %1490 = vmatprep.subr.mxu0 0.0
    %1491 = vmatpush1.msra.mxu0 %v403
    %1492 = vmatprep.subr.mxu0 0.0
    %1493 = vmatpush1.msra.mxu0 %v404
    %1494 = vmatprep.subr.mxu0 0.0
    %1495 = vmatpush1.msra.mxu0 0.0
    %1496 = vmatprep.subr.mxu0 0.0
    %1497 = vmatpush1.msra.mxu0 0.0
    %1498 = vmatprep.subr.mxu0 0.0
    %1499 = vmatpush1.msra.mxu0 0.0
    %1500 = vmatprep.subr.mxu0 0.0
    %1501 = vmatpush1.msra.mxu0 0.0
    %1502 = vmatprep.subr.mxu0 0.0
    %1503 = vmatpush1.msra.mxu0 0.0
    %1504 = vmatprep.subr.mxu0 0.0
    %1505 = vmatpush1.msra.mxu0 0.0
    %1506 = vmatprep.subr.mxu0 0.0
    %1507 = vmatpush1.msra.mxu0 0.0
    %1508 = vmatprep.subr.mxu0 0.0
    %1509 = vmatpush1.msra.mxu0 0.0
    %1510 = vmatprep.subr.mxu0 0.0
    %1511 = vmatpush1.msra.mxu0 0.0
    %1512 = vmatprep.subr.mxu0 0.0
    %1513 = vmatpush1.msra.mxu0 0.0
    %1514 = vmatprep.subr.mxu0 0.0
    %1515 = vmatpush1.msra.mxu0 0.0
    %1516 = vmatprep.subr.mxu0 0.0
    %1517 = vmatpush1.msra.mxu0 0.0
    %1518 = vmatprep.subr.mxu0 0.0
    %1519 = vmatpush1.msra.mxu0 0.0
    %1520 = vmatprep.subr.mxu0 0.0
    %1521 = vmatpush1.msra.mxu0 0.0
    %1522 = vmatprep.subr.mxu0 0.0
    %1523 = vmatpush1.msra.mxu0 0.0
    %1524 = vmatprep.subr.mxu0 0.0
    %1525 = vmatpush1.msra.mxu0 0.0
    %1526 = vmatprep.mubr.f32.mxu0 0.0
    %1527 = vmatmul.mubr.f32.gmra.mrb[0].mxu0 %v1461
    %v1528 = vpop.f32.mrb[0].mxu0
    %v1529 = vadd.f32 %v142, %v1528
    %v1530 = vpop.f32.mrb[0].mxu0
    %1531 = vdwg.mxu0
    %v1532 = vxor.u32 %v1529, 2147483648
    %v1533 = vmul.f32 %v1532, 1.442695
    %v1534 = vpow.pop %v1533
    %v1535 = vadd.f32 %v1534, 1.0
    %v1536 = vrcp.pop %v1535
    %v1537 = vmul.f32 1.0, %v1536
    %v1538 = vmul.f32 %v1537, 2.0
    %v1539 = vsub.f32 %v1538, 1.0
    %v1540 = vsel %vm135, %v1539, %v1537
    %1541 = vrot.lane.b32.xlu0 %v1540, 64
    %v1542 = vpop.permute.xlu0 %1541
    %1543 = vrot.lane.b32.xlu0 %v1540, 96
    %v1544 = vpop.permute.xlu0 %1543
    %1545 = vrot.lane.b32.xlu0 %v1540, 32
    %v1546 = vpop.permute.xlu0 %1545
    %v1547 = vmul.f32 %v1540, %v1337
    %v1548 = vmul.f32 %v1544, %v1546
    %v1549 = vadd.f32 %v1547, %v1548
    %v1550 = vtanh.pop %v1549
    %v1551 = vmul.f32 %v1542, %v1550
    %v1552 = vsel %vm136, %v1551, 0.0
    %1553 = vmatprep.subr.mxu0 0.0
    %1554 = vmatpush1.msra.mxu0 %v254
    %1555 = vmatprep.subr.mxu0 0.0
    %1556 = vmatpush1.msra.mxu0 %v255
    %1557 = vmatprep.subr.mxu0 0.0
    %1558 = vmatpush1.msra.mxu0 %v256
    %1559 = vmatprep.subr.mxu0 0.0
    %1560 = vmatpush1.msra.mxu0 %v257
    %1561 = vmatprep.subr.mxu0 0.0
    %1562 = vmatpush1.msra.mxu0 %v258
    %1563 = vmatprep.subr.mxu0 0.0
    %1564 = vmatpush1.msra.mxu0 %v259
    %1565 = vmatprep.subr.mxu0 0.0
    %1566 = vmatpush1.msra.mxu0 %v260
    %1567 = vmatprep.subr.mxu0 0.0
    %1568 = vmatpush1.msra.mxu0 %v261
    %1569 = vmatprep.subr.mxu0 0.0
    %1570 = vmatpush1.msra.mxu0 %v262
    %1571 = vmatprep.subr.mxu0 0.0
    %1572 = vmatpush1.msra.mxu0 %v263
    %1573 = vmatprep.subr.mxu0 0.0
    %1574 = vmatpush1.msra.mxu0 %v264
    %1575 = vmatprep.subr.mxu0 0.0
    %1576 = vmatpush1.msra.mxu0 %v265
    %1577 = vmatprep.subr.mxu0 0.0
    %1578 = vmatpush1.msra.mxu0 %v266
    %1579 = vmatprep.subr.mxu0 0.0
    %1580 = vmatpush1.msra.mxu0 %v267
    %1581 = vmatprep.subr.mxu0 0.0
    %1582 = vmatpush1.msra.mxu0 %v268
    %1583 = vmatprep.subr.mxu0 0.0
    %1584 = vmatpush1.msra.mxu0 %v269
    %1585 = vmatprep.subr.mxu0 0.0
    %1586 = vmatpush1.msra.mxu0 0.0
    %1587 = vmatprep.subr.mxu0 0.0
    %1588 = vmatpush1.msra.mxu0 0.0
    %1589 = vmatprep.subr.mxu0 0.0
    %1590 = vmatpush1.msra.mxu0 0.0
    %1591 = vmatprep.subr.mxu0 0.0
    %1592 = vmatpush1.msra.mxu0 0.0
    %1593 = vmatprep.subr.mxu0 0.0
    %1594 = vmatpush1.msra.mxu0 0.0
    %1595 = vmatprep.subr.mxu0 0.0
    %1596 = vmatpush1.msra.mxu0 0.0
    %1597 = vmatprep.subr.mxu0 0.0
    %1598 = vmatpush1.msra.mxu0 0.0
    %1599 = vmatprep.subr.mxu0 0.0
    %1600 = vmatpush1.msra.mxu0 0.0
    %1601 = vmatprep.subr.mxu0 0.0
    %1602 = vmatpush1.msra.mxu0 0.0
    %1603 = vmatprep.subr.mxu0 0.0
    %1604 = vmatpush1.msra.mxu0 0.0
    %1605 = vmatprep.subr.mxu0 0.0
    %1606 = vmatpush1.msra.mxu0 0.0
    %1607 = vmatprep.subr.mxu0 0.0
    %1608 = vmatpush1.msra.mxu0 0.0
    %1609 = vmatprep.subr.mxu0 0.0
    %1610 = vmatpush1.msra.mxu0 0.0
    %1611 = vmatprep.subr.mxu0 0.0
    %1612 = vmatpush1.msra.mxu0 0.0
    %1613 = vmatprep.subr.mxu0 0.0
    %1614 = vmatpush1.msra.mxu0 0.0
    %1615 = vmatprep.subr.mxu0 0.0
    %1616 = vmatpush1.msra.mxu0 0.0
    %1617 = vmatprep.mubr.f32.mxu0 0.0
    %1618 = vmatmul.mubr.f32.gmra.mrb[0].mxu0 %v1458
    %v1619 = vpop.f32.mrb[0].mxu0
    %v1620 = vadd.f32 0.0, %v1619
    %v1621 = vpop.f32.mrb[0].mxu0
    %1622 = vdwg.mxu0
    %v1624 = vrot.slane %v1620, 2
    %v1625 = vrot.slane %v1620, 3
    %v1628 = vadd.f32 %v246, %v1624
    %v1629 = vadd.f32 %v251, %v1625
    %v1630 = vxor.u32 %v1628, 2147483648
    %v1631 = vxor.u32 %v1629, 2147483648
    %v1632 = vmul.f32 %v1630, 1.442695
    %v1633 = vpow.pop %v1632
    %v1634 = vmul.f32 %v1631, 1.442695
    %v1635 = vpow.pop %v1634
    %v1636 = vadd.f32 %v1633, 1.0
    %v1637 = vadd.f32 %v1635, 1.0
    %v1638 = vrcp.pop %v1636
    %v1639 = vmul.f32 1.0, %v1638
    %v1640 = vrcp.pop %v1637
    %v1641 = vmul.f32 1.0, %v1640
    %v1642 = vmul.f32 %v1639, 2.0
    %v1643 = vmul.f32 %v1641, 2.0
    %v1644 = vsub.f32 %v1642, 1.0
    %v1645 = vsub.f32 %v1643, 1.0
    %v1648 = vrot.slane %v1644, 6
    %v1649 = vrot.slane %v1645, 5
    %v1650 = vsel %vm365, %v1649, %v1648
    %v1654 = vrot.slane %v1639, 6
    %v1655 = vrot.slane %v1641, 5
    %v1656 = vsel %vm365, %v1655, %v1654
    %v1658 = vsel %vm135, %v1650, %v1656
    %1659 = vrot.lane.b32.xlu0 %v1658, 64
    %v1660 = vpop.permute.xlu0 %1659
    %1661 = vrot.lane.b32.xlu0 %v1658, 96
    %v1662 = vpop.permute.xlu0 %1661
    %1663 = vrot.lane.b32.xlu0 %v1658, 32
    %v1664 = vpop.permute.xlu0 %1663
    %v1665 = vmul.f32 %v1658, %v1455
    %v1666 = vmul.f32 %v1662, %v1664
    %v1667 = vadd.f32 %v1665, %v1666
    %v1668 = vtanh.pop %v1667
    %v1669 = vmul.f32 %v1660, %v1668
    %v1670 = vsel %vm136, %v1669, 0.0
    %1671 = vrot.lane.b32.xlu0 %v1552, 32
    %v1672 = vpop.permute.xlu0 %1671
    %v1673 = vadd.f32 %v1670, %v1672
    %1674 = vmatprep.subr.mxu0 0.0
    %1675 = vmatpush1.msra.mxu0 %v389
    %1676 = vmatprep.subr.mxu0 0.0
    %1677 = vmatpush1.msra.mxu0 %v390
    %1678 = vmatprep.subr.mxu0 0.0
    %1679 = vmatpush1.msra.mxu0 %v391
    %1680 = vmatprep.subr.mxu0 0.0
    %1681 = vmatpush1.msra.mxu0 %v392
    %1682 = vmatprep.subr.mxu0 0.0
    %1683 = vmatpush1.msra.mxu0 %v393
    %1684 = vmatprep.subr.mxu0 0.0
    %1685 = vmatpush1.msra.mxu0 %v394
    %1686 = vmatprep.subr.mxu0 0.0
    %1687 = vmatpush1.msra.mxu0 %v395
    %1688 = vmatprep.subr.mxu0 0.0
    %1689 = vmatpush1.msra.mxu0 %v396
    %1690 = vmatprep.subr.mxu0 0.0
    %1691 = vmatpush1.msra.mxu0 %v397
    %1692 = vmatprep.subr.mxu0 0.0
    %1693 = vmatpush1.msra.mxu0 %v398
    %1694 = vmatprep.subr.mxu0 0.0
    %1695 = vmatpush1.msra.mxu0 %v399
    %1696 = vmatprep.subr.mxu0 0.0
    %1697 = vmatpush1.msra.mxu0 %v400
    %1698 = vmatprep.subr.mxu0 0.0
    %1699 = vmatpush1.msra.mxu0 %v401
    %1700 = vmatprep.subr.mxu0 0.0
    %1701 = vmatpush1.msra.mxu0 %v402
    %1702 = vmatprep.subr.mxu0 0.0
    %1703 = vmatpush1.msra.mxu0 %v403
    %1704 = vmatprep.subr.mxu0 0.0
    %1705 = vmatpush1.msra.mxu0 %v404
    %1706 = vmatprep.subr.mxu0 0.0
    %1707 = vmatpush1.msra.mxu0 0.0
    %1708 = vmatprep.subr.mxu0 0.0
    %1709 = vmatpush1.msra.mxu0 0.0
    %1710 = vmatprep.subr.mxu0 0.0
    %1711 = vmatpush1.msra.mxu0 0.0
    %1712 = vmatprep.subr.mxu0 0.0
    %1713 = vmatpush1.msra.mxu0 0.0
    %1714 = vmatprep.subr.mxu0 0.0
    %1715 = vmatpush1.msra.mxu0 0.0
    %1716 = vmatprep.subr.mxu0 0.0
    %1717 = vmatpush1.msra.mxu0 0.0
    %1718 = vmatprep.subr.mxu0 0.0
    %1719 = vmatpush1.msra.mxu0 0.0
    %1720 = vmatprep.subr.mxu0 0.0
    %1721 = vmatpush1.msra.mxu0 0.0
    %1722 = vmatprep.subr.mxu0 0.0
    %1723 = vmatpush1.msra.mxu0 0.0
    %1724 = vmatprep.subr.mxu0 0.0
    %1725 = vmatpush1.msra.mxu0 0.0
    %1726 = vmatprep.subr.mxu0 0.0
    %1727 = vmatpush1.msra.mxu0 0.0
    %1728 = vmatprep.subr.mxu0 0.0
    %1729 = vmatpush1.msra.mxu0 0.0
    %1730 = vmatprep.subr.mxu0 0.0
    %1731 = vmatpush1.msra.mxu0 0.0
    %1732 = vmatprep.subr.mxu0 0.0
    %1733 = vmatpush1.msra.mxu0 0.0
    %1734 = vmatprep.subr.mxu0 0.0
    %1735 = vmatpush1.msra.mxu0 0.0
    %1736 = vmatprep.subr.mxu0 0.0
    %1737 = vmatpush1.msra.mxu0 0.0
    %1738 = vmatprep.mubr.f32.mxu0 0.0
    %1739 = vmatmul.mubr.f32.gmra.mrb[0].mxu0 %v1673
    %v1740 = vpop.f32.mrb[0].mxu0
    %v1741 = vadd.f32 %v142, %v1740
    %v1742 = vpop.f32.mrb[0].mxu0
    %1743 = vdwg.mxu0
    %v1744 = vxor.u32 %v1741, 2147483648
    %v1745 = vmul.f32 %v1744, 1.442695
    %v1746 = vpow.pop %v1745
    %v1747 = vadd.f32 %v1746, 1.0
    %v1748 = vrcp.pop %v1747
    %v1749 = vmul.f32 1.0, %v1748
    %v1750 = vmul.f32 %v1749, 2.0
    %v1751 = vsub.f32 %v1750, 1.0
    %v1752 = vsel %vm135, %v1751, %v1749
    %1753 = vrot.lane.b32.xlu0 %v1752, 64
    %v1754 = vpop.permute.xlu0 %1753
    %1755 = vrot.lane.b32.xlu0 %v1752, 96
    %v1756 = vpop.permute.xlu0 %1755
    %1757 = vrot.lane.b32.xlu0 %v1752, 32
    %v1758 = vpop.permute.xlu0 %1757
    %v1759 = vmul.f32 %v1752, %v1549
    %v1760 = vmul.f32 %v1756, %v1758
    %v1761 = vadd.f32 %v1759, %v1760
    %v1762 = vtanh.pop %v1761
    %v1763 = vmul.f32 %v1754, %v1762
    %v1764 = vsel %vm136, %v1763, 0.0
    %1765 = vmatprep.subr.mxu0 0.0
    %1766 = vmatpush1.msra.mxu0 %v254
    %1767 = vmatprep.subr.mxu0 0.0
    %1768 = vmatpush1.msra.mxu0 %v255
    %1769 = vmatprep.subr.mxu0 0.0
    %1770 = vmatpush1.msra.mxu0 %v256
    %1771 = vmatprep.subr.mxu0 0.0
    %1772 = vmatpush1.msra.mxu0 %v257
    %1773 = vmatprep.subr.mxu0 0.0
    %1774 = vmatpush1.msra.mxu0 %v258
    %1775 = vmatprep.subr.mxu0 0.0
    %1776 = vmatpush1.msra.mxu0 %v259
    %1777 = vmatprep.subr.mxu0 0.0
    %1778 = vmatpush1.msra.mxu0 %v260
    %1779 = vmatprep.subr.mxu0 0.0
    %1780 = vmatpush1.msra.mxu0 %v261
    %1781 = vmatprep.subr.mxu0 0.0
    %1782 = vmatpush1.msra.mxu0 %v262
    %1783 = vmatprep.subr.mxu0 0.0
    %1784 = vmatpush1.msra.mxu0 %v263
    %1785 = vmatprep.subr.mxu0 0.0
    %1786 = vmatpush1.msra.mxu0 %v264
    %1787 = vmatprep.subr.mxu0 0.0
    %1788 = vmatpush1.msra.mxu0 %v265
    %1789 = vmatprep.subr.mxu0 0.0
    %1790 = vmatpush1.msra.mxu0 %v266
    %1791 = vmatprep.subr.mxu0 0.0
    %1792 = vmatpush1.msra.mxu0 %v267
    %1793 = vmatprep.subr.mxu0 0.0
    %1794 = vmatpush1.msra.mxu0 %v268
    %1795 = vmatprep.subr.mxu0 0.0
    %1796 = vmatpush1.msra.mxu0 %v269
    %1797 = vmatprep.subr.mxu0 0.0
    %1798 = vmatpush1.msra.mxu0 0.0
    %1799 = vmatprep.subr.mxu0 0.0
    %1800 = vmatpush1.msra.mxu0 0.0
    %1801 = vmatprep.subr.mxu0 0.0
    %1802 = vmatpush1.msra.mxu0 0.0
    %1803 = vmatprep.subr.mxu0 0.0
    %1804 = vmatpush1.msra.mxu0 0.0
    %1805 = vmatprep.subr.mxu0 0.0
    %1806 = vmatpush1.msra.mxu0 0.0
    %1807 = vmatprep.subr.mxu0 0.0
    %1808 = vmatpush1.msra.mxu0 0.0
    %1809 = vmatprep.subr.mxu0 0.0
    %1810 = vmatpush1.msra.mxu0 0.0
    %1811 = vmatprep.subr.mxu0 0.0
    %1812 = vmatpush1.msra.mxu0 0.0
    %1813 = vmatprep.subr.mxu0 0.0
    %1814 = vmatpush1.msra.mxu0 0.0
    %1815 = vmatprep.subr.mxu0 0.0
    %1816 = vmatpush1.msra.mxu0 0.0
    %1817 = vmatprep.subr.mxu0 0.0
    %1818 = vmatpush1.msra.mxu0 0.0
    %1819 = vmatprep.subr.mxu0 0.0
    %1820 = vmatpush1.msra.mxu0 0.0
    %1821 = vmatprep.subr.mxu0 0.0
    %1822 = vmatpush1.msra.mxu0 0.0
    %1823 = vmatprep.subr.mxu0 0.0
    %1824 = vmatpush1.msra.mxu0 0.0
    %1825 = vmatprep.subr.mxu0 0.0
    %1826 = vmatpush1.msra.mxu0 0.0
    %1827 = vmatprep.subr.mxu0 0.0
    %1828 = vmatpush1.msra.mxu0 0.0
    %1829 = vmatprep.mubr.f32.mxu0 0.0
    %1830 = vmatmul.mubr.f32.gmra.mrb[0].mxu0 %v1670
    %v1831 = vpop.f32.mrb[0].mxu0
    %v1832 = vadd.f32 0.0, %v1831
    %v1833 = vpop.f32.mrb[0].mxu0
    %1834 = vdwg.mxu0
    %v1836 = vrot.slane %v1832, 1
    %v1837 = vrot.slane %v1832, 2
    %v1840 = vadd.f32 %v246, %v1836
    %v1841 = vadd.f32 %v251, %v1837
    %v1842 = vxor.u32 %v1840, 2147483648
    %v1843 = vxor.u32 %v1841, 2147483648
    %v1844 = vmul.f32 %v1842, 1.442695
    %v1845 = vpow.pop %v1844
    %v1846 = vmul.f32 %v1843, 1.442695
    %v1847 = vpow.pop %v1846
    %v1848 = vadd.f32 %v1845, 1.0
    %v1849 = vadd.f32 %v1847, 1.0
    %v1850 = vrcp.pop %v1848
    %v1851 = vmul.f32 1.0, %v1850
    %v1852 = vrcp.pop %v1849
    %v1853 = vmul.f32 1.0, %v1852
    %v1854 = vmul.f32 %v1851, 2.0
    %v1855 = vmul.f32 %v1853, 2.0
    %v1856 = vsub.f32 %v1854, 1.0
    %v1857 = vsub.f32 %v1855, 1.0
    %v1860 = vrot.slane %v1856, 7
    %v1861 = vrot.slane %v1857, 6
    %v1862 = vsel %vm365, %v1861, %v1860
    %v1866 = vrot.slane %v1851, 7
    %v1867 = vrot.slane %v1853, 6
    %v1868 = vsel %vm365, %v1867, %v1866
    %v1870 = vsel %vm135, %v1862, %v1868
    %1871 = vrot.lane.b32.xlu0 %v1870, 64
    %v1872 = vpop.permute.xlu0 %1871
    %1873 = vrot.lane.b32.xlu0 %v1870, 96
    %v1874 = vpop.permute.xlu0 %1873
    %1875 = vrot.lane.b32.xlu0 %v1870, 32
    %v1876 = vpop.permute.xlu0 %1875
    %v1877 = vmul.f32 %v1870, %v1667
    %v1878 = vmul.f32 %v1874, %v1876
    %v1879 = vadd.f32 %v1877, %v1878
    %v1880 = vtanh.pop %v1879
    %v1881 = vmul.f32 %v1872, %v1880
    %v1882 = vsel %vm136, %v1881, 0.0
    %1883 = vrot.lane.b32.xlu0 %v1764, 32
    %v1884 = vpop.permute.xlu0 %1883
    %v1885 = vadd.f32 %v1882, %v1884
    %1886 = vmatprep.subr.mxu0 0.0
    %1887 = vmatpush1.msra.mxu0 %v389
    %1888 = vmatprep.subr.mxu0 0.0
    %1889 = vmatpush1.msra.mxu0 %v390
    %1890 = vmatprep.subr.mxu0 0.0
    %1891 = vmatpush1.msra.mxu0 %v391
    %1892 = vmatprep.subr.mxu0 0.0
    %1893 = vmatpush1.msra.mxu0 %v392
    %1894 = vmatprep.subr.mxu0 0.0
    %1895 = vmatpush1.msra.mxu0 %v393
    %1896 = vmatprep.subr.mxu0 0.0
    %1897 = vmatpush1.msra.mxu0 %v394
    %1898 = vmatprep.subr.mxu0 0.0
    %1899 = vmatpush1.msra.mxu0 %v395
    %1900 = vmatprep.subr.mxu0 0.0
    %1901 = vmatpush1.msra.mxu0 %v396
    %1902 = vmatprep.subr.mxu0 0.0
    %1903 = vmatpush1.msra.mxu0 %v397
    %1904 = vmatprep.subr.mxu0 0.0
    %1905 = vmatpush1.msra.mxu0 %v398
    %1906 = vmatprep.subr.mxu0 0.0
    %1907 = vmatpush1.msra.mxu0 %v399
    %1908 = vmatprep.subr.mxu0 0.0
    %1909 = vmatpush1.msra.mxu0 %v400
    %1910 = vmatprep.subr.mxu0 0.0
    %1911 = vmatpush1.msra.mxu0 %v401
    %1912 = vmatprep.subr.mxu0 0.0
    %1913 = vmatpush1.msra.mxu0 %v402
    %1914 = vmatprep.subr.mxu0 0.0
    %1915 = vmatpush1.msra.mxu0 %v403
    %1916 = vmatprep.subr.mxu0 0.0
    %1917 = vmatpush1.msra.mxu0 %v404
    %1918 = vmatprep.subr.mxu0 0.0
    %1919 = vmatpush1.msra.mxu0 0.0
    %1920 = vmatprep.subr.mxu0 0.0
    %1921 = vmatpush1.msra.mxu0 0.0
    %1922 = vmatprep.subr.mxu0 0.0
    %1923 = vmatpush1.msra.mxu0 0.0
    %1924 = vmatprep.subr.mxu0 0.0
    %1925 = vmatpush1.msra.mxu0 0.0
    %1926 = vmatprep.subr.mxu0 0.0
    %1927 = vmatpush1.msra.mxu0 0.0
    %1928 = vmatprep.subr.mxu0 0.0
    %1929 = vmatpush1.msra.mxu0 0.0
    %1930 = vmatprep.subr.mxu0 0.0
    %1931 = vmatpush1.msra.mxu0 0.0
    %1932 = vmatprep.subr.mxu0 0.0
    %1933 = vmatpush1.msra.mxu0 0.0
    %1934 = vmatprep.subr.mxu0 0.0
    %1935 = vmatpush1.msra.mxu0 0.0
    %1936 = vmatprep.subr.mxu0 0.0
    %1937 = vmatpush1.msra.mxu0 0.0
    %1938 = vmatprep.subr.mxu0 0.0
    %1939 = vmatpush1.msra.mxu0 0.0
    %1940 = vmatprep.subr.mxu0 0.0
    %1941 = vmatpush1.msra.mxu0 0.0
    %1942 = vmatprep.subr.mxu0 0.0
    %1943 = vmatpush1.msra.mxu0 0.0
    %1944 = vmatprep.subr.mxu0 0.0
    %1945 = vmatpush1.msra.mxu0 0.0
    %1946 = vmatprep.subr.mxu0 0.0
    %1947 = vmatpush1.msra.mxu0 0.0
    %1948 = vmatprep.subr.mxu0 0.0
    %1949 = vmatpush1.msra.mxu0 0.0
    %1950 = vmatprep.mubr.f32.mxu0 0.0
    %1951 = vmatmul.mubr.f32.gmra.mrb[0].mxu0 %v1885
    %v1952 = vpop.f32.mrb[0].mxu0
    %v1953 = vadd.f32 %v142, %v1952
    %v1954 = vpop.f32.mrb[0].mxu0
    %1955 = vdwg.mxu0
    %v1956 = vxor.u32 %v1953, 2147483648
    %v1957 = vmul.f32 %v1956, 1.442695
    %v1958 = vpow.pop %v1957
    %v1959 = vadd.f32 %v1958, 1.0
    %v1960 = vrcp.pop %v1959
    %v1961 = vmul.f32 1.0, %v1960
    %v1962 = vmul.f32 %v1961, 2.0
    %v1963 = vsub.f32 %v1962, 1.0
    %v1964 = vsel %vm135, %v1963, %v1961
    %1965 = vrot.lane.b32.xlu0 %v1964, 64
    %v1966 = vpop.permute.xlu0 %1965
    %1967 = vrot.lane.b32.xlu0 %v1964, 96
    %v1968 = vpop.permute.xlu0 %1967
    %1969 = vrot.lane.b32.xlu0 %v1964, 32
    %v1970 = vpop.permute.xlu0 %1969
    %v1971 = vmul.f32 %v1964, %v1761
    %v1972 = vmul.f32 %v1968, %v1970
    %v1973 = vadd.f32 %v1971, %v1972
    %v1974 = vtanh.pop %v1973
    %v1975 = vmul.f32 %v1966, %v1974
    %v1976 = vsel %vm136, %v1975, 0.0
    %v1977 = vld [vmem:[%s6] sm:$0x7]
    %v1978 = vld [vmem:[%s7] sm:$0x1]
    %v1980 = vlaneseq
    %v1981 = vshrl.u32 %v1980, 7
    %v1982 = vsub.s32 0, %v1981
    %v1983 = vrot.slane %v1978, %v1982
    %v1985 = vrot.slane %v158, 7
    %v1986 = vrot.slane %v159, 6
    %v1987 = vsel %vm365, %v1986, %v1985
    %v1988 = vsel %vm168, %v1987, 0
    %v1991 = vsel %vm175, %v1977, 0
    %1993 = vmatprep.subr.mxu0 0.0
    %1994 = vmatpush1.msra.mxu0 %v1991
    %1995 = vmatprep.subr.mxu0 0.0
    %1996 = vmatpush1.msra.mxu0 0.0
    %1997 = vmatprep.subr.mxu0 0.0
    %1998 = vmatpush1.msra.mxu0 0.0
    %1999 = vmatprep.subr.mxu0 0.0
    %2000 = vmatpush1.msra.mxu0 0.0
    %2001 = vmatprep.subr.mxu0 0.0
    %2002 = vmatpush1.msra.mxu0 0.0
    %2003 = vmatprep.subr.mxu0 0.0
    %2004 = vmatpush1.msra.mxu0 0.0
    %2005 = vmatprep.subr.mxu0 0.0
    %2006 = vmatpush1.msra.mxu0 0.0
    %2007 = vmatprep.subr.mxu0 0.0
    %2008 = vmatpush1.msra.mxu0 0.0
    %2009 = vmatprep.subr.mxu0 0.0
    %2010 = vmatpush1.msra.mxu0 0.0
    %2011 = vmatprep.subr.mxu0 0.0
    %2012 = vmatpush1.msra.mxu0 0.0
    %2013 = vmatprep.subr.mxu0 0.0
    %2014 = vmatpush1.msra.mxu0 0.0
    %2015 = vmatprep.subr.mxu0 0.0
    %2016 = vmatpush1.msra.mxu0 0.0
    %2017 = vmatprep.subr.mxu0 0.0
    %2018 = vmatpush1.msra.mxu0 0.0
    %2019 = vmatprep.subr.mxu0 0.0
    %2020 = vmatpush1.msra.mxu0 0.0
    %2021 = vmatprep.subr.mxu0 0.0
    %2022 = vmatpush1.msra.mxu0 0.0
    %2023 = vmatprep.subr.mxu0 0.0
    %2024 = vmatpush1.msra.mxu0 0.0
    %2025 = vmatprep.subr.mxu0 0.0
    %2026 = vmatpush1.msra.mxu0 0.0
    %2027 = vmatprep.subr.mxu0 0.0
    %2028 = vmatpush1.msra.mxu0 0.0
    %2029 = vmatprep.subr.mxu0 0.0
    %2030 = vmatpush1.msra.mxu0 0.0
    %2031 = vmatprep.subr.mxu0 0.0
    %2032 = vmatpush1.msra.mxu0 0.0
    %2033 = vmatprep.subr.mxu0 0.0
    %2034 = vmatpush1.msra.mxu0 0.0
    %2035 = vmatprep.subr.mxu0 0.0
    %2036 = vmatpush1.msra.mxu0 0.0
    %2037 = vmatprep.subr.mxu0 0.0
    %2038 = vmatpush1.msra.mxu0 0.0
    %2039 = vmatprep.subr.mxu0 0.0
    %2040 = vmatpush1.msra.mxu0 0.0
    %2041 = vmatprep.subr.mxu0 0.0
    %2042 = vmatpush1.msra.mxu0 0.0
    %2043 = vmatprep.subr.mxu0 0.0
    %2044 = vmatpush1.msra.mxu0 0.0
    %2045 = vmatprep.subr.mxu0 0.0
    %2046 = vmatpush1.msra.mxu0 0.0
    %2047 = vmatprep.subr.mxu0 0.0
    %2048 = vmatpush1.msra.mxu0 0.0
    %2049 = vmatprep.subr.mxu0 0.0
    %2050 = vmatpush1.msra.mxu0 0.0
    %2051 = vmatprep.subr.mxu0 0.0
    %2052 = vmatpush1.msra.mxu0 0.0
    %2053 = vmatprep.subr.mxu0 0.0
    %2054 = vmatpush1.msra.mxu0 0.0
    %2055 = vmatprep.subr.mxu0 0.0
    %2056 = vmatpush1.msra.mxu0 0.0
    %2057 = vmatprep.mubr.f32.mxu0 0.0
    %2058 = vmatmul.mubr.f32.gmra.mrb[0].mxu0 %v1988
    %v2059 = vpop.f32.mrb[0].mxu0
    %v2060 = vadd.f32 %v1983, %v2059
    %v2061 = vpop.f32.mrb[0].mxu0
    %2062 = vdwg.mxu0
    %v2063 = vld [vmem:[#allocation7] sm:$0xff]
    %v2064 = vld [vmem:[#allocation7 + $0x8] sm:$0xff]
    %v2065 = vld [vmem:[#allocation7 + $0x10] sm:$0xff]
    %v2066 = vld [vmem:[#allocation7 + $0x18] sm:$0xff]
    %v2067 = vld [vmem:[#allocation7 + $0x20] sm:$0xff]
    %v2068 = vld [vmem:[#allocation7 + $0x28] sm:$0xff]
    %v2069 = vld [vmem:[#allocation7 + $0x30] sm:$0xff]
    %v2070 = vld [vmem:[#allocation7 + $0x38] sm:$0xff]
    %v2071 = vld [vmem:[#allocation7 + $0x40] sm:$0xff]
    %v2072 = vld [vmem:[#allocation7 + $0x48] sm:$0xff]
    %v2073 = vld [vmem:[#allocation7 + $0x50] sm:$0xff]
    %v2074 = vld [vmem:[#allocation7 + $0x58] sm:$0xff]
    %v2075 = vld [vmem:[#allocation7 + $0x60] sm:$0xff]
    %v2076 = vld [vmem:[#allocation7 + $0x68] sm:$0xff]
    %v2077 = vld [vmem:[#allocation7 + $0x70] sm:$0xff]
    %v2078 = vld [vmem:[#allocation7 + $0x78] sm:$0xff]
    %2079 = vmatprep.subr.mxu0 0.0
    %2080 = vmatpush1.msra.mxu0 %v2063
    %2081 = vmatprep.subr.mxu0 0.0
    %2082 = vmatpush1.msra.mxu0 %v2064
    %2083 = vmatprep.subr.mxu0 0.0
    %2084 = vmatpush1.msra.mxu0 %v2065
    %2085 = vmatprep.subr.mxu0 0.0
    %2086 = vmatpush1.msra.mxu0 %v2066
    %2087 = vmatprep.subr.mxu0 0.0
    %2088 = vmatpush1.msra.mxu0 %v2067
    %2089 = vmatprep.subr.mxu0 0.0
    %2090 = vmatpush1.msra.mxu0 %v2068
    %2091 = vmatprep.subr.mxu0 0.0
    %2092 = vmatpush1.msra.mxu0 %v2069
    %2093 = vmatprep.subr.mxu0 0.0
    %2094 = vmatpush1.msra.mxu0 %v2070
    %2095 = vmatprep.subr.mxu0 0.0
    %2096 = vmatpush1.msra.mxu0 %v2071
    %2097 = vmatprep.subr.mxu0 0.0
    %2098 = vmatpush1.msra.mxu0 %v2072
    %2099 = vmatprep.subr.mxu0 0.0
    %2100 = vmatpush1.msra.mxu0 %v2073
    %2101 = vmatprep.subr.mxu0 0.0
    %2102 = vmatpush1.msra.mxu0 %v2074
    %2103 = vmatprep.subr.mxu0 0.0
    %2104 = vmatpush1.msra.mxu0 %v2075
    %2105 = vmatprep.subr.mxu0 0.0
    %2106 = vmatpush1.msra.mxu0 %v2076
    %2107 = vmatprep.subr.mxu0 0.0
    %2108 = vmatpush1.msra.mxu0 %v2077
    %2109 = vmatprep.subr.mxu0 0.0
    %2110 = vmatpush1.msra.mxu0 %v2078
    %2111 = vmatprep.subr.mxu0 0.0
    %2112 = vmatpush1.msra.mxu0 0.0
    %2113 = vmatprep.subr.mxu0 0.0
    %2114 = vmatpush1.msra.mxu0 0.0
    %2115 = vmatprep.subr.mxu0 0.0
    %2116 = vmatpush1.msra.mxu0 0.0
    %2117 = vmatprep.subr.mxu0 0.0
    %2118 = vmatpush1.msra.mxu0 0.0
    %2119 = vmatprep.subr.mxu0 0.0
    %2120 = vmatpush1.msra.mxu0 0.0
    %2121 = vmatprep.subr.mxu0 0.0
    %2122 = vmatpush1.msra.mxu0 0.0
    %2123 = vmatprep.subr.mxu0 0.0
    %2124 = vmatpush1.msra.mxu0 0.0
    %2125 = vmatprep.subr.mxu0 0.0
    %2126 = vmatpush1.msra.mxu0 0.0
    %2127 = vmatprep.subr.mxu0 0.0
    %2128 = vmatpush1.msra.mxu0 0.0
    %2129 = vmatprep.subr.mxu0 0.0
    %2130 = vmatpush1.msra.mxu0 0.0
    %2131 = vmatprep.subr.mxu0 0.0
    %2132 = vmatpush1.msra.mxu0 0.0
    %2133 = vmatprep.subr.mxu0 0.0
    %2134 = vmatpush1.msra.mxu0 0.0
    %2135 = vmatprep.subr.mxu0 0.0
    %2136 = vmatpush1.msra.mxu0 0.0
    %2137 = vmatprep.subr.mxu0 0.0
    %2138 = vmatpush1.msra.mxu0 0.0
    %2139 = vmatprep.subr.mxu0 0.0
    %2140 = vmatpush1.msra.mxu0 0.0
    %2141 = vmatprep.subr.mxu0 0.0
    %2142 = vmatpush1.msra.mxu0 0.0
    %2143 = vmatprep.mubr.f32.mxu0 0.0
    %2144 = vmatmul.mubr.f32.gmra.mrb[0].mxu0 %v1882
    %v2145 = vpop.f32.mrb[0].mxu0
    %v2146 = vadd.f32 0.0, %v2145
    %v2147 = vpop.f32.mrb[0].mxu0
    %2148 = vdwg.mxu0
    %v2149 = vadd.f32 %v2060, %v2146
    %v2150 = vxor.u32 %v2149, 2147483648
    %v2151 = vmul.f32 %v2150, 1.442695
    %v2152 = vpow.pop %v2151
    %v2153 = vadd.f32 %v2152, 1.0
    %v2154 = vrcp.pop %v2153
    %v2155 = vmul.f32 1.0, %v2154
    %v2156 = vmul.f32 %v2155, 2.0
    %v2157 = vsub.f32 %v2156, 1.0
    %v2158 = vsel %vm135, %v2157, %v2155
    %2159 = vrot.lane.b32.xlu0 %v2158, 64
    %v2160 = vpop.permute.xlu0 %2159
    %2161 = vrot.lane.b32.xlu0 %v2158, 96
    %v2162 = vpop.permute.xlu0 %2161
    %2163 = vrot.lane.b32.xlu0 %v2158, 32
    %v2164 = vpop.permute.xlu0 %2163
    %v2165 = vmul.f32 %v2158, %v1879
    %v2166 = vmul.f32 %v2162, %v2164
    %v2167 = vadd.f32 %v2165, %v2166
    %v2168 = vtanh.pop %v2167
    %v2169 = vmul.f32 %v2160, %v2168
    %v2170 = vsel %vm136, %v2169, 0.0
    %2171 = vrot.lane.b32.xlu0 %v1976, 32
    %v2172 = vpop.permute.xlu0 %2171
    %v2173 = vadd.f32 %v2170, %v2172
    %v2174 = vld [vmem:[#allocation10] sm:$0xff]
    %v2175 = vld [vmem:[#allocation10 + $0x8] sm:$0xff]
    %v2176 = vld [vmem:[#allocation10 + $0x10] sm:$0xff]
    %v2177 = vld [vmem:[#allocation10 + $0x18] sm:$0xff]
    %v2178 = vld [vmem:[#allocation10 + $0x20] sm:$0xff]
    %v2179 = vld [vmem:[#allocation10 + $0x28] sm:$0xff]
    %v2180 = vld [vmem:[#allocation10 + $0x30] sm:$0xff]
    %v2181 = vld [vmem:[#allocation10 + $0x38] sm:$0xff]
    %v2182 = vld [vmem:[#allocation10 + $0x40] sm:$0xff]
    %v2183 = vld [vmem:[#allocation10 + $0x48] sm:$0xff]
    %v2184 = vld [vmem:[#allocation10 + $0x50] sm:$0xff]
    %v2185 = vld [vmem:[#allocation10 + $0x58] sm:$0xff]
    %v2186 = vld [vmem:[#allocation10 + $0x60] sm:$0xff]
    %v2187 = vld [vmem:[#allocation10 + $0x68] sm:$0xff]
    %v2188 = vld [vmem:[#allocation10 + $0x70] sm:$0xff]
    %v2189 = vld [vmem:[#allocation10 + $0x78] sm:$0xff]
    %2190 = vmatprep.subr.mxu0 0.0
    %2191 = vmatpush1.msra.mxu0 %v2174
    %2192 = vmatprep.subr.mxu0 0.0
    %2193 = vmatpush1.msra.mxu0 %v2175
    %2194 = vmatprep.subr.mxu0 0.0
    %2195 = vmatpush1.msra.mxu0 %v2176
    %2196 = vmatprep.subr.mxu0 0.0
    %2197 = vmatpush1.msra.mxu0 %v2177
    %2198 = vmatprep.subr.mxu0 0.0
    %2199 = vmatpush1.msra.mxu0 %v2178
    %2200 = vmatprep.subr.mxu0 0.0
    %2201 = vmatpush1.msra.mxu0 %v2179
    %2202 = vmatprep.subr.mxu0 0.0
    %2203 = vmatpush1.msra.mxu0 %v2180
    %2204 = vmatprep.subr.mxu0 0.0
    %2205 = vmatpush1.msra.mxu0 %v2181
    %2206 = vmatprep.subr.mxu0 0.0
    %2207 = vmatpush1.msra.mxu0 %v2182
    %2208 = vmatprep.subr.mxu0 0.0
    %2209 = vmatpush1.msra.mxu0 %v2183
    %2210 = vmatprep.subr.mxu0 0.0
    %2211 = vmatpush1.msra.mxu0 %v2184
    %2212 = vmatprep.subr.mxu0 0.0
    %2213 = vmatpush1.msra.mxu0 %v2185
    %2214 = vmatprep.subr.mxu0 0.0
    %2215 = vmatpush1.msra.mxu0 %v2186
    %2216 = vmatprep.subr.mxu0 0.0
    %2217 = vmatpush1.msra.mxu0 %v2187
    %2218 = vmatprep.subr.mxu0 0.0
    %2219 = vmatpush1.msra.mxu0 %v2188
    %2220 = vmatprep.subr.mxu0 0.0
    %2221 = vmatpush1.msra.mxu0 %v2189
    %2222 = vmatprep.subr.mxu0 0.0
    %2223 = vmatpush1.msra.mxu0 0.0
    %2224 = vmatprep.subr.mxu0 0.0
    %2225 = vmatpush1.msra.mxu0 0.0
    %2226 = vmatprep.subr.mxu0 0.0
    %2227 = vmatpush1.msra.mxu0 0.0
    %2228 = vmatprep.subr.mxu0 0.0
    %2229 = vmatpush1.msra.mxu0 0.0
    %2230 = vmatprep.subr.mxu0 0.0
    %2231 = vmatpush1.msra.mxu0 0.0
    %2232 = vmatprep.subr.mxu0 0.0
    %2233 = vmatpush1.msra.mxu0 0.0
    %2234 = vmatprep.subr.mxu0 0.0
    %2235 = vmatpush1.msra.mxu0 0.0
    %2236 = vmatprep.subr.mxu0 0.0
    %2237 = vmatpush1.msra.mxu0 0.0
    %2238 = vmatprep.subr.mxu0 0.0
    %2239 = vmatpush1.msra.mxu0 0.0
    %2240 = vmatprep.subr.mxu0 0.0
    %2241 = vmatpush1.msra.mxu0 0.0
    %2242 = vmatprep.subr.mxu0 0.0
    %2243 = vmatpush1.msra.mxu0 0.0
    %2244 = vmatprep.subr.mxu0 0.0
    %2245 = vmatpush1.msra.mxu0 0.0
    %2246 = vmatprep.subr.mxu0 0.0
    %2247 = vmatpush1.msra.mxu0 0.0
    %2248 = vmatprep.subr.mxu0 0.0
    %2249 = vmatpush1.msra.mxu0 0.0
    %2250 = vmatprep.subr.mxu0 0.0
    %2251 = vmatpush1.msra.mxu0 0.0
    %2252 = vmatprep.subr.mxu0 0.0
    %2253 = vmatpush1.msra.mxu0 0.0
    %2254 = vmatprep.mubr.f32.mxu0 0.0
    %2255 = vmatmul.mubr.f32.gmra.mrb[0].mxu0 %v2173
    %v2256 = vpop.f32.mrb[0].mxu0
    %v2257 = vadd.f32 %v156, %v2256
    %v2258 = vpop.f32.mrb[0].mxu0
    %2259 = vdwg.mxu0
    %v2260 = vxor.u32 %v2257, 2147483648
    %v2261 = vmul.f32 %v2260, 1.442695
    %v2262 = vpow.pop %v2261
    %v2263 = vadd.f32 %v2262, 1.0
    %v2264 = vrcp.pop %v2263
    %v2265 = vmul.f32 1.0, %v2264
    %v2266 = vmul.f32 %v2265, 2.0
    %v2267 = vsub.f32 %v2266, 1.0
    %v2268 = vsel %vm135, %v2267, %v2265
    %2269 = vrot.lane.b32.xlu0 %v2268, 64
    %v2270 = vpop.permute.xlu0 %2269
    %2271 = vrot.lane.b32.xlu0 %v2268, 96
    %v2272 = vpop.permute.xlu0 %2271
    %2273 = vrot.lane.b32.xlu0 %v2268, 32
    %v2274 = vpop.permute.xlu0 %2273
    %v2275 = vmul.f32 %v2268, %v1973
    %v2276 = vmul.f32 %v2272, %v2274
    %v2277 = vadd.f32 %v2275, %v2276
    %v2278 = vtanh.pop %v2277
    %v2279 = vmul.f32 %v2270, %v2278
    %v2280 = vsel %vm136, %v2279, 0.0
    %2281 = vrot.lane.b32.xlu0 %v2170, 32
    %v2282 = vpop.permute.xlu0 %2281
    %v2283 = vadd.f32 %v2280, %v2282
    %v2284 = vld [vmem:[#allocation8] sm:$0xff]
    %v2285 = vld [vmem:[#allocation8 + $0x8] sm:$0xff]
    %v2286 = vld [vmem:[#allocation8 + $0x10] sm:$0xff]
    %v2287 = vld [vmem:[#allocation8 + $0x18] sm:$0xff]
    %v2288 = vld [vmem:[#allocation8 + $0x20] sm:$0xff]
    %v2289 = vld [vmem:[#allocation8 + $0x28] sm:$0xff]
    %v2290 = vld [vmem:[#allocation8 + $0x30] sm:$0xff]
    %v2291 = vld [vmem:[#allocation8 + $0x38] sm:$0xff]
    %v2292 = vld [vmem:[#allocation8 + $0x40] sm:$0xff]
    %v2293 = vld [vmem:[#allocation8 + $0x48] sm:$0xff]
    %v2294 = vld [vmem:[#allocation8 + $0x50] sm:$0xff]
    %v2295 = vld [vmem:[#allocation8 + $0x58] sm:$0xff]
    %v2296 = vld [vmem:[#allocation8 + $0x60] sm:$0xff]
    %v2297 = vld [vmem:[#allocation8 + $0x68] sm:$0xff]
    %v2298 = vld [vmem:[#allocation8 + $0x70] sm:$0xff]
    %v2299 = vld [vmem:[#allocation8 + $0x78] sm:$0xff]
    %2300 = vmatprep.subr.mxu0 0.0
    %2301 = vmatpush1.msra.mxu0 %v2284
    %2302 = vmatprep.subr.mxu0 0.0
    %2303 = vmatpush1.msra.mxu0 %v2285
    %2304 = vmatprep.subr.mxu0 0.0
    %2305 = vmatpush1.msra.mxu0 %v2286
    %2306 = vmatprep.subr.mxu0 0.0
    %2307 = vmatpush1.msra.mxu0 %v2287
    %2308 = vmatprep.subr.mxu0 0.0
    %2309 = vmatpush1.msra.mxu0 %v2288
    %2310 = vmatprep.subr.mxu0 0.0
    %2311 = vmatpush1.msra.mxu0 %v2289
    %2312 = vmatprep.subr.mxu0 0.0
    %2313 = vmatpush1.msra.mxu0 %v2290
    %2314 = vmatprep.subr.mxu0 0.0
    %2315 = vmatpush1.msra.mxu0 %v2291
    %2316 = vmatprep.subr.mxu0 0.0
    %2317 = vmatpush1.msra.mxu0 %v2292
    %2318 = vmatprep.subr.mxu0 0.0
    %2319 = vmatpush1.msra.mxu0 %v2293
    %2320 = vmatprep.subr.mxu0 0.0
    %2321 = vmatpush1.msra.mxu0 %v2294
    %2322 = vmatprep.subr.mxu0 0.0
    %2323 = vmatpush1.msra.mxu0 %v2295
    %2324 = vmatprep.subr.mxu0 0.0
    %2325 = vmatpush1.msra.mxu0 %v2296
    %2326 = vmatprep.subr.mxu0 0.0
    %2327 = vmatpush1.msra.mxu0 %v2297
    %2328 = vmatprep.subr.mxu0 0.0
    %2329 = vmatpush1.msra.mxu0 %v2298
    %2330 = vmatprep.subr.mxu0 0.0
    %2331 = vmatpush1.msra.mxu0 %v2299
    %2332 = vmatprep.subr.mxu0 0.0
    %2333 = vmatpush1.msra.mxu0 0.0
    %2334 = vmatprep.subr.mxu0 0.0
    %2335 = vmatpush1.msra.mxu0 0.0
    %2336 = vmatprep.subr.mxu0 0.0
    %2337 = vmatpush1.msra.mxu0 0.0
    %2338 = vmatprep.subr.mxu0 0.0
    %2339 = vmatpush1.msra.mxu0 0.0
    %2340 = vmatprep.subr.mxu0 0.0
    %2341 = vmatpush1.msra.mxu0 0.0
    %2342 = vmatprep.subr.mxu0 0.0
    %2343 = vmatpush1.msra.mxu0 0.0
    %2344 = vmatprep.subr.mxu0 0.0
    %2345 = vmatpush1.msra.mxu0 0.0
    %2346 = vmatprep.subr.mxu0 0.0
    %2347 = vmatpush1.msra.mxu0 0.0
    %2348 = vmatprep.subr.mxu0 0.0
    %2349 = vmatpush1.msra.mxu0 0.0
    %2350 = vmatprep.subr.mxu0 0.0
    %2351 = vmatpush1.msra.mxu0 0.0
    %2352 = vmatprep.subr.mxu0 0.0
    %2353 = vmatpush1.msra.mxu0 0.0
    %2354 = vmatprep.subr.mxu0 0.0
    %2355 = vmatpush1.msra.mxu0 0.0
    %2356 = vmatprep.subr.mxu0 0.0
    %2357 = vmatpush1.msra.mxu0 0.0
    %2358 = vmatprep.subr.mxu0 0.0
    %2359 = vmatpush1.msra.mxu0 0.0
    %2360 = vmatprep.subr.mxu0 0.0
    %2361 = vmatpush1.msra.mxu0 0.0
    %2362 = vmatprep.subr.mxu0 0.0
    %2363 = vmatpush1.msra.mxu0 0.0
    %2364 = vmatprep.mubr.f32.mxu0 0.0
    %2365 = vmatmul.mubr.f32.gmra.mrb[0].mxu0 %v2283
    %v2366 = vpop.f32.mrb[0].mxu0
    %v2367 = vadd.f32 %v149, %v2366
    %v2368 = vpop.f32.mrb[0].mxu0
    %2369 = vdwg.mxu0
    %v2370 = vxor.u32 %v2367, 2147483648
    %v2371 = vmul.f32 %v2370, 1.442695
    %v2372 = vpow.pop %v2371
    %v2373 = vadd.f32 %v2372, 1.0
    %v2374 = vrcp.pop %v2373
    %v2375 = vmul.f32 1.0, %v2374
    %v2376 = vmul.f32 %v2375, 2.0
    %v2377 = vsub.f32 %v2376, 1.0
    %v2378 = vsel %vm135, %v2377, %v2375
    %2379 = vrot.lane.b32.xlu0 %v2378, 64
    %v2380 = vpop.permute.xlu0 %2379
    %2381 = vrot.lane.b32.xlu0 %v2378, 96
    %v2382 = vpop.permute.xlu0 %2381
    %2383 = vrot.lane.b32.xlu0 %v2378, 32
    %v2384 = vpop.permute.xlu0 %2383
    %v2385 = vmul.f32 %v2378, %v2167
    %v2386 = vmul.f32 %v2382, %v2384
    %v2387 = vadd.f32 %v2385, %v2386
    %v2388 = vtanh.pop %v2387
    %v2389 = vmul.f32 %v2380, %v2388
    %v2390 = vsel %vm136, %v2389, 0.0
    %2391 = vrot.lane.b32.xlu0 %v2280, 32
    %v2392 = vpop.permute.xlu0 %2391
    %v2393 = vadd.f32 %v2390, %v2392
    %2394 = vmatprep.subr.mxu0 0.0
    %2395 = vmatpush1.msra.mxu0 %v2174
    %2396 = vmatprep.subr.mxu0 0.0
    %2397 = vmatpush1.msra.mxu0 %v2175
    %2398 = vmatprep.subr.mxu0 0.0
    %2399 = vmatpush1.msra.mxu0 %v2176
    %2400 = vmatprep.subr.mxu0 0.0
    %2401 = vmatpush1.msra.mxu0 %v2177
    %2402 = vmatprep.subr.mxu0 0.0
    %2403 = vmatpush1.msra.mxu0 %v2178
    %2404 = vmatprep.subr.mxu0 0.0
    %2405 = vmatpush1.msra.mxu0 %v2179
    %2406 = vmatprep.subr.mxu0 0.0
    %2407 = vmatpush1.msra.mxu0 %v2180
    %2408 = vmatprep.subr.mxu0 0.0
    %2409 = vmatpush1.msra.mxu0 %v2181
    %2410 = vmatprep.subr.mxu0 0.0
    %2411 = vmatpush1.msra.mxu0 %v2182
    %2412 = vmatprep.subr.mxu0 0.0
    %2413 = vmatpush1.msra.mxu0 %v2183
    %2414 = vmatprep.subr.mxu0 0.0
    %2415 = vmatpush1.msra.mxu0 %v2184
    %2416 = vmatprep.subr.mxu0 0.0
    %2417 = vmatpush1.msra.mxu0 %v2185
    %2418 = vmatprep.subr.mxu0 0.0
    %2419 = vmatpush1.msra.mxu0 %v2186
    %2420 = vmatprep.subr.mxu0 0.0
    %2421 = vmatpush1.msra.mxu0 %v2187
    %2422 = vmatprep.subr.mxu0 0.0
    %2423 = vmatpush1.msra.mxu0 %v2188
    %2424 = vmatprep.subr.mxu0 0.0
    %2425 = vmatpush1.msra.mxu0 %v2189
    %2426 = vmatprep.subr.mxu0 0.0
    %2427 = vmatpush1.msra.mxu0 0.0
    %2428 = vmatprep.subr.mxu0 0.0
    %2429 = vmatpush1.msra.mxu0 0.0
    %2430 = vmatprep.subr.mxu0 0.0
    %2431 = vmatpush1.msra.mxu0 0.0
    %2432 = vmatprep.subr.mxu0 0.0
    %2433 = vmatpush1.msra.mxu0 0.0
    %2434 = vmatprep.subr.mxu0 0.0
    %2435 = vmatpush1.msra.mxu0 0.0
    %2436 = vmatprep.subr.mxu0 0.0
    %2437 = vmatpush1.msra.mxu0 0.0
    %2438 = vmatprep.subr.mxu0 0.0
    %2439 = vmatpush1.msra.mxu0 0.0
    %2440 = vmatprep.subr.mxu0 0.0
    %2441 = vmatpush1.msra.mxu0 0.0
    %2442 = vmatprep.subr.mxu0 0.0
    %2443 = vmatpush1.msra.mxu0 0.0
    %2444 = vmatprep.subr.mxu0 0.0
    %2445 = vmatpush1.msra.mxu0 0.0
    %2446 = vmatprep.subr.mxu0 0.0
    %2447 = vmatpush1.msra.mxu0 0.0
    %2448 = vmatprep.subr.mxu0 0.0
    %2449 = vmatpush1.msra.mxu0 0.0
    %2450 = vmatprep.subr.mxu0 0.0
    %2451 = vmatpush1.msra.mxu0 0.0
    %2452 = vmatprep.subr.mxu0 0.0
    %2453 = vmatpush1.msra.mxu0 0.0
    %2454 = vmatprep.subr.mxu0 0.0
    %2455 = vmatpush1.msra.mxu0 0.0
    %2456 = vmatprep.subr.mxu0 0.0
    %2457 = vmatpush1.msra.mxu0 0.0
    %2458 = vmatprep.mubr.f32.mxu0 0.0
    %2459 = vmatmul.mubr.f32.gmra.mrb[0].mxu0 %v2393
    %v2460 = vpop.f32.mrb[0].mxu0
    %v2461 = vadd.f32 %v156, %v2460
    %v2462 = vpop.f32.mrb[0].mxu0
    %2463 = vdwg.mxu0
    %v2464 = vxor.u32 %v2461, 2147483648
    %v2465 = vmul.f32 %v2464, 1.442695
    %v2466 = vpow.pop %v2465
    %v2467 = vadd.f32 %v2466, 1.0
    %v2468 = vrcp.pop %v2467
    %v2469 = vmul.f32 1.0, %v2468
    %v2470 = vmul.f32 %v2469, 2.0
    %v2471 = vsub.f32 %v2470, 1.0
    %v2472 = vsel %vm135, %v2471, %v2469
    %2473 = vrot.lane.b32.xlu0 %v2472, 64
    %v2474 = vpop.permute.xlu0 %2473
    %2475 = vrot.lane.b32.xlu0 %v2472, 96
    %v2476 = vpop.permute.xlu0 %2475
    %2477 = vrot.lane.b32.xlu0 %v2472, 32
    %v2478 = vpop.permute.xlu0 %2477
    %v2479 = vmul.f32 %v2472, %v2277
    %v2480 = vmul.f32 %v2476, %v2478
    %v2481 = vadd.f32 %v2479, %v2480
    %v2482 = vtanh.pop %v2481
    %v2483 = vmul.f32 %v2474, %v2482
    %v2484 = vsel %vm136, %v2483, 0.0
    %2485 = vrot.lane.b32.xlu0 %v2390, 32
    %v2486 = vpop.permute.xlu0 %2485
    %v2487 = vadd.f32 %v2484, %v2486
    %2488 = vmatprep.subr.mxu0 0.0
    %2489 = vmatpush1.msra.mxu0 %v2284
    %2490 = vmatprep.subr.mxu0 0.0
    %2491 = vmatpush1.msra.mxu0 %v2285
    %2492 = vmatprep.subr.mxu0 0.0
    %2493 = vmatpush1.msra.mxu0 %v2286
    %2494 = vmatprep.subr.mxu0 0.0
    %2495 = vmatpush1.msra.mxu0 %v2287
    %2496 = vmatprep.subr.mxu0 0.0
    %2497 = vmatpush1.msra.mxu0 %v2288
    %2498 = vmatprep.subr.mxu0 0.0
    %2499 = vmatpush1.msra.mxu0 %v2289
    %2500 = vmatprep.subr.mxu0 0.0
    %2501 = vmatpush1.msra.mxu0 %v2290
    %2502 = vmatprep.subr.mxu0 0.0
    %2503 = vmatpush1.msra.mxu0 %v2291
    %2504 = vmatprep.subr.mxu0 0.0
    %2505 = vmatpush1.msra.mxu0 %v2292
    %2506 = vmatprep.subr.mxu0 0.0
    %2507 = vmatpush1.msra.mxu0 %v2293
    %2508 = vmatprep.subr.mxu0 0.0
    %2509 = vmatpush1.msra.mxu0 %v2294
    %2510 = vmatprep.subr.mxu0 0.0
    %2511 = vmatpush1.msra.mxu0 %v2295
    %2512 = vmatprep.subr.mxu0 0.0
    %2513 = vmatpush1.msra.mxu0 %v2296
    %2514 = vmatprep.subr.mxu0 0.0
    %2515 = vmatpush1.msra.mxu0 %v2297
    %2516 = vmatprep.subr.mxu0 0.0
    %2517 = vmatpush1.msra.mxu0 %v2298
    %2518 = vmatprep.subr.mxu0 0.0
    %2519 = vmatpush1.msra.mxu0 %v2299
    %2520 = vmatprep.subr.mxu0 0.0
    %2521 = vmatpush1.msra.mxu0 0.0
    %2522 = vmatprep.subr.mxu0 0.0
    %2523 = vmatpush1.msra.mxu0 0.0
    %2524 = vmatprep.subr.mxu0 0.0
    %2525 = vmatpush1.msra.mxu0 0.0
    %2526 = vmatprep.subr.mxu0 0.0
    %2527 = vmatpush1.msra.mxu0 0.0
    %2528 = vmatprep.subr.mxu0 0.0
    %2529 = vmatpush1.msra.mxu0 0.0
    %2530 = vmatprep.subr.mxu0 0.0
    %2531 = vmatpush1.msra.mxu0 0.0
    %2532 = vmatprep.subr.mxu0 0.0
    %2533 = vmatpush1.msra.mxu0 0.0
    %2534 = vmatprep.subr.mxu0 0.0
    %2535 = vmatpush1.msra.mxu0 0.0
    %2536 = vmatprep.subr.mxu0 0.0
    %2537 = vmatpush1.msra.mxu0 0.0
    %2538 = vmatprep.subr.mxu0 0.0
    %2539 = vmatpush1.msra.mxu0 0.0
    %2540 = vmatprep.subr.mxu0 0.0
    %2541 = vmatpush1.msra.mxu0 0.0
    %2542 = vmatprep.subr.mxu0 0.0
    %2543 = vmatpush1.msra.mxu0 0.0
    %2544 = vmatprep.subr.mxu0 0.0
    %2545 = vmatpush1.msra.mxu0 0.0
    %2546 = vmatprep.subr.mxu0 0.0
    %2547 = vmatpush1.msra.mxu0 0.0
    %2548 = vmatprep.subr.mxu0 0.0
    %2549 = vmatpush1.msra.mxu0 0.0
    %2550 = vmatprep.subr.mxu0 0.0
    %2551 = vmatpush1.msra.mxu0 0.0
    %2552 = vmatprep.mubr.f32.mxu0 0.0
    %2553 = vmatmul.mubr.f32.gmra.mrb[0].mxu0 %v2487
    %v2554 = vpop.f32.mrb[0].mxu0
    %v2555 = vadd.f32 %v149, %v2554
    %v2556 = vpop.f32.mrb[0].mxu0
    %2557 = vdwg.mxu0
    %v2558 = vxor.u32 %v2555, 2147483648
    %v2559 = vmul.f32 %v2558, 1.442695
    %v2560 = vpow.pop %v2559
    %v2561 = vadd.f32 %v2560, 1.0
    %v2562 = vrcp.pop %v2561
    %v2563 = vmul.f32 1.0, %v2562
    %v2564 = vmul.f32 %v2563, 2.0
    %v2565 = vsub.f32 %v2564, 1.0
    %v2566 = vsel %vm135, %v2565, %v2563
    %2567 = vrot.lane.b32.xlu0 %v2566, 64
    %v2568 = vpop.permute.xlu0 %2567
    %2569 = vrot.lane.b32.xlu0 %v2566, 96
    %v2570 = vpop.permute.xlu0 %2569
    %2571 = vrot.lane.b32.xlu0 %v2566, 32
    %v2572 = vpop.permute.xlu0 %2571
    %v2573 = vmul.f32 %v2566, %v2387
    %v2574 = vmul.f32 %v2570, %v2572
    %v2575 = vadd.f32 %v2573, %v2574
    %v2576 = vtanh.pop %v2575
    %v2577 = vmul.f32 %v2568, %v2576
    %v2578 = vsel %vm136, %v2577, 0.0
    %2579 = vrot.lane.b32.xlu0 %v2484, 32
    %v2580 = vpop.permute.xlu0 %2579
    %v2581 = vadd.f32 %v2578, %v2580
    %2582 = vmatprep.subr.mxu0 0.0
    %2583 = vmatpush1.msra.mxu0 %v2174
    %2584 = vmatprep.subr.mxu0 0.0
    %2585 = vmatpush1.msra.mxu0 %v2175
    %2586 = vmatprep.subr.mxu0 0.0
    %2587 = vmatpush1.msra.mxu0 %v2176
    %2588 = vmatprep.subr.mxu0 0.0
    %2589 = vmatpush1.msra.mxu0 %v2177
    %2590 = vmatprep.subr.mxu0 0.0
    %2591 = vmatpush1.msra.mxu0 %v2178
    %2592 = vmatprep.subr.mxu0 0.0
    %2593 = vmatpush1.msra.mxu0 %v2179
    %2594 = vmatprep.subr.mxu0 0.0
    %2595 = vmatpush1.msra.mxu0 %v2180
    %2596 = vmatprep.subr.mxu0 0.0
    %2597 = vmatpush1.msra.mxu0 %v2181
    %2598 = vmatprep.subr.mxu0 0.0
    %2599 = vmatpush1.msra.mxu0 %v2182
    %2600 = vmatprep.subr.mxu0 0.0
    %2601 = vmatpush1.msra.mxu0 %v2183
    %2602 = vmatprep.subr.mxu0 0.0
    %2603 = vmatpush1.msra.mxu0 %v2184
    %2604 = vmatprep.subr.mxu0 0.0
    %2605 = vmatpush1.msra.mxu0 %v2185
    %2606 = vmatprep.subr.mxu0 0.0
    %2607 = vmatpush1.msra.mxu0 %v2186
    %2608 = vmatprep.subr.mxu0 0.0
    %2609 = vmatpush1.msra.mxu0 %v2187
    %2610 = vmatprep.subr.mxu0 0.0
    %2611 = vmatpush1.msra.mxu0 %v2188
    %2612 = vmatprep.subr.mxu0 0.0
    %2613 = vmatpush1.msra.mxu0 %v2189
    %2614 = vmatprep.subr.mxu0 0.0
    %2615 = vmatpush1.msra.mxu0 0.0
    %2616 = vmatprep.subr.mxu0 0.0
    %2617 = vmatpush1.msra.mxu0 0.0
    %2618 = vmatprep.subr.mxu0 0.0
    %2619 = vmatpush1.msra.mxu0 0.0
    %2620 = vmatprep.subr.mxu0 0.0
    %2621 = vmatpush1.msra.mxu0 0.0
    %2622 = vmatprep.subr.mxu0 0.0
    %2623 = vmatpush1.msra.mxu0 0.0
    %2624 = vmatprep.subr.mxu0 0.0
    %2625 = vmatpush1.msra.mxu0 0.0
    %2626 = vmatprep.subr.mxu0 0.0
    %2627 = vmatpush1.msra.mxu0 0.0
    %2628 = vmatprep.subr.mxu0 0.0
    %2629 = vmatpush1.msra.mxu0 0.0
    %2630 = vmatprep.subr.mxu0 0.0
    %2631 = vmatpush1.msra.mxu0 0.0
    %2632 = vmatprep.subr.mxu0 0.0
    %2633 = vmatpush1.msra.mxu0 0.0
    %2634 = vmatprep.subr.mxu0 0.0
    %2635 = vmatpush1.msra.mxu0 0.0
    %2636 = vmatprep.subr.mxu0 0.0
    %2637 = vmatpush1.msra.mxu0 0.0
    %2638 = vmatprep.subr.mxu0 0.0
    %2639 = vmatpush1.msra.mxu0 0.0
    %2640 = vmatprep.subr.mxu0 0.0
    %2641 = vmatpush1.msra.mxu0 0.0
    %2642 = vmatprep.subr.mxu0 0.0
    %2643 = vmatpush1.msra.mxu0 0.0
    %2644 = vmatprep.subr.mxu0 0.0
    %2645 = vmatpush1.msra.mxu0 0.0
    %2646 = vmatprep.mubr.f32.mxu0 0.0
    %2647 = vmatmul.mubr.f32.gmra.mrb[0].mxu0 %v2581
    %v2648 = vpop.f32.mrb[0].mxu0
    %v2649 = vadd.f32 %v156, %v2648
    %v2650 = vpop.f32.mrb[0].mxu0
    %2651 = vdwg.mxu0
    %v2652 = vxor.u32 %v2649, 2147483648
    %v2653 = vmul.f32 %v2652, 1.442695
    %v2654 = vpow.pop %v2653
    %v2655 = vadd.f32 %v2654, 1.0
    %v2656 = vrcp.pop %v2655
    %v2657 = vmul.f32 1.0, %v2656
    %v2658 = vmul.f32 %v2657, 2.0
    %v2659 = vsub.f32 %v2658, 1.0
    %v2660 = vsel %vm135, %v2659, %v2657
    %2661 = vrot.lane.b32.xlu0 %v2660, 64
    %v2662 = vpop.permute.xlu0 %2661
    %2663 = vrot.lane.b32.xlu0 %v2660, 96
    %v2664 = vpop.permute.xlu0 %2663
    %2665 = vrot.lane.b32.xlu0 %v2660, 32
    %v2666 = vpop.permute.xlu0 %2665
    %v2667 = vmul.f32 %v2660, %v2481
    %v2668 = vmul.f32 %v2664, %v2666
    %v2669 = vadd.f32 %v2667, %v2668
    %v2670 = vtanh.pop %v2669
    %v2671 = vmul.f32 %v2662, %v2670
    %v2672 = vsel %vm136, %v2671, 0.0
    %2673 = vrot.lane.b32.xlu0 %v2578, 32
    %v2674 = vpop.permute.xlu0 %2673
    %v2675 = vadd.f32 %v2672, %v2674
    %2676 = vmatprep.subr.mxu0 0.0
    %2677 = vmatpush1.msra.mxu0 %v2284
    %2678 = vmatprep.subr.mxu0 0.0
    %2679 = vmatpush1.msra.mxu0 %v2285
    %2680 = vmatprep.subr.mxu0 0.0
    %2681 = vmatpush1.msra.mxu0 %v2286
    %2682 = vmatprep.subr.mxu0 0.0
    %2683 = vmatpush1.msra.mxu0 %v2287
    %2684 = vmatprep.subr.mxu0 0.0
    %2685 = vmatpush1.msra.mxu0 %v2288
    %2686 = vmatprep.subr.mxu0 0.0
    %2687 = vmatpush1.msra.mxu0 %v2289
    %2688 = vmatprep.subr.mxu0 0.0
    %2689 = vmatpush1.msra.mxu0 %v2290
    %2690 = vmatprep.subr.mxu0 0.0
    %2691 = vmatpush1.msra.mxu0 %v2291
    %2692 = vmatprep.subr.mxu0 0.0
    %2693 = vmatpush1.msra.mxu0 %v2292
    %2694 = vmatprep.subr.mxu0 0.0
    %2695 = vmatpush1.msra.mxu0 %v2293
    %2696 = vmatprep.subr.mxu0 0.0
    %2697 = vmatpush1.msra.mxu0 %v2294
    %2698 = vmatprep.subr.mxu0 0.0
    %2699 = vmatpush1.msra.mxu0 %v2295
    %2700 = vmatprep.subr.mxu0 0.0
    %2701 = vmatpush1.msra.mxu0 %v2296
    %2702 = vmatprep.subr.mxu0 0.0
    %2703 = vmatpush1.msra.mxu0 %v2297
    %2704 = vmatprep.subr.mxu0 0.0
    %2705 = vmatpush1.msra.mxu0 %v2298
    %2706 = vmatprep.subr.mxu0 0.0
    %2707 = vmatpush1.msra.mxu0 %v2299
    %2708 = vmatprep.subr.mxu0 0.0
    %2709 = vmatpush1.msra.mxu0 0.0
    %2710 = vmatprep.subr.mxu0 0.0
    %2711 = vmatpush1.msra.mxu0 0.0
    %2712 = vmatprep.subr.mxu0 0.0
    %2713 = vmatpush1.msra.mxu0 0.0
    %2714 = vmatprep.subr.mxu0 0.0
    %2715 = vmatpush1.msra.mxu0 0.0
    %2716 = vmatprep.subr.mxu0 0.0
    %2717 = vmatpush1.msra.mxu0 0.0
    %2718 = vmatprep.subr.mxu0 0.0
    %2719 = vmatpush1.msra.mxu0 0.0
    %2720 = vmatprep.subr.mxu0 0.0
    %2721 = vmatpush1.msra.mxu0 0.0
    %2722 = vmatprep.subr.mxu0 0.0
    %2723 = vmatpush1.msra.mxu0 0.0
    %2724 = vmatprep.subr.mxu0 0.0
    %2725 = vmatpush1.msra.mxu0 0.0
    %2726 = vmatprep.subr.mxu0 0.0
    %2727 = vmatpush1.msra.mxu0 0.0
    %2728 = vmatprep.subr.mxu0 0.0
    %2729 = vmatpush1.msra.mxu0 0.0
    %2730 = vmatprep.subr.mxu0 0.0
    %2731 = vmatpush1.msra.mxu0 0.0
    %2732 = vmatprep.subr.mxu0 0.0
    %2733 = vmatpush1.msra.mxu0 0.0
    %2734 = vmatprep.subr.mxu0 0.0
    %2735 = vmatpush1.msra.mxu0 0.0
    %2736 = vmatprep.subr.mxu0 0.0
    %2737 = vmatpush1.msra.mxu0 0.0
    %2738 = vmatprep.subr.mxu0 0.0
    %2739 = vmatpush1.msra.mxu0 0.0
    %2740 = vmatprep.mubr.f32.mxu0 0.0
    %2741 = vmatmul.mubr.f32.gmra.mrb[0].mxu0 %v2675
    %v2742 = vpop.f32.mrb[0].mxu0
    %v2743 = vadd.f32 %v149, %v2742
    %v2744 = vpop.f32.mrb[0].mxu0
    %2745 = vdwg.mxu0
    %v2746 = vxor.u32 %v2743, 2147483648
    %v2747 = vmul.f32 %v2746, 1.442695
    %v2748 = vpow.pop %v2747
    %v2749 = vadd.f32 %v2748, 1.0
    %v2750 = vrcp.pop %v2749
    %v2751 = vmul.f32 1.0, %v2750
    %v2752 = vmul.f32 %v2751, 2.0
    %v2753 = vsub.f32 %v2752, 1.0
    %v2754 = vsel %vm135, %v2753, %v2751
    %2755 = vrot.lane.b32.xlu0 %v2754, 64
    %v2756 = vpop.permute.xlu0 %2755
    %2757 = vrot.lane.b32.xlu0 %v2754, 96
    %v2758 = vpop.permute.xlu0 %2757
    %2759 = vrot.lane.b32.xlu0 %v2754, 32
    %v2760 = vpop.permute.xlu0 %2759
    %v2761 = vmul.f32 %v2754, %v2575
    %v2762 = vmul.f32 %v2758, %v2760
    %v2763 = vadd.f32 %v2761, %v2762
    %v2764 = vtanh.pop %v2763
    %v2765 = vmul.f32 %v2756, %v2764
    %v2766 = vsel %vm136, %v2765, 0.0
    %2767 = vrot.lane.b32.xlu0 %v2672, 32
    %v2768 = vpop.permute.xlu0 %2767
    %v2769 = vadd.f32 %v2766, %v2768
    %2770 = vmatprep.subr.mxu0 0.0
    %2771 = vmatpush1.msra.mxu0 %v2174
    %2772 = vmatprep.subr.mxu0 0.0
    %2773 = vmatpush1.msra.mxu0 %v2175
    %2774 = vmatprep.subr.mxu0 0.0
    %2775 = vmatpush1.msra.mxu0 %v2176
    %2776 = vmatprep.subr.mxu0 0.0
    %2777 = vmatpush1.msra.mxu0 %v2177
    %2778 = vmatprep.subr.mxu0 0.0
    %2779 = vmatpush1.msra.mxu0 %v2178
    %2780 = vmatprep.subr.mxu0 0.0
    %2781 = vmatpush1.msra.mxu0 %v2179
    %2782 = vmatprep.subr.mxu0 0.0
    %2783 = vmatpush1.msra.mxu0 %v2180
    %2784 = vmatprep.subr.mxu0 0.0
    %2785 = vmatpush1.msra.mxu0 %v2181
    %2786 = vmatprep.subr.mxu0 0.0
    %2787 = vmatpush1.msra.mxu0 %v2182
    %2788 = vmatprep.subr.mxu0 0.0
    %2789 = vmatpush1.msra.mxu0 %v2183
    %2790 = vmatprep.subr.mxu0 0.0
    %2791 = vmatpush1.msra.mxu0 %v2184
    %2792 = vmatprep.subr.mxu0 0.0
    %2793 = vmatpush1.msra.mxu0 %v2185
    %2794 = vmatprep.subr.mxu0 0.0
    %2795 = vmatpush1.msra.mxu0 %v2186
    %2796 = vmatprep.subr.mxu0 0.0
    %2797 = vmatpush1.msra.mxu0 %v2187
    %2798 = vmatprep.subr.mxu0 0.0
    %2799 = vmatpush1.msra.mxu0 %v2188
    %2800 = vmatprep.subr.mxu0 0.0
    %2801 = vmatpush1.msra.mxu0 %v2189
    %2802 = vmatprep.subr.mxu0 0.0
    %2803 = vmatpush1.msra.mxu0 0.0
    %2804 = vmatprep.subr.mxu0 0.0
    %2805 = vmatpush1.msra.mxu0 0.0
    %2806 = vmatprep.subr.mxu0 0.0
    %2807 = vmatpush1.msra.mxu0 0.0
    %2808 = vmatprep.subr.mxu0 0.0
    %2809 = vmatpush1.msra.mxu0 0.0
    %2810 = vmatprep.subr.mxu0 0.0
    %2811 = vmatpush1.msra.mxu0 0.0
    %2812 = vmatprep.subr.mxu0 0.0
    %2813 = vmatpush1.msra.mxu0 0.0
    %2814 = vmatprep.subr.mxu0 0.0
    %2815 = vmatpush1.msra.mxu0 0.0
    %2816 = vmatprep.subr.mxu0 0.0
    %2817 = vmatpush1.msra.mxu0 0.0
    %2818 = vmatprep.subr.mxu0 0.0
    %2819 = vmatpush1.msra.mxu0 0.0
    %2820 = vmatprep.subr.mxu0 0.0
    %2821 = vmatpush1.msra.mxu0 0.0
    %2822 = vmatprep.subr.mxu0 0.0
    %2823 = vmatpush1.msra.mxu0 0.0
    %2824 = vmatprep.subr.mxu0 0.0
    %2825 = vmatpush1.msra.mxu0 0.0
    %2826 = vmatprep.subr.mxu0 0.0
    %2827 = vmatpush1.msra.mxu0 0.0
    %2828 = vmatprep.subr.mxu0 0.0
    %2829 = vmatpush1.msra.mxu0 0.0
    %2830 = vmatprep.subr.mxu0 0.0
    %2831 = vmatpush1.msra.mxu0 0.0
    %2832 = vmatprep.subr.mxu0 0.0
    %2833 = vmatpush1.msra.mxu0 0.0
    %2834 = vmatprep.mubr.f32.mxu0 0.0
    %2835 = vmatmul.mubr.f32.gmra.mrb[0].mxu0 %v2769
    %v2836 = vpop.f32.mrb[0].mxu0
    %v2837 = vadd.f32 %v156, %v2836
    %v2838 = vpop.f32.mrb[0].mxu0
    %2839 = vdwg.mxu0
    %v2840 = vxor.u32 %v2837, 2147483648
    %v2841 = vmul.f32 %v2840, 1.442695
    %v2842 = vpow.pop %v2841
    %v2843 = vadd.f32 %v2842, 1.0
    %v2844 = vrcp.pop %v2843
    %v2845 = vmul.f32 1.0, %v2844
    %v2846 = vmul.f32 %v2845, 2.0
    %v2847 = vsub.f32 %v2846, 1.0
    %v2848 = vsel %vm135, %v2847, %v2845
    %2849 = vrot.lane.b32.xlu0 %v2848, 64
    %v2850 = vpop.permute.xlu0 %2849
    %2851 = vrot.lane.b32.xlu0 %v2848, 96
    %v2852 = vpop.permute.xlu0 %2851
    %2853 = vrot.lane.b32.xlu0 %v2848, 32
    %v2854 = vpop.permute.xlu0 %2853
    %v2855 = vmul.f32 %v2848, %v2669
    %v2856 = vmul.f32 %v2852, %v2854
    %v2857 = vadd.f32 %v2855, %v2856
    %v2858 = vtanh.pop %v2857
    %v2859 = vmul.f32 %v2850, %v2858
    %v2860 = vsel %vm136, %v2859, 0.0
    %v2861 = vld [vmem:[#allocation11] sm:$0xff]
    %v2862 = vld [vmem:[#allocation11 + $0x8] sm:$0xff]
    %v2863 = vld [vmem:[#allocation11 + $0x10] sm:$0xff]
    %v2864 = vld [vmem:[#allocation11 + $0x18] sm:$0xff]
    %v2865 = vld [vmem:[#allocation11 + $0x20] sm:$0xff]
    %v2866 = vld [vmem:[#allocation11 + $0x28] sm:$0xff]
    %v2867 = vld [vmem:[#allocation11 + $0x30] sm:$0xff]
    %v2868 = vld [vmem:[#allocation11 + $0x38] sm:$0xff]
    %v2869 = vld [vmem:[#allocation11 + $0x40] sm:$0xff]
    %v2870 = vld [vmem:[#allocation11 + $0x48] sm:$0xff]
    %v2871 = vld [vmem:[#allocation11 + $0x50] sm:$0xff]
    %v2872 = vld [vmem:[#allocation11 + $0x58] sm:$0xff]
    %v2873 = vld [vmem:[#allocation11 + $0x60] sm:$0xff]
    %v2874 = vld [vmem:[#allocation11 + $0x68] sm:$0xff]
    %v2875 = vld [vmem:[#allocation11 + $0x70] sm:$0xff]
    %v2876 = vld [vmem:[#allocation11 + $0x78] sm:$0xff]
    %v2877 = vld [vmem:[%s14] sm:$0x1]
    %v2879 = vlaneseq
    %v2880 = vshrl.u32 %v2879, 7
    %v2881 = vsub.s32 0, %v2880
    %v2882 = vrot.slane %v2877, %v2881
    %v2888 = vcombine.low %v2280, %v2484
    %v2889 = vcombine.low %v2672, %v2860
    %v2891 = vunpack.c.l.s4 1983009808
    %v2892 = vunpack.c.0.s8 %v2891
    %v2893 = vlaneseq
    %v2894 = vshrl.u32 %v2893, 7
    %v2895 = vsub.s32 %v2892, %v2894
    %v2896 = vrot.slane %v2888, %v2895
    %v2898 = vunpack.c.l.s4 1983009808
    %v2899 = vunpack.c.0.s8 %v2898
    %v2900 = vlaneseq
    %v2901 = vshrl.u32 %v2900, 7
    %v2902 = vsub.s32 %v2899, %v2901
    %v2903 = vrot.slane %v2889, %v2902
    %v2904 = vcombine.low %v2896, %v2903
    %2906 = vmatprep.subr.mxu0 0.0
    %2907 = vmatpush1.msra.mxu0 %v2861
    %2908 = vmatprep.subr.mxu0 0.0
    %2909 = vmatpush1.msra.mxu0 %v2862
    %2910 = vmatprep.subr.mxu0 0.0
    %2911 = vmatpush1.msra.mxu0 %v2863
    %2912 = vmatprep.subr.mxu0 0.0
    %2913 = vmatpush1.msra.mxu0 %v2864
    %2914 = vmatprep.subr.mxu0 0.0
    %2915 = vmatpush1.msra.mxu0 %v2865
    %2916 = vmatprep.subr.mxu0 0.0
    %2917 = vmatpush1.msra.mxu0 %v2866
    %2918 = vmatprep.subr.mxu0 0.0
    %2919 = vmatpush1.msra.mxu0 %v2867
    %2920 = vmatprep.subr.mxu0 0.0
    %2921 = vmatpush1.msra.mxu0 %v2868
    %2922 = vmatprep.subr.mxu0 0.0
    %2923 = vmatpush1.msra.mxu0 %v2869
    %2924 = vmatprep.subr.mxu0 0.0
    %2925 = vmatpush1.msra.mxu0 %v2870
    %2926 = vmatprep.subr.mxu0 0.0
    %2927 = vmatpush1.msra.mxu0 %v2871
    %2928 = vmatprep.subr.mxu0 0.0
    %2929 = vmatpush1.msra.mxu0 %v2872
    %2930 = vmatprep.subr.mxu0 0.0
    %2931 = vmatpush1.msra.mxu0 %v2873
    %2932 = vmatprep.subr.mxu0 0.0
    %2933 = vmatpush1.msra.mxu0 %v2874
    %2934 = vmatprep.subr.mxu0 0.0
    %2935 = vmatpush1.msra.mxu0 %v2875
    %2936 = vmatprep.subr.mxu0 0.0
    %2937 = vmatpush1.msra.mxu0 %v2876
    %2938 = vmatprep.subr.mxu0 0.0
    %2939 = vmatpush1.msra.mxu0 0.0
    %2940 = vmatprep.subr.mxu0 0.0
    %2941 = vmatpush1.msra.mxu0 0.0
    %2942 = vmatprep.subr.mxu0 0.0
    %2943 = vmatpush1.msra.mxu0 0.0
    %2944 = vmatprep.subr.mxu0 0.0
    %2945 = vmatpush1.msra.mxu0 0.0
    %2946 = vmatprep.subr.mxu0 0.0
    %2947 = vmatpush1.msra.mxu0 0.0
    %2948 = vmatprep.subr.mxu0 0.0
    %2949 = vmatpush1.msra.mxu0 0.0
    %2950 = vmatprep.subr.mxu0 0.0
    %2951 = vmatpush1.msra.mxu0 0.0
    %2952 = vmatprep.subr.mxu0 0.0
    %2953 = vmatpush1.msra.mxu0 0.0
    %2954 = vmatprep.subr.mxu0 0.0
    %2955 = vmatpush1.msra.mxu0 0.0
    %2956 = vmatprep.subr.mxu0 0.0
    %2957 = vmatpush1.msra.mxu0 0.0
    %2958 = vmatprep.subr.mxu0 0.0
    %2959 = vmatpush1.msra.mxu0 0.0
    %2960 = vmatprep.subr.mxu0 0.0
    %2961 = vmatpush1.msra.mxu0 0.0
    %2962 = vmatprep.subr.mxu0 0.0
    %2963 = vmatpush1.msra.mxu0 0.0
    %2964 = vmatprep.subr.mxu0 0.0
    %2965 = vmatpush1.msra.mxu0 0.0
    %2966 = vmatprep.subr.mxu0 0.0
    %2967 = vmatpush1.msra.mxu0 0.0
    %2968 = vmatprep.subr.mxu0 0.0
    %2969 = vmatpush1.msra.mxu0 0.0
    %2970 = vmatprep.mubr.f32.mxu0 0.0
    %2971 = vmatmul.mubr.f32.gmra.mrb[0].mxu0 %v2904
    %v2972 = vpop.f32.mrb[0].mxu0
    %v2973 = vadd.f32 %v2882, %v2972
    %v2974 = vpop.f32.mrb[0].mxu0
    %2975 = vdwg.mxu0
    %v2977 = vcombine.high %v2973, %v2973
    %v2979 = vunpack.c.l.s4 1983009808
    %v2980 = vunpack.c.0.s8 %v2979
    %v2981 = vlaneseq
    %v2982 = vshrl.u32 %v2981, 7
    %v2983 = vsub.s32 %v2980, %v2982
    %v2984 = vrot.slane %v2973, %v2983
    %v2986 = vunpack.c.l.s4 1983009808
    %v2987 = vunpack.c.0.s8 %v2986
    %v2988 = vlaneseq
    %v2989 = vshrl.u32 %v2988, 7
    %v2990 = vsub.s32 %v2987, %v2989
    %v2991 = vrot.slane %v2977, %v2990
    %v2992 = vcombine.high %v2984, %v2984
    %v2993 = vcombine.high %v2991, %v2991
    %2998 = vst [vmem:[#allocation13] sm:$0x3] %v2984
    %2999 = vst [vmem:[#allocation13 + $0x2] sm:$0x3] %v2992
    %3000 = vst [vmem:[#allocation13 + $0x4] sm:$0x3] %v2991
    %3001 = vst [vmem:[#allocation13 + $0x6] sm:$0x3] %v2993
    // Predicated region
    $region86: #{tpu_custom_call.1} parent=1 // pred_check
      _
    $region87: #{tpu_custom_call.1} parent=1 // pred_check_branch
      %3003 = sbr.rel (0) target = $region89
    $region88: #{tpu_custom_call.1} parent=1 // pred_region
      %s3005 = ssub.s32 128, 128
      %3006 = vsyncadd [#allocation4], %s3005
      %s3007 = sshll.u32 [#allocation13], 4
      %s3008 = int_to_ptr.vmem [resolvable:$true] %s3007
      %3013 = dma.vmem_to_hbm [thread:$0]  %s3008, 128, %s15, [#allocation4], 32, 32, 2
    $region89: #{tpu_custom_call.1} parent=1 // pred_fallthru
      _
    // Predicated region
    $region90: #{tpu_custom_call.1} parent=1 // pred_check
      _
    $region91: #{tpu_custom_call.1} parent=1 // pred_check_branch
      %3015 = sbr.rel (0) target = $region93
    $region92: #{tpu_custom_call.1} parent=1 // pred_region
      %3016 = dma.done [#allocation4], 128
    $region93: #{tpu_custom_call.1} parent=1 // pred_fallthru
      _
    %3017 = vsyncpa [#allocation3], 1
    %3018 = vsyncpa [#allocation6], 1
    %3019 = vsyncpa [#allocation9], 1
    %3020 = vsyncpa [#allocation12], 1
    %3021 = vsyncpa [#allocation4], 1

</llo_original>
